<compile_context>
chip_gen: v7x
topology: tpu7x:2x2x1
jax: 0.10.0
libtpu: 0.0.40
codegen_flags: <defaults>
</compile_context>

<pallas_src>
import functools

import jax
import jax.numpy as jnp
from jax.experimental import pallas as pl
from jax.experimental.pallas import tpu as pltpu


_PRED_PAD = 1.0e6     # sentinel coordinate for padded pred points
_GT_PAD = -1.0e6      # sentinel coordinate for padded gt points


def _default_pred_groups():
    """v7x has 2 TensorCores/chip; give the 'parallel' pred-group axis >= 2
    blocks there.  v5e/v6e have 1 TC, so a single biggest block wins."""
    try:
        kind = jax.devices()[0].device_kind.lower()
        if "v7" in kind:
            return 2
    except Exception:
        pass
    return 1


# ----------------------------------------------------------------------------
# Kernel 1: fused rigid transform + chamfer distance (squared-distance mins,
# MXU norm-expansion, in-kernel strip-mining).
#   pred' = pred @ R_pred^T + t_pred         (once per pred group, cached)
#   gt'^T = R_gt @ gt^T + t_gt[:, None]      (per gt tile)
#   d2    = |p'|^2 + |g'|^2 - 2 p'.g'        (cross term on the MXU)
#   colmin[n] = min_m d2[m, n]   (final per gt tile: full pred reduced in-kernel)
#   rowmin[m] = min_n d2[m, n]   (accumulated in the resident output block)
# sqrt + clamp + means happen outside on the reduced vectors only (exact:
# sqrt is monotone and clamp commutes with min).
# ----------------------------------------------------------------------------
def _fused_chamfer_kernel(pred_ref, gtt_ref, rpt_ref, tp_ref, rg_ref, tg_ref,
                          colmin_ref, rowmin_ref, pred_xf, pnorm, *, strip_m):
    j = pl.program_id(1)  # gt-tile axis ('arbitrary', innermost)

    # Once per pred group: rigid transform of the resident pred block,
    # pre-scaled by -2 for the MXU cross term; cache |p|^2; init rowmin.
    @pl.when(j == 0)
    def _():
        p = (jnp.dot(pred_ref[...], rpt_ref[...],
                     preferred_element_type=jnp.float32) + tp_ref[...])
        pred_xf[...] = p * (-2.0)
        pnorm[...] = jnp.sum(p * p, axis=1, keepdims=True)
        rowmin_ref[...] = jnp.full_like(rowmin_ref, jnp.inf)

    # Rigid transform of the gt tile: (3,3)@(3,tn) MXU matmul + bias.
    # (Recomputed per group; with n_groups <= 2 this costs ~3/tm of a step.)
    gtt = (jnp.dot(rg_ref[...], gtt_ref[...],
                   preferred_element_type=jnp.float32) + tg_ref[...])   # (3,tn)
    gnorm = jnp.sum(gtt * gtt, axis=0, keepdims=True)                    # (1,tn)

    tm = pred_xf.shape[0]

    # Strip-mine the pred (sublane) axis so the d2 strip (~32 vregs) stays
    # register-resident and both reductions fuse into the same pass.
    col_acc = None
    for m0 in range(0, tm, strip_m):
        sm = min(strip_m, tm - m0)
        cross = jnp.dot(pred_xf[pl.ds(m0, sm), :], gtt,
                        preferred_element_type=jnp.float32)              # MXU
        d2 = cross + pnorm[pl.ds(m0, sm), :] + gnorm                     # (sm,tn)
        col_strip = jnp.min(d2, axis=0, keepdims=True)                   # (1,tn)
        col_acc = col_strip if col_acc is None else jnp.minimum(col_acc, col_strip)
        row_strip = jnp.min(d2, axis=1, keepdims=True)                   # (sm,1)
        rowmin_ref[pl.ds(m0, sm), :] = jnp.minimum(
            rowmin_ref[pl.ds(m0, sm), :], row_strip)

    colmin_ref[...] = col_acc                                            # (1,tn)


def prepare_chamfer_clouds(gt_mesh, pred_mesh, *, tn=512, n_pred_groups=None):
    """Pad / transpose the static clouds ONCE (hoisted out of the optimizer
    loop -- only R/t change between gf_optimize iterations)."""
    gt_mesh = jnp.asarray(gt_mesh, jnp.float32)
    pred_mesh = jnp.asarray(pred_mesh, jnp.float32)
    n_gt, m_pred = int(gt_mesh.shape[0]), int(pred_mesh.shape[0])

    if n_pred_groups is None:
        n_pred_groups = _default_pred_groups()
    # Split very large pred clouds so the in-kernel strip unroll stays short.
    n_groups = max(n_pred_groups, pl.cdiv(m_pred, 1024))

    # gt: lane axis.  <=1024 points -> single grid step over the whole
    # (128-padded) cloud; otherwise tn-wide lane tiles.
    tn = max(128, (tn // 128) * 128)
    n_pad128 = pl.cdiv(max(n_gt, 1), 128) * 128
    if n_pad128 <= max(tn, 1024):
        tn_eff, n_pad = n_pad128, n_pad128
    else:
        tn_eff, n_pad = tn, pl.cdiv(n_pad128, tn) * tn

    # pred: pad to a multiple of 8 * n_groups (sublane alignment per group).
    m_mult = 8 * n_groups
    m_pad = pl.cdiv(max(m_pred, 1), m_mult) * m_mult
    tm_g = m_pad // n_groups

    # d2 strip ~= 32 vregs (32K f32 elements), multiple of 8 rows.
    strip_m = max(8, min(256, ((32 * 1024) // tn_eff) // 8 * 8))

    if m_pad > m_pred:
        pred_mesh = jnp.concatenate(
            [pred_mesh, jnp.full((m_pad - m_pred, 3), _PRED_PAD, jnp.float32)], 0)
    if n_pad > n_gt:
        gt_mesh = jnp.concatenate(
            [gt_mesh, jnp.full((n_pad - n_gt, 3), _GT_PAD, jnp.float32)], 0)

    return dict(pred=pred_mesh, gt_t=gt_mesh.T, m_pred=m_pred, n_gt=n_gt,
                m_pad=m_pad, n_pad=n_pad, n_groups=n_groups, tm_g=tm_g,
                tn=tn_eff, strip_m=strip_m)


def chamfer_pallas_prepared(plan, R_gt=None, t_gt=None, R_pred=None, t_pred=None):
    """Chamfer distance on a prepared cloud pair under rigid poses (R, t)."""
    eye3 = jnp.eye(3, dtype=jnp.float32)
    zero3 = jnp.zeros((3,), jnp.float32)
    R_gt = eye3 if R_gt is None else jnp.asarray(R_gt, jnp.float32)
    t_gt = zero3 if t_gt is None else jnp.asarray(t_gt, jnp.float32)
    R_pred = eye3 if R_pred is None else jnp.asarray(R_pred, jnp.float32)
    t_pred = zero3 if t_pred is None else jnp.asarray(t_pred, jnp.float32)

    n_groups, tm_g, tn_eff = plan['n_groups'], plan['tm_g'], plan['tn']
    m_pad, n_pad = plan['m_pad'], plan['n_pad']
    n_n_tiles = n_pad // tn_eff

    colmin, rowmin = pl.pallas_call(
        functools.partial(_fused_chamfer_kernel, strip_m=plan['strip_m']),
        out_shape=(
            jax.ShapeDtypeStruct((n_groups, 1, n_pad), jnp.float32),  # colmin (per group)
            jax.ShapeDtypeStruct((m_pad, 1), jnp.float32),            # rowmin
        ),
        grid_spec=pltpu.PrefetchScalarGridSpec(
            num_scalar_prefetch=0,
            grid=(n_groups, n_n_tiles),
            in_specs=[
                pl.BlockSpec((tm_g, 3), lambda i, j: (i, 0)),    # pred group (resident)
                pl.BlockSpec((3, tn_eff), lambda i, j: (0, j)),  # gt^T tile (lane dense)
                pl.BlockSpec((3, 3), lambda i, j: (0, 0)),       # R_pred^T
                pl.BlockSpec((1, 3), lambda i, j: (0, 0)),       # t_pred
                pl.BlockSpec((3, 3), lambda i, j: (0, 0)),       # R_gt
                pl.BlockSpec((3, 1), lambda i, j: (0, 0)),       # t_gt
            ],
            out_specs=[
                pl.BlockSpec((None, 1, tn_eff), lambda i, j: (i, 0, j)),  # colmin
                pl.BlockSpec((tm_g, 1), lambda i, j: (i, 0)),             # rowmin (acc)
            ],
            scratch_shapes=[pltpu.VMEM((tm_g, 3), jnp.float32),   # -2 * pred'
                            pltpu.VMEM((tm_g, 1), jnp.float32)],  # |pred'|^2
        ),
        compiler_params=pltpu.CompilerParams(
            dimension_semantics=("parallel", "arbitrary")),
    )(plan['pred'], plan['gt_t'], R_pred.T, t_pred.reshape(1, 3),
      R_gt, t_gt.reshape(3, 1))

    # Tiny epilogue on the reduced vectors only.  Padded rows/cols sliced off;
    # clamp handles MXU-expansion cancellation; sqrt deferred past min (exact).
    colmin_d2 = jnp.min(colmin[:, 0, :plan['n_gt']], axis=0)
    rowmin_d2 = rowmin[:plan['m_pred'], 0]
    return (jnp.mean(jnp.sqrt(jnp.maximum(rowmin_d2, 0.0)))
            + jnp.mean(jnp.sqrt(jnp.maximum(colmin_d2, 0.0))))


def chamfer_pallas(gt_mesh, pred_mesh, R_gt=None, t_gt=None,
                   R_pred=None, t_pred=None, *, tn=512, n_pred_groups=None):
    """Convenience: prepare + evaluate.  For optimizer loops, call
    prepare_chamfer_clouds once and chamfer_pallas_prepared per iteration."""
    plan = prepare_chamfer_clouds(gt_mesh, pred_mesh, tn=tn,
                                  n_pred_groups=n_pred_groups)
    return chamfer_pallas_prepared(plan, R_gt, t_gt, R_pred, t_pred)


# ----------------------------------------------------------------------------
# Kernel 2: rigid transform in transposed lane-dense layout, tiled over lanes:
#   out^T = R @ mesh^T + t[:, None]     (== (mesh @ R^T + t)^T)
# Stays in (3, N): no trailing .T relayout; chamfer consumes gt in (3, N).
# ----------------------------------------------------------------------------
def _transform_t_kernel(mesh_t_ref, r_ref, t_ref, out_ref):
    out_ref[...] = (
        jnp.dot(r_ref[...], mesh_t_ref[...], preferred_element_type=jnp.float32)
        + t_ref[...])


def transform_t_pallas(mesh_t, R, t, *, tn=2048):
    """mesh_t: (3, N), R: (3, 3), t: (3,) -> (R @ mesh_t + t[:, None]), (3, N)."""
    mesh_t = jnp.asarray(mesh_t, jnp.float32)
    R = jnp.asarray(R, jnp.float32)
    t_col = jnp.asarray(t, jnp.float32).reshape(3, 1)
    n = mesh_t.shape[1]

    tn = max(128, (tn // 128) * 128)
    n_pad = pl.cdiv(max(n, 1), 128) * 128
    if n_pad <= tn:
        tn_eff = n_pad
    else:
        tn_eff = tn
        n_pad = pl.cdiv(n_pad, tn) * tn
    if n_pad > n:
        mesh_t = jnp.pad(mesh_t, ((0, 0), (0, n_pad - n)))

    out = pl.pallas_call(
        _transform_t_kernel,
        out_shape=jax.ShapeDtypeStruct((3, n_pad), jnp.float32),
        grid_spec=pltpu.PrefetchScalarGridSpec(
            num_scalar_prefetch=0,
            grid=(n_pad // tn_eff,),
            in_specs=[pl.BlockSpec((3, tn_eff), lambda j: (0, j)),
                      pl.BlockSpec((3, 3), lambda j: (0, 0)),
                      pl.BlockSpec((3, 1), lambda j: (0, 0))],
            out_specs=pl.BlockSpec((3, tn_eff), lambda j: (0, j)),
        ),
        compiler_params=pltpu.CompilerParams(
            dimension_semantics=("parallel",)),
    )(mesh_t, R, t_col)
    return out[:, :n]


# ----------------------------------------------------------------------------
# forward(): hand-keypoint recentering.  Left to XLA fusion per perf review
# (a pallas_call for a (21,3) output is pure launch / tile-padding overhead).
#   jittered_hand_kp = last_frame_kp + hand_points.mean(dim=-2, keepdim=True)
#   last_frame_kp    = pred_kp       - hand_points.mean(dim=-2, keepdim=True)
# ----------------------------------------------------------------------------
def recenter(kp, hand_points, sign=1.0):
    kp = jnp.asarray(kp, jnp.float32)
    hand_points = jnp.asarray(hand_points, jnp.float32)
    return kp + jnp.float32(sign) * jnp.mean(hand_points, axis=-2, keepdims=True)


# ----------------------------------------------------------------------------
# Pure-JAX references (mirror the PyTorch math exactly)
# ----------------------------------------------------------------------------
def chamfer_ref(gt_mesh, pred_mesh):
    dm = jnp.linalg.norm(
        gt_mesh.reshape(1, -1, 3) - pred_mesh.reshape(-1, 1, 3), axis=-1)
    return jnp.mean(jnp.min(dm, axis=1)) + jnp.mean(jnp.min(dm, axis=0))


def transform_ref(mesh, R, t):
    return mesh @ R.T + t


def _rot_z(theta):
    theta = jnp.float32(theta)
    c, s = jnp.cos(theta), jnp.sin(theta)
    return jnp.array([[c, -s, 0.0], [s, c, 0.0], [0.0, 0.0, 1.0]], jnp.float32)


# TODO(synk): the rest of HandTrackModel.forward / compute_loss (file loading
# via load_obj_for_opt, the MANO layer, HandTrackNet / IKNet sub-networks, the
# gf_optimize_* optimizers, pickle saving and dict bookkeeping) is host-side
# orchestration / external modules with no clean Pallas equivalent.

if __name__ == "__main__":
    key = jax.random.PRNGKey(0)
    k1, k2, k3, k4 = jax.random.split(key, 4)

    # Small shapes consistent with the tracking module: gt object surface
    # samples, reconstructed mesh vertices, hand point cloud, 21 hand keypoints.
    N_GT, N_PRED = 500, 300          # deliberately not tile multiples (exercises padding)
    N_HAND, N_KP = 512, 21

    gt_mesh = jax.random.normal(k1, (N_GT, 3), jnp.float32) * 0.1
    pred_mesh = jax.random.normal(k2, (N_PRED, 3), jnp.float32) * 0.1
    hand_points = (jax.random.normal(k3, (N_HAND, 3), jnp.float32) * 0.05
                   + jnp.array([0.0, 0.1, 0.4], jnp.float32))
    last_kp = jax.random.normal(k4, (N_KP, 3), jnp.float32) * 0.05

    # deterministic synthetic object poses (gt and predicted)
    R_gt, t_gt = _rot_z(0.30), jnp.array([0.10, -0.20, 0.05], jnp.float32)
    R_pred, t_pred = _rot_z(0.35), jnp.array([0.11, -0.19, 0.04], jnp.float32)

    # 1) raw chamfer (identity poses)
    raw_chamfer = chamfer_pallas(gt_mesh, pred_mesh)
    # 2) fused pose + chamfer, "prepared" variant (clouds padded/transposed once,
    #    as in the gf_optimize loop where only R / t change per iteration)
    plan = prepare_chamfer_clouds(gt_mesh, pred_mesh)
    posed_chamfer = chamfer_pallas_prepared(plan, R_gt, t_gt, R_pred, t_pred)
    # 3) standalone transform in lane-dense (3, N) layout
    tg_t = transform_t_pallas(gt_mesh.T, R_gt, t_gt)
    # 4) forward(): jittered_hand_kp = last_frame_kp + hand_points.mean(-2)
    jittered = recenter(last_kp, hand_points, sign=+1.0)

    raw_chamfer, posed_chamfer, tg_t, jittered = jax.block_until_ready(
        (raw_chamfer, posed_chamfer, tg_t, jittered))

    # references (pure JAX mirrors of the PyTorch math)
    raw_ref = chamfer_ref(gt_mesh, pred_mesh)
    posed_ref = chamfer_ref(transform_ref(gt_mesh, R_gt, t_gt),
                            transform_ref(pred_mesh, R_pred, t_pred))
    tg_ref_t = transform_ref(gt_mesh, R_gt, t_gt).T
    jit_ref = last_kp + jnp.mean(hand_points, axis=0, keepdims=True)

    assert jnp.allclose(raw_chamfer, raw_ref, rtol=1e-3, atol=1e-5), (raw_chamfer, raw_ref)
    assert jnp.allclose(posed_chamfer, posed_ref, rtol=1e-3, atol=1e-5), (posed_chamfer, posed_ref)
    assert jnp.allclose(tg_t, tg_ref_t, rtol=1e-5, atol=1e-5)
    assert jnp.allclose(jittered, jit_ref, rtol=1e-5, atol=1e-5)

    print("KERNEL_OK")
</pallas_src>

<mosaic_0001>
module attributes {stable_mosaic.version = 11 : i64} {
  func.func @_fused_chamfer_kernel(%arg0: i32, %arg1: i32, %arg2: memref<304x3xf32, #tpu.memory_space<vmem>>, %arg3: memref<3x512xf32, #tpu.memory_space<vmem>>, %arg4: memref<3x3xf32, #tpu.memory_space<vmem>>, %arg5: memref<1x3xf32, #tpu.memory_space<vmem>>, %arg6: memref<3x3xf32, #tpu.memory_space<vmem>>, %arg7: memref<3x1xf32, #tpu.memory_space<vmem>>, %arg8: memref<1x1x512xf32, #tpu.memory_space<vmem>>, %arg9: memref<304x1xf32, #tpu.memory_space<vmem>>, %arg10: memref<304x3xf32, #tpu.memory_space<vmem>>, %arg11: memref<304x1xf32, #tpu.memory_space<vmem>>) attributes {dimension_semantics = [#tpu.dimension_semantics<parallel>, #tpu.dimension_semantics<arbitrary>], iteration_bounds = array<i64: 1, 1>, scalar_prefetch = 0 : i64, scratch_operands = 2 : i64, tpu.core_type = #tpu.core_type<tc>, window_params = [{transform_indices = @transform_0, window_bounds = array<i64: 304, 3>}, {transform_indices = @transform_1, window_bounds = array<i64: 3, 512>}, {pipeline_mode = #tpu.pipeline_mode<synchronous>, transform_indices = @transform_2, window_bounds = array<i64: 3, 3>}, {pipeline_mode = #tpu.pipeline_mode<synchronous>, transform_indices = @transform_3, window_bounds = array<i64: 1, 3>}, {pipeline_mode = #tpu.pipeline_mode<synchronous>, transform_indices = @transform_4, window_bounds = array<i64: 3, 3>}, {pipeline_mode = #tpu.pipeline_mode<synchronous>, transform_indices = @transform_5, window_bounds = array<i64: 3, 1>}, {transform_indices = @transform_6, window_bounds = array<i64: 1, 1, 512>}, {transform_indices = @transform_7, window_bounds = array<i64: 304, 1>}]} {
    %c0_i32 = arith.constant 0 : i32
    %0 = arith.cmpi eq, %arg1, %c0_i32 : i32
    %1 = arith.extui %0 : i1 to i32
    %c0_i32_0 = arith.constant 0 : i32
    %2 = arith.cmpi ne, %1, %c0_i32_0 : i32
    scf.if %2 {
      %c0_61 = arith.constant 0 : index
      %c0_62 = arith.constant 0 : index
      %89 = vector.load %arg2[%c0_61, %c0_62] : memref<304x3xf32, #tpu.memory_space<vmem>>, vector<304x3xf32>
      %c0_63 = arith.constant 0 : index
      %c0_64 = arith.constant 0 : index
      %90 = vector.load %arg4[%c0_63, %c0_64] : memref<3x3xf32, #tpu.memory_space<vmem>>, vector<3x3xf32>
      %cst_65 = arith.constant dense<0.000000e+00> : vector<304x3xf32>
      %91 = tpu.matmul %89, %90, %cst_65 {dimension_numbers = #tpu.dot_dimension_numbers<[1], [0], [0], [1], [0, 0, 1, 1], [], []>} : vector<304x3xf32>, vector<3x3xf32>, vector<304x3xf32> -> vector<304x3xf32>
      %c0_66 = arith.constant 0 : index
      %c0_67 = arith.constant 0 : index
      %92 = vector.load %arg5[%c0_66, %c0_67] : memref<1x3xf32, #tpu.memory_space<vmem>>, vector<1x3xf32>
      %93 = vector.broadcast %92 : vector<1x3xf32> to vector<304x3xf32>
      %94 = arith.addf %91, %93 : vector<304x3xf32>
      %cst_68 = arith.constant -2.000000e+00 : f32
      %95 = vector.broadcast %cst_68 : f32 to vector<304x3xf32>
      %96 = arith.mulf %94, %95 : vector<304x3xf32>
      %c0_69 = arith.constant 0 : index
      %c0_70 = arith.constant 0 : index
      %97 = vector.load %arg10[%c0_69, %c0_70] : memref<304x3xf32, #tpu.memory_space<vmem>>, vector<304x3xf32>
      tpu.vector_store %arg10[%c0_69, %c0_70], %96 {strides = array<i32>} : memref<304x3xf32, #tpu.memory_space<vmem>>, vector<304x3xf32>,
      %98 = arith.mulf %94, %94 : vector<304x3xf32>
      %cst_71 = arith.constant dense<0.000000e+00> : vector<304xf32>
      %99 = vector.multi_reduction <add>, %98, %cst_71 [1] : vector<304x3xf32> to vector<304xf32>
      %100 = vector.shape_cast %99 : vector<304xf32> to vector<304x1xf32>
      %c0_72 = arith.constant 0 : index
      %c0_73 = arith.constant 0 : index
      %101 = vector.load %arg11[%c0_72, %c0_73] : memref<304x1xf32, #tpu.memory_space<vmem>>, vector<304x1xf32>
      tpu.vector_store %arg11[%c0_72, %c0_73], %100 {strides = array<i32>} : memref<304x1xf32, #tpu.memory_space<vmem>>, vector<304x1xf32>,
      %cst_74 = arith.constant 0x7F800000 : f32
      %102 = vector.broadcast %cst_74 : f32 to vector<304x1xf32>
      %c0_75 = arith.constant 0 : index
      %c0_76 = arith.constant 0 : index
      %103 = vector.load %arg9[%c0_75, %c0_76] : memref<304x1xf32, #tpu.memory_space<vmem>>, vector<304x1xf32>
      tpu.vector_store %arg9[%c0_75, %c0_76], %102 {strides = array<i32>} : memref<304x1xf32, #tpu.memory_space<vmem>>, vector<304x1xf32>,
    } else {
    }
    %c0 = arith.constant 0 : index
    %c0_1 = arith.constant 0 : index
    %3 = vector.load %arg6[%c0, %c0_1] : memref<3x3xf32, #tpu.memory_space<vmem>>, vector<3x3xf32>
    %c0_2 = arith.constant 0 : index
    %c0_3 = arith.constant 0 : index
    %4 = vector.load %arg3[%c0_2, %c0_3] : memref<3x512xf32, #tpu.memory_space<vmem>>, vector<3x512xf32>
    %cst = arith.constant dense<0.000000e+00> : vector<3x512xf32>
    %5 = tpu.matmul %3, %4, %cst {dimension_numbers = #tpu.dot_dimension_numbers<[1], [0], [0], [1], [0, 0, 1, 1], [], []>} : vector<3x3xf32>, vector<3x512xf32>, vector<3x512xf32> -> vector<3x512xf32>
    %c0_4 = arith.constant 0 : index
    %c0_5 = arith.constant 0 : index
    %6 = vector.load %arg7[%c0_4, %c0_5] : memref<3x1xf32, #tpu.memory_space<vmem>>, vector<3x1xf32>
    %7 = vector.broadcast %6 : vector<3x1xf32> to vector<3x512xf32>
    %8 = arith.addf %5, %7 : vector<3x512xf32>
    %9 = arith.mulf %8, %8 : vector<3x512xf32>
    %cst_6 = arith.constant dense<0.000000e+00> : vector<512xf32>
    %10 = vector.multi_reduction <add>, %9, %cst_6 [0] : vector<3x512xf32> to vector<512xf32>
    %11 = vector.shape_cast %10 : vector<512xf32> to vector<1x512xf32>
    %c0_7 = arith.constant 0 : index
    %c0_8 = arith.constant 0 : index
    %12 = vector.load %arg10[%c0_7, %c0_8] : memref<304x3xf32, #tpu.memory_space<vmem>>, vector<64x3xf32>
    %cst_9 = arith.constant dense<0.000000e+00> : vector<64x512xf32>
    %13 = tpu.matmul %12, %8, %cst_9 {dimension_numbers = #tpu.dot_dimension_numbers<[1], [0], [0], [1], [0, 0, 1, 1], [], []>} : vector<64x3xf32>, vector<3x512xf32>, vector<64x512xf32> -> vector<64x512xf32>
    %c0_10 = arith.constant 0 : index
    %c0_11 = arith.constant 0 : index
    %14 = vector.load %arg11[%c0_10, %c0_11] : memref<304x1xf32, #tpu.memory_space<vmem>>, vector<64x1xf32>
    %15 = vector.broadcast %14 : vector<64x1xf32> to vector<64x512xf32>
    %16 = arith.addf %13, %15 : vector<64x512xf32>
    %17 = vector.broadcast %11 : vector<1x512xf32> to vector<64x512xf32>
    %18 = arith.addf %16, %17 : vector<64x512xf32>
    %cst_12 = arith.constant dense<0x7F800000> : vector<512xf32>
    %19 = vector.multi_reduction <minimumf>, %18, %cst_12 [0] : vector<64x512xf32> to vector<512xf32>
    %20 = vector.shape_cast %19 : vector<512xf32> to vector<1x512xf32>
    %cst_13 = arith.constant dense<0x7F800000> : vector<64xf32>
    %21 = vector.multi_reduction <minimumf>, %18, %cst_13 [1] : vector<64x512xf32> to vector<64xf32>
    %22 = vector.shape_cast %21 : vector<64xf32> to vector<64x1xf32>
    %c0_14 = arith.constant 0 : index
    %c0_15 = arith.constant 0 : index
    %23 = vector.load %arg9[%c0_14, %c0_15] : memref<304x1xf32, #tpu.memory_space<vmem>>, vector<64x1xf32>
    %24 = arith.minimumf %23, %22 : vector<64x1xf32>
    %c0_16 = arith.constant 0 : index
    %c0_17 = arith.constant 0 : index
    %25 = vector.load %arg9[%c0_16, %c0_17] : memref<304x1xf32, #tpu.memory_space<vmem>>, vector<64x1xf32>
    tpu.vector_store %arg9[%c0_16, %c0_17], %24 {strides = array<i32>} : memref<304x1xf32, #tpu.memory_space<vmem>>, vector<64x1xf32>,
    %c64 = arith.constant 64 : index
    %c0_18 = arith.constant 0 : index
    %26 = vector.load %arg10[%c64, %c0_18] : memref<304x3xf32, #tpu.memory_space<vmem>>, vector<64x3xf32>
    %cst_19 = arith.constant dense<0.000000e+00> : vector<64x512xf32>
    %27 = tpu.matmul %26, %8, %cst_19 {dimension_numbers = #tpu.dot_dimension_numbers<[1], [0], [0], [1], [0, 0, 1, 1], [], []>} : vector<64x3xf32>, vector<3x512xf32>, vector<64x512xf32> -> vector<64x512xf32>
    %c64_20 = arith.constant 64 : index
    %c0_21 = arith.constant 0 : index
    %28 = vector.load %arg11[%c64_20, %c0_21] : memref<304x1xf32, #tpu.memory_space<vmem>>, vector<64x1xf32>
    %29 = vector.broadcast %28 : vector<64x1xf32> to vector<64x512xf32>
    %30 = arith.addf %27, %29 : vector<64x512xf32>
    %31 = vector.broadcast %11 : vector<1x512xf32> to vector<64x512xf32>
    %32 = arith.addf %30, %31 : vector<64x512xf32>
    %cst_22 = arith.constant dense<0x7F800000> : vector<512xf32>
    %33 = vector.multi_reduction <minimumf>, %32, %cst_22 [0] : vector<64x512xf32> to vector<512xf32>
    %34 = vector.shape_cast %33 : vector<512xf32> to vector<1x512xf32>
    %35 = arith.minimumf %20, %34 : vector<1x512xf32>
    %cst_23 = arith.constant dense<0x7F800000> : vector<64xf32>
    %36 = vector.multi_reduction <minimumf>, %32, %cst_23 [1] : vector<64x512xf32> to vector<64xf32>
    %37 = vector.shape_cast %36 : vector<64xf32> to vector<64x1xf32>
    %c64_24 = arith.constant 64 : index
    %c0_25 = arith.constant 0 : index
    %38 = vector.load %arg9[%c64_24, %c0_25] : memref<304x1xf32, #tpu.memory_space<vmem>>, vector<64x1xf32>
    %39 = arith.minimumf %38, %37 : vector<64x1xf32>
    %c64_26 = arith.constant 64 : index
    %c0_27 = arith.constant 0 : index
    %40 = vector.load %arg9[%c64_26, %c0_27] : memref<304x1xf32, #tpu.memory_space<vmem>>, vector<64x1xf32>
    tpu.vector_store %arg9[%c64_26, %c0_27], %39 {strides = array<i32>} : memref<304x1xf32, #tpu.memory_space<vmem>>, vector<64x1xf32>,
    %c128 = arith.constant 128 : index
    %c0_28 = arith.constant 0 : index
    %41 = vector.load %arg10[%c128, %c0_28] : memref<304x3xf32, #tpu.memory_space<vmem>>, vector<64x3xf32>
    %cst_29 = arith.constant dense<0.000000e+00> : vector<64x512xf32>
    %42 = tpu.matmul %41, %8, %cst_29 {dimension_numbers = #tpu.dot_dimension_numbers<[1], [0], [0], [1], [0, 0, 1, 1], [], []>} : vector<64x3xf32>, vector<3x512xf32>, vector<64x512xf32> -> vector<64x512xf32>
    %c128_30 = arith.constant 128 : index
    %c0_31 = arith.constant 0 : index
    %43 = vector.load %arg11[%c128_30, %c0_31] : memref<304x1xf32, #tpu.memory_space<vmem>>, vector<64x1xf32>
    %44 = vector.broadcast %43 : vector<64x1xf32> to vector<64x512xf32>
    %45 = arith.addf %42, %44 : vector<64x512xf32>
    %46 = vector.broadcast %11 : vector<1x512xf32> to vector<64x512xf32>
    %47 = arith.addf %45, %46 : vector<64x512xf32>
    %cst_32 = arith.constant dense<0x7F800000> : vector<512xf32>
    %48 = vector.multi_reduction <minimumf>, %47, %cst_32 [0] : vector<64x512xf32> to vector<512xf32>
    %49 = vector.shape_cast %48 : vector<512xf32> to vector<1x512xf32>
    %50 = arith.minimumf %35, %49 : vector<1x512xf32>
    %cst_33 = arith.constant dense<0x7F800000> : vector<64xf32>
    %51 = vector.multi_reduction <minimumf>, %47, %cst_33 [1] : vector<64x512xf32> to vector<64xf32>
    %52 = vector.shape_cast %51 : vector<64xf32> to vector<64x1xf32>
    %c128_34 = arith.constant 128 : index
    %c0_35 = arith.constant 0 : index
    %53 = vector.load %arg9[%c128_34, %c0_35] : memref<304x1xf32, #tpu.memory_space<vmem>>, vector<64x1xf32>
    %54 = arith.minimumf %53, %52 : vector<64x1xf32>
    %c128_36 = arith.constant 128 : index
    %c0_37 = arith.constant 0 : index
    %55 = vector.load %arg9[%c128_36, %c0_37] : memref<304x1xf32, #tpu.memory_space<vmem>>, vector<64x1xf32>
    tpu.vector_store %arg9[%c128_36, %c0_37], %54 {strides = array<i32>} : memref<304x1xf32, #tpu.memory_space<vmem>>, vector<64x1xf32>,
    %c192 = arith.constant 192 : index
    %c0_38 = arith.constant 0 : index
    %56 = vector.load %arg10[%c192, %c0_38] : memref<304x3xf32, #tpu.memory_space<vmem>>, vector<64x3xf32>
    %cst_39 = arith.constant dense<0.000000e+00> : vector<64x512xf32>
    %57 = tpu.matmul %56, %8, %cst_39 {dimension_numbers = #tpu.dot_dimension_numbers<[1], [0], [0], [1], [0, 0, 1, 1], [], []>} : vector<64x3xf32>, vector<3x512xf32>, vector<64x512xf32> -> vector<64x512xf32>
    %c192_40 = arith.constant 192 : index
    %c0_41 = arith.constant 0 : index
    %58 = vector.load %arg11[%c192_40, %c0_41] : memref<304x1xf32, #tpu.memory_space<vmem>>, vector<64x1xf32>
    %59 = vector.broadcast %58 : vector<64x1xf32> to vector<64x512xf32>
    %60 = arith.addf %57, %59 : vector<64x512xf32>
    %61 = vector.broadcast %11 : vector<1x512xf32> to vector<64x512xf32>
    %62 = arith.addf %60, %61 : vector<64x512xf32>
    %cst_42 = arith.constant dense<0x7F800000> : vector<512xf32>
    %63 = vector.multi_reduction <minimumf>, %62, %cst_42 [0] : vector<64x512xf32> to vector<512xf32>
    %64 = vector.shape_cast %63 : vector<512xf32> to vector<1x512xf32>
    %65 = arith.minimumf %50, %64 : vector<1x512xf32>
    %cst_43 = arith.constant dense<0x7F800000> : vector<64xf32>
    %66 = vector.multi_reduction <minimumf>, %62, %cst_43 [1] : vector<64x512xf32> to vector<64xf32>
    %67 = vector.shape_cast %66 : vector<64xf32> to vector<64x1xf32>
    %c192_44 = arith.constant 192 : index
    %c0_45 = arith.constant 0 : index
    %68 = vector.load %arg9[%c192_44, %c0_45] : memref<304x1xf32, #tpu.memory_space<vmem>>, vector<64x1xf32>
    %69 = arith.minimumf %68, %67 : vector<64x1xf32>
    %c192_46 = arith.constant 192 : index
    %c0_47 = arith.constant 0 : index
    %70 = vector.load %arg9[%c192_46, %c0_47] : memref<304x1xf32, #tpu.memory_space<vmem>>, vector<64x1xf32>
    tpu.vector_store %arg9[%c192_46, %c0_47], %69 {strides = array<i32>} : memref<304x1xf32, #tpu.memory_space<vmem>>, vector<64x1xf32>,
    %c256 = arith.constant 256 : index
    %c0_48 = arith.constant 0 : index
    %71 = vector.load %arg10[%c256, %c0_48] : memref<304x3xf32, #tpu.memory_space<vmem>>, vector<48x3xf32>
    %cst_49 = arith.constant dense<0.000000e+00> : vector<48x512xf32>
    %72 = tpu.matmul %71, %8, %cst_49 {dimension_numbers = #tpu.dot_dimension_numbers<[1], [0], [0], [1], [0, 0, 1, 1], [], []>} : vector<48x3xf32>, vector<3x512xf32>, vector<48x512xf32> -> vector<48x512xf32>
    %c256_50 = arith.constant 256 : index
    %c0_51 = arith.constant 0 : index
    %73 = vector.load %arg11[%c256_50, %c0_51] : memref<304x1xf32, #tpu.memory_space<vmem>>, vector<48x1xf32>
    %74 = vector.broadcast %73 : vector<48x1xf32> to vector<48x512xf32>
    %75 = arith.addf %72, %74 : vector<48x512xf32>
    %76 = vector.broadcast %11 : vector<1x512xf32> to vector<48x512xf32>
    %77 = arith.addf %75, %76 : vector<48x512xf32>
    %cst_52 = arith.constant dense<0x7F800000> : vector<512xf32>
    %78 = vector.multi_reduction <minimumf>, %77, %cst_52 [0] : vector<48x512xf32> to vector<512xf32>
    %79 = vector.shape_cast %78 : vector<512xf32> to vector<1x512xf32>
    %80 = arith.minimumf %65, %79 : vector<1x512xf32>
    %cst_53 = arith.constant dense<0x7F800000> : vector<48xf32>
    %81 = vector.multi_reduction <minimumf>, %77, %cst_53 [1] : vector<48x512xf32> to vector<48xf32>
    %82 = vector.shape_cast %81 : vector<48xf32> to vector<48x1xf32>
    %c256_54 = arith.constant 256 : index
    %c0_55 = arith.constant 0 : index
    %83 = vector.load %arg9[%c256_54, %c0_55] : memref<304x1xf32, #tpu.memory_space<vmem>>, vector<48x1xf32>
    %84 = arith.minimumf %83, %82 : vector<48x1xf32>
    %c256_56 = arith.constant 256 : index
    %c0_57 = arith.constant 0 : index
    %85 = vector.load %arg9[%c256_56, %c0_57] : memref<304x1xf32, #tpu.memory_space<vmem>>, vector<48x1xf32>
    tpu.vector_store %arg9[%c256_56, %c0_57], %84 {strides = array<i32>} : memref<304x1xf32, #tpu.memory_space<vmem>>, vector<48x1xf32>,
    %c0_58 = arith.constant 0 : index
    %c0_59 = arith.constant 0 : index
    %c0_60 = arith.constant 0 : index
    %86 = vector.load %arg8[%c0_58, %c0_59, %c0_60] : memref<1x1x512xf32, #tpu.memory_space<vmem>>, vector<1x1x512xf32>
    %87 = vector.shape_cast %86 : vector<1x1x512xf32> to vector<1x512xf32>
    %88 = vector.shape_cast %80 : vector<1x512xf32> to vector<1x1x512xf32>
    tpu.vector_store %arg8[%c0_58, %c0_59, %c0_60], %88 {strides = array<i32>} : memref<1x1x512xf32, #tpu.memory_space<vmem>>, vector<1x1x512xf32>,
    return
  }
  func.func @transform_0(%arg0: i32, %arg1: i32) -> (i32, i32) {
    %c0_i32 = arith.constant 0 : i32
    %c0_i32_0 = arith.constant 0 : i32
    return %arg0, %c0_i32 : i32, i32
  }
  func.func @transform_1(%arg0: i32, %arg1: i32) -> (i32, i32) {
    %c0_i32 = arith.constant 0 : i32
    %c0_i32_0 = arith.constant 0 : i32
    return %c0_i32, %arg1 : i32, i32
  }
  func.func @transform_2(%arg0: i32, %arg1: i32) -> (i32, i32) {
    %c0_i32 = arith.constant 0 : i32
    %c0_i32_0 = arith.constant 0 : i32
    %c0_i32_1 = arith.constant 0 : i32
    return %c0_i32, %c0_i32_0 : i32, i32
  }
  func.func @transform_3(%arg0: i32, %arg1: i32) -> (i32, i32) {
    %c0_i32 = arith.constant 0 : i32
    %c0_i32_0 = arith.constant 0 : i32
    %c0_i32_1 = arith.constant 0 : i32
    return %c0_i32, %c0_i32_0 : i32, i32
  }
  func.func @transform_4(%arg0: i32, %arg1: i32) -> (i32, i32) {
    %c0_i32 = arith.constant 0 : i32
    %c0_i32_0 = arith.constant 0 : i32
    %c0_i32_1 = arith.constant 0 : i32
    return %c0_i32, %c0_i32_0 : i32, i32
  }
  func.func @transform_5(%arg0: i32, %arg1: i32) -> (i32, i32) {
    %c0_i32 = arith.constant 0 : i32
    %c0_i32_0 = arith.constant 0 : i32
    %c0_i32_1 = arith.constant 0 : i32
    return %c0_i32, %c0_i32_0 : i32, i32
  }
  func.func @transform_6(%arg0: i32, %arg1: i32) -> (i32, i32, i32) {
    %c0_i32 = arith.constant 0 : i32
    %c0_i32_0 = arith.constant 0 : i32
    return %arg0, %c0_i32, %arg1 : i32, i32, i32
  }
  func.func @transform_7(%arg0: i32, %arg1: i32) -> (i32, i32) {
    %c0_i32 = arith.constant 0 : i32
    %c0_i32_0 = arith.constant 0 : i32
    return %arg0, %c0_i32 : i32, i32
  }
}

</mosaic_0001>

<llo_original>
// kernel: tpu_custom_call.1
$region0: #{tpu_custom_call.1}
  #allocation0 [shape = 'u32[]', space=smem, size = 0x4, offset = 0x4, fixed_abs, tag = 'smem constant byte address 0x4 - core index']
  #allocation1 [shape = 'u32[144,128]{1,0:T(1,128)}', space=vmem, size = 0x12000, scoped, tag = 'internal scratch']
  #allocation2 [shape = 'f32[304,3]{1,0:T(8,128)}', space=vmem, size = 0x26000, scoped, tag = 'scratch operand']
  #allocation3 [shape = 'f32[304,1]{1,0:T(8,128)}', space=vmem, size = 0x26000, scoped, tag = 'scratch operand']
  %s0 = inlined_call_operand.vmem [shape: f32[304,3], index: 0, kind: input, shape index: {}]
  %s1 = inlined_call_operand.vmem [shape: f32[3,512], index: 1, kind: input, shape index: {}]
  %s2 = inlined_call_operand.vmem [shape: f32[3,3], index: 2, kind: input, shape index: {}]
  %s3 = inlined_call_operand.vmem [shape: f32[1,3], index: 3, kind: input, shape index: {}]
  %s4 = inlined_call_operand.vmem [shape: f32[3,3], index: 4, kind: input, shape index: {}]
  %s5 = inlined_call_operand.vmem [shape: f32[3,1], index: 5, kind: input, shape index: {}]
  %s6 = inlined_call_operand.hbm [shape: f32[1,1,512], index: 6, kind: output, shape index: {0}]
  %s7 = inlined_call_operand.vmem [shape: f32[304,1], index: 7, kind: output, shape index: {1}]
  %8 = xla_tuple %s6, %s7
  %s9 = sld [smem:[#allocation0]]
  $region46: #{tpu_custom_call.1} parent=0
    _
  %s11 = ssub.s32 1, %s9
  %s12 = scalar_select 0, %s11, %s9
  $region1: #{tpu_custom_call.1} parent=0
    #allocation4 [shape = 'u8[2048]{0}', space=vmem, size = 0x800, scoped, tag = 'output window, operand 0, single buffered']
    #allocation5 [shape = 's32[1]{0}', space=sflag, size = 0x4, scoped, tag = 'scoped memory for tpu_custom_call.1']
    %13 = vsyncpa [#allocation5], 0
    // Predicated region
    $region2: #{tpu_custom_call.1} parent=1 // pred_check
      _
    $region3: #{tpu_custom_call.1} parent=1 // pred_check_branch
      %15 = sbr.rel (0) target = $region5
    $region4: #{tpu_custom_call.1} parent=1 // pred_region
      _
    $region5: #{tpu_custom_call.1} parent=1 // pred_fallthru
      _
    // Predicated region
    $region6: #{tpu_custom_call.1} parent=1 // pred_check
      _
    $region7: #{tpu_custom_call.1} parent=1 // pred_check_branch
      %17 = sbr.rel (0) target = $region9
    $region8: #{tpu_custom_call.1} parent=1 // pred_region
      _
    $region9: #{tpu_custom_call.1} parent=1 // pred_fallthru
      _
    // Predicated region
    $region10: #{tpu_custom_call.1} parent=1 // pred_check
      _
    $region11: #{tpu_custom_call.1} parent=1 // pred_check_branch
      %19 = sbr.rel (0) target = $region13
    $region12: #{tpu_custom_call.1} parent=1 // pred_region
      _
    $region13: #{tpu_custom_call.1} parent=1 // pred_fallthru
      _
    // Predicated region
    $region14: #{tpu_custom_call.1} parent=1 // pred_check
      _
    $region15: #{tpu_custom_call.1} parent=1 // pred_check_branch
      %21 = sbr.rel (0) target = $region17
    $region16: #{tpu_custom_call.1} parent=1 // pred_region
      _
    $region17: #{tpu_custom_call.1} parent=1 // pred_fallthru
      _
    // Predicated region
    $region18: #{tpu_custom_call.1} parent=1 // pred_check
      _
    $region19: #{tpu_custom_call.1} parent=1 // pred_check_branch
      %23 = sbr.rel (0) target = $region21
    $region20: #{tpu_custom_call.1} parent=1 // pred_region
      _
    $region21: #{tpu_custom_call.1} parent=1 // pred_fallthru
      _
    // Predicated region
    $region22: #{tpu_custom_call.1} parent=1 // pred_check
      _
    $region23: #{tpu_custom_call.1} parent=1 // pred_check_branch
      %25 = sbr.rel (0) target = $region25
    $region24: #{tpu_custom_call.1} parent=1 // pred_region
      _
    $region25: #{tpu_custom_call.1} parent=1 // pred_fallthru
      _
    %p26 = scmp.eq.s32.totalorder 0, 0
    // Predicated region
    $region26: #{tpu_custom_call.1} parent=1 // pred_check
      %p27 = pneg %p26
    $region27: #{tpu_custom_call.1} parent=1 // pred_check_branch
      %29 = sbr.rel (%p27) target = $region29
    $region28: #{tpu_custom_call.1} parent=1 // pred_region
      %v30 = vld [vmem:[%s0] sm:$0xff]
      %v31 = vld [vmem:[%s0 + $0x8] sm:$0xff]
      %v32 = vld [vmem:[%s0 + $0x10] sm:$0xff]
      %v33 = vld [vmem:[%s0 + $0x18] sm:$0xff]
      %v34 = vld [vmem:[%s0 + $0x20] sm:$0xff]
      %v35 = vld [vmem:[%s0 + $0x28] sm:$0xff]
      %v36 = vld [vmem:[%s0 + $0x30] sm:$0xff]
      %v37 = vld [vmem:[%s0 + $0x38] sm:$0xff]
      %v38 = vld [vmem:[%s0 + $0x40] sm:$0xff]
      %v39 = vld [vmem:[%s0 + $0x48] sm:$0xff]
      %v40 = vld [vmem:[%s0 + $0x50] sm:$0xff]
      %v41 = vld [vmem:[%s0 + $0x58] sm:$0xff]
      %v42 = vld [vmem:[%s0 + $0x60] sm:$0xff]
      %v43 = vld [vmem:[%s0 + $0x68] sm:$0xff]
      %v44 = vld [vmem:[%s0 + $0x70] sm:$0xff]
      %v45 = vld [vmem:[%s0 + $0x78] sm:$0xff]
      %v46 = vld [vmem:[%s0 + $0x80] sm:$0xff]
      %v47 = vld [vmem:[%s0 + $0x88] sm:$0xff]
      %v48 = vld [vmem:[%s0 + $0x90] sm:$0xff]
      %v49 = vld [vmem:[%s0 + $0x98] sm:$0xff]
      %v50 = vld [vmem:[%s0 + $0xa0] sm:$0xff]
      %v51 = vld [vmem:[%s0 + $0xa8] sm:$0xff]
      %v52 = vld [vmem:[%s0 + $0xb0] sm:$0xff]
      %v53 = vld [vmem:[%s0 + $0xb8] sm:$0xff]
      %v54 = vld [vmem:[%s0 + $0xc0] sm:$0xff]
      %v55 = vld [vmem:[%s0 + $0xc8] sm:$0xff]
      %v56 = vld [vmem:[%s0 + $0xd0] sm:$0xff]
      %v57 = vld [vmem:[%s0 + $0xd8] sm:$0xff]
      %v58 = vld [vmem:[%s0 + $0xe0] sm:$0xff]
      %v59 = vld [vmem:[%s0 + $0xe8] sm:$0xff]
      %v60 = vld [vmem:[%s0 + $0xf0] sm:$0xff]
      %v61 = vld [vmem:[%s0 + $0xf8] sm:$0xff]
      %v62 = vld [vmem:[%s0 + $0x100] sm:$0xff]
      %v63 = vld [vmem:[%s0 + $0x108] sm:$0xff]
      %v64 = vld [vmem:[%s0 + $0x110] sm:$0xff]
      %v65 = vld [vmem:[%s0 + $0x118] sm:$0xff]
      %v66 = vld [vmem:[%s0 + $0x120] sm:$0xff]
      %v67 = vld [vmem:[%s0 + $0x128] sm:$0xff]
      %v68 = vld [vmem:[%s2] sm:$0x7]
      %v69 = vld [vmem:[%s3] sm:$0x1]
      %v71 = vlaneseq
      %v72 = vshrl.u32 %v71, 7
      %v73 = vsub.s32 0, %v72
      %v74 = vrot.slane %v69, %v73
      %vm76 = vcmask 23552
      %v78 = vsel %vm76, %v30, 0
      %v81 = vsel %vm76, %v31, 0
      %v84 = vsel %vm76, %v32, 0
      %v87 = vsel %vm76, %v33, 0
      %v90 = vsel %vm76, %v34, 0
      %v93 = vsel %vm76, %v35, 0
      %v96 = vsel %vm76, %v36, 0
      %v99 = vsel %vm76, %v37, 0
      %v102 = vsel %vm76, %v38, 0
      %v105 = vsel %vm76, %v39, 0
      %v108 = vsel %vm76, %v40, 0
      %v111 = vsel %vm76, %v41, 0
      %v114 = vsel %vm76, %v42, 0
      %v117 = vsel %vm76, %v43, 0
      %v120 = vsel %vm76, %v44, 0
      %v123 = vsel %vm76, %v45, 0
      %v126 = vsel %vm76, %v46, 0
      %v129 = vsel %vm76, %v47, 0
      %v132 = vsel %vm76, %v48, 0
      %v135 = vsel %vm76, %v49, 0
      %v138 = vsel %vm76, %v50, 0
      %v141 = vsel %vm76, %v51, 0
      %v144 = vsel %vm76, %v52, 0
      %v147 = vsel %vm76, %v53, 0
      %v150 = vsel %vm76, %v54, 0
      %v153 = vsel %vm76, %v55, 0
      %v156 = vsel %vm76, %v56, 0
      %v159 = vsel %vm76, %v57, 0
      %v162 = vsel %vm76, %v58, 0
      %v165 = vsel %vm76, %v59, 0
      %v168 = vsel %vm76, %v60, 0
      %v171 = vsel %vm76, %v61, 0
      %v174 = vsel %vm76, %v62, 0
      %v177 = vsel %vm76, %v63, 0
      %v180 = vsel %vm76, %v64, 0
      %v183 = vsel %vm76, %v65, 0
      %v186 = vsel %vm76, %v66, 0
      %v189 = vsel %vm76, %v67, 0
      %vm191 = vcmask 1042432
      %v193 = vsel %vm191, %v68, 0
      %195 = vmatprep.subr.mxu0 0.0
      %196 = vmatpush1.msra.mxu0 %v193
      %197 = vmatprep.subr.mxu0 0.0
      %198 = vmatpush1.msra.mxu0 0.0
      %199 = vmatprep.subr.mxu0 0.0
      %200 = vmatpush1.msra.mxu0 0.0
      %201 = vmatprep.subr.mxu0 0.0
      %202 = vmatpush1.msra.mxu0 0.0
      %203 = vmatprep.subr.mxu0 0.0
      %204 = vmatpush1.msra.mxu0 0.0
      %205 = vmatprep.subr.mxu0 0.0
      %206 = vmatpush1.msra.mxu0 0.0
      %207 = vmatprep.subr.mxu0 0.0
      %208 = vmatpush1.msra.mxu0 0.0
      %209 = vmatprep.subr.mxu0 0.0
      %210 = vmatpush1.msra.mxu0 0.0
      %211 = vmatprep.subr.mxu0 0.0
      %212 = vmatpush1.msra.mxu0 0.0
      %213 = vmatprep.subr.mxu0 0.0
      %214 = vmatpush1.msra.mxu0 0.0
      %215 = vmatprep.subr.mxu0 0.0
      %216 = vmatpush1.msra.mxu0 0.0
      %217 = vmatprep.subr.mxu0 0.0
      %218 = vmatpush1.msra.mxu0 0.0
      %219 = vmatprep.subr.mxu0 0.0
      %220 = vmatpush1.msra.mxu0 0.0
      %221 = vmatprep.subr.mxu0 0.0
      %222 = vmatpush1.msra.mxu0 0.0
      %223 = vmatprep.subr.mxu0 0.0
      %224 = vmatpush1.msra.mxu0 0.0
      %225 = vmatprep.subr.mxu0 0.0
      %226 = vmatpush1.msra.mxu0 0.0
      %227 = vmatprep.subr.mxu0 0.0
      %228 = vmatpush1.msra.mxu0 0.0
      %229 = vmatprep.subr.mxu0 0.0
      %230 = vmatpush1.msra.mxu0 0.0
      %231 = vmatprep.subr.mxu0 0.0
      %232 = vmatpush1.msra.mxu0 0.0
      %233 = vmatprep.subr.mxu0 0.0
      %234 = vmatpush1.msra.mxu0 0.0
      %235 = vmatprep.subr.mxu0 0.0
      %236 = vmatpush1.msra.mxu0 0.0
      %237 = vmatprep.subr.mxu0 0.0
      %238 = vmatpush1.msra.mxu0 0.0
      %239 = vmatprep.subr.mxu0 0.0
      %240 = vmatpush1.msra.mxu0 0.0
      %241 = vmatprep.subr.mxu0 0.0
      %242 = vmatpush1.msra.mxu0 0.0
      %243 = vmatprep.subr.mxu0 0.0
      %244 = vmatpush1.msra.mxu0 0.0
      %245 = vmatprep.subr.mxu0 0.0
      %246 = vmatpush1.msra.mxu0 0.0
      %247 = vmatprep.subr.mxu0 0.0
      %248 = vmatpush1.msra.mxu0 0.0
      %249 = vmatprep.subr.mxu0 0.0
      %250 = vmatpush1.msra.mxu0 0.0
      %251 = vmatprep.subr.mxu0 0.0
      %252 = vmatpush1.msra.mxu0 0.0
      %253 = vmatprep.subr.mxu0 0.0
      %254 = vmatpush1.msra.mxu0 0.0
      %255 = vmatprep.subr.mxu0 0.0
      %256 = vmatpush1.msra.mxu0 0.0
      %257 = vmatprep.subr.mxu0 0.0
      %258 = vmatpush1.msra.mxu0 0.0
      %259 = vmatprep.mubr.f32.mxu0 0.0
      %260 = vmatmul.mubr.f32.gmra.mrb[0].mxu0 %v78
      %v261 = vpop.f32.mrb[0].mxu0
      %v262 = vadd.f32 %v74, %v261
      %v263 = vpop.f32.mrb[0].mxu0
      %264 = vmatprep.mubr.f32.mxu0 0.0
      %265 = vmatmul.mubr.f32.gmra.mrb[0].mxu0 %v81
      %v266 = vpop.f32.mrb[0].mxu0
      %v267 = vadd.f32 %v74, %v266
      %v268 = vpop.f32.mrb[0].mxu0
      %269 = vmatprep.mubr.f32.mxu0 0.0
      %270 = vmatmul.mubr.f32.gmra.mrb[0].mxu0 %v84
      %v271 = vpop.f32.mrb[0].mxu0
      %v272 = vadd.f32 %v74, %v271
      %v273 = vpop.f32.mrb[0].mxu0
      %274 = vmatprep.mubr.f32.mxu0 0.0
      %275 = vmatmul.mubr.f32.gmra.mrb[0].mxu0 %v87
      %v276 = vpop.f32.mrb[0].mxu0
      %v277 = vadd.f32 %v74, %v276
      %v278 = vpop.f32.mrb[0].mxu0
      %279 = vmatprep.mubr.f32.mxu0 0.0
      %280 = vmatmul.mubr.f32.gmra.mrb[0].mxu0 %v90
      %v281 = vpop.f32.mrb[0].mxu0
      %v282 = vadd.f32 %v74, %v281
      %v283 = vpop.f32.mrb[0].mxu0
      %284 = vmatprep.mubr.f32.mxu0 0.0
      %285 = vmatmul.mubr.f32.gmra.mrb[0].mxu0 %v93
      %v286 = vpop.f32.mrb[0].mxu0
      %v287 = vadd.f32 %v74, %v286
      %v288 = vpop.f32.mrb[0].mxu0
      %289 = vmatprep.mubr.f32.mxu0 0.0
      %290 = vmatmul.mubr.f32.gmra.mrb[0].mxu0 %v96
      %v291 = vpop.f32.mrb[0].mxu0
      %v292 = vadd.f32 %v74, %v291
      %v293 = vpop.f32.mrb[0].mxu0
      %294 = vmatprep.mubr.f32.mxu0 0.0
      %295 = vmatmul.mubr.f32.gmra.mrb[0].mxu0 %v99
      %v296 = vpop.f32.mrb[0].mxu0
      %v297 = vadd.f32 %v74, %v296
      %v298 = vpop.f32.mrb[0].mxu0
      %299 = vmatprep.mubr.f32.mxu0 0.0
      %300 = vmatmul.mubr.f32.gmra.mrb[0].mxu0 %v102
      %v301 = vpop.f32.mrb[0].mxu0
      %v302 = vadd.f32 %v74, %v301
      %v303 = vpop.f32.mrb[0].mxu0
      %304 = vmatprep.mubr.f32.mxu0 0.0
      %305 = vmatmul.mubr.f32.gmra.mrb[0].mxu0 %v105
      %v306 = vpop.f32.mrb[0].mxu0
      %v307 = vadd.f32 %v74, %v306
      %v308 = vpop.f32.mrb[0].mxu0
      %309 = vmatprep.mubr.f32.mxu0 0.0
      %310 = vmatmul.mubr.f32.gmra.mrb[0].mxu0 %v108
      %v311 = vpop.f32.mrb[0].mxu0
      %v312 = vadd.f32 %v74, %v311
      %v313 = vpop.f32.mrb[0].mxu0
      %314 = vmatprep.mubr.f32.mxu0 0.0
      %315 = vmatmul.mubr.f32.gmra.mrb[0].mxu0 %v111
      %v316 = vpop.f32.mrb[0].mxu0
      %v317 = vadd.f32 %v74, %v316
      %v318 = vpop.f32.mrb[0].mxu0
      %319 = vmatprep.mubr.f32.mxu0 0.0
      %320 = vmatmul.mubr.f32.gmra.mrb[0].mxu0 %v114
      %v321 = vpop.f32.mrb[0].mxu0
      %v322 = vadd.f32 %v74, %v321
      %v323 = vpop.f32.mrb[0].mxu0
      %324 = vmatprep.mubr.f32.mxu0 0.0
      %325 = vmatmul.mubr.f32.gmra.mrb[0].mxu0 %v117
      %v326 = vpop.f32.mrb[0].mxu0
      %v327 = vadd.f32 %v74, %v326
      %v328 = vpop.f32.mrb[0].mxu0
      %329 = vmatprep.mubr.f32.mxu0 0.0
      %330 = vmatmul.mubr.f32.gmra.mrb[0].mxu0 %v120
      %v331 = vpop.f32.mrb[0].mxu0
      %v332 = vadd.f32 %v74, %v331
      %v333 = vpop.f32.mrb[0].mxu0
      %334 = vmatprep.mubr.f32.mxu0 0.0
      %335 = vmatmul.mubr.f32.gmra.mrb[0].mxu0 %v123
      %v336 = vpop.f32.mrb[0].mxu0
      %v337 = vadd.f32 %v74, %v336
      %v338 = vpop.f32.mrb[0].mxu0
      %339 = vmatprep.mubr.f32.mxu0 0.0
      %340 = vmatmul.mubr.f32.gmra.mrb[0].mxu0 %v126
      %v341 = vpop.f32.mrb[0].mxu0
      %v342 = vadd.f32 %v74, %v341
      %v343 = vpop.f32.mrb[0].mxu0
      %344 = vmatprep.mubr.f32.mxu0 0.0
      %345 = vmatmul.mubr.f32.gmra.mrb[0].mxu0 %v129
      %v346 = vpop.f32.mrb[0].mxu0
      %v347 = vadd.f32 %v74, %v346
      %v348 = vpop.f32.mrb[0].mxu0
      %349 = vmatprep.mubr.f32.mxu0 0.0
      %350 = vmatmul.mubr.f32.gmra.mrb[0].mxu0 %v132
      %v351 = vpop.f32.mrb[0].mxu0
      %v352 = vadd.f32 %v74, %v351
      %v353 = vpop.f32.mrb[0].mxu0
      %354 = vmatprep.mubr.f32.mxu0 0.0
      %355 = vmatmul.mubr.f32.gmra.mrb[0].mxu0 %v135
      %v356 = vpop.f32.mrb[0].mxu0
      %v357 = vadd.f32 %v74, %v356
      %v358 = vpop.f32.mrb[0].mxu0
      %359 = vmatprep.mubr.f32.mxu0 0.0
      %360 = vmatmul.mubr.f32.gmra.mrb[0].mxu0 %v138
      %v361 = vpop.f32.mrb[0].mxu0
      %v362 = vadd.f32 %v74, %v361
      %v363 = vpop.f32.mrb[0].mxu0
      %364 = vmatprep.mubr.f32.mxu0 0.0
      %365 = vmatmul.mubr.f32.gmra.mrb[0].mxu0 %v141
      %v366 = vpop.f32.mrb[0].mxu0
      %v367 = vadd.f32 %v74, %v366
      %v368 = vpop.f32.mrb[0].mxu0
      %369 = vmatprep.mubr.f32.mxu0 0.0
      %370 = vmatmul.mubr.f32.gmra.mrb[0].mxu0 %v144
      %v371 = vpop.f32.mrb[0].mxu0
      %v372 = vadd.f32 %v74, %v371
      %v373 = vpop.f32.mrb[0].mxu0
      %374 = vmatprep.mubr.f32.mxu0 0.0
      %375 = vmatmul.mubr.f32.gmra.mrb[0].mxu0 %v147
      %v376 = vpop.f32.mrb[0].mxu0
      %v377 = vadd.f32 %v74, %v376
      %v378 = vpop.f32.mrb[0].mxu0
      %379 = vmatprep.mubr.f32.mxu0 0.0
      %380 = vmatmul.mubr.f32.gmra.mrb[0].mxu0 %v150
      %v381 = vpop.f32.mrb[0].mxu0
      %v382 = vadd.f32 %v74, %v381
      %v383 = vpop.f32.mrb[0].mxu0
      %384 = vmatprep.mubr.f32.mxu0 0.0
      %385 = vmatmul.mubr.f32.gmra.mrb[0].mxu0 %v153
      %v386 = vpop.f32.mrb[0].mxu0
      %v387 = vadd.f32 %v74, %v386
      %v388 = vpop.f32.mrb[0].mxu0
      %389 = vmatprep.mubr.f32.mxu0 0.0
      %390 = vmatmul.mubr.f32.gmra.mrb[0].mxu0 %v156
      %v391 = vpop.f32.mrb[0].mxu0
      %v392 = vadd.f32 %v74, %v391
      %v393 = vpop.f32.mrb[0].mxu0
      %394 = vmatprep.mubr.f32.mxu0 0.0
      %395 = vmatmul.mubr.f32.gmra.mrb[0].mxu0 %v159
      %v396 = vpop.f32.mrb[0].mxu0
      %v397 = vadd.f32 %v74, %v396
      %v398 = vpop.f32.mrb[0].mxu0
      %399 = vmatprep.mubr.f32.mxu0 0.0
      %400 = vmatmul.mubr.f32.gmra.mrb[0].mxu0 %v162
      %v401 = vpop.f32.mrb[0].mxu0
      %v402 = vadd.f32 %v74, %v401
      %v403 = vpop.f32.mrb[0].mxu0
      %404 = vmatprep.mubr.f32.mxu0 0.0
      %405 = vmatmul.mubr.f32.gmra.mrb[0].mxu0 %v165
      %v406 = vpop.f32.mrb[0].mxu0
      %v407 = vadd.f32 %v74, %v406
      %v408 = vpop.f32.mrb[0].mxu0
      %409 = vmatprep.mubr.f32.mxu0 0.0
      %410 = vmatmul.mubr.f32.gmra.mrb[0].mxu0 %v168
      %v411 = vpop.f32.mrb[0].mxu0
      %v412 = vadd.f32 %v74, %v411
      %v413 = vpop.f32.mrb[0].mxu0
      %414 = vmatprep.mubr.f32.mxu0 0.0
      %415 = vmatmul.mubr.f32.gmra.mrb[0].mxu0 %v171
      %v416 = vpop.f32.mrb[0].mxu0
      %v417 = vadd.f32 %v74, %v416
      %v418 = vpop.f32.mrb[0].mxu0
      %419 = vmatprep.mubr.f32.mxu0 0.0
      %420 = vmatmul.mubr.f32.gmra.mrb[0].mxu0 %v174
      %v421 = vpop.f32.mrb[0].mxu0
      %v422 = vadd.f32 %v74, %v421
      %v423 = vpop.f32.mrb[0].mxu0
      %424 = vmatprep.mubr.f32.mxu0 0.0
      %425 = vmatmul.mubr.f32.gmra.mrb[0].mxu0 %v177
      %v426 = vpop.f32.mrb[0].mxu0
      %v427 = vadd.f32 %v74, %v426
      %v428 = vpop.f32.mrb[0].mxu0
      %429 = vmatprep.mubr.f32.mxu0 0.0
      %430 = vmatmul.mubr.f32.gmra.mrb[0].mxu0 %v180
      %v431 = vpop.f32.mrb[0].mxu0
      %v432 = vadd.f32 %v74, %v431
      %v433 = vpop.f32.mrb[0].mxu0
      %434 = vmatprep.mubr.f32.mxu0 0.0
      %435 = vmatmul.mubr.f32.gmra.mrb[0].mxu0 %v183
      %v436 = vpop.f32.mrb[0].mxu0
      %v437 = vadd.f32 %v74, %v436
      %v438 = vpop.f32.mrb[0].mxu0
      %439 = vmatprep.mubr.f32.mxu0 0.0
      %440 = vmatmul.mubr.f32.gmra.mrb[0].mxu0 %v186
      %v441 = vpop.f32.mrb[0].mxu0
      %v442 = vadd.f32 %v74, %v441
      %v443 = vpop.f32.mrb[0].mxu0
      %444 = vmatprep.mubr.f32.mxu0 0.0
      %445 = vmatmul.mubr.f32.gmra.mrb[0].mxu0 %v189
      %v446 = vpop.f32.mrb[0].mxu0
      %v447 = vadd.f32 %v74, %v446
      %v448 = vpop.f32.mrb[0].mxu0
      %449 = vdwg.mxu0
      %v450 = vmul.f32 %v262, -2.0
      %v451 = vmul.f32 %v267, -2.0
      %v452 = vmul.f32 %v272, -2.0
      %v453 = vmul.f32 %v277, -2.0
      %v454 = vmul.f32 %v282, -2.0
      %v455 = vmul.f32 %v287, -2.0
      %v456 = vmul.f32 %v292, -2.0
      %v457 = vmul.f32 %v297, -2.0
      %v458 = vmul.f32 %v302, -2.0
      %v459 = vmul.f32 %v307, -2.0
      %v460 = vmul.f32 %v312, -2.0
      %v461 = vmul.f32 %v317, -2.0
      %v462 = vmul.f32 %v322, -2.0
      %v463 = vmul.f32 %v327, -2.0
      %v464 = vmul.f32 %v332, -2.0
      %v465 = vmul.f32 %v337, -2.0
      %v466 = vmul.f32 %v342, -2.0
      %v467 = vmul.f32 %v347, -2.0
      %v468 = vmul.f32 %v352, -2.0
      %v469 = vmul.f32 %v357, -2.0
      %v470 = vmul.f32 %v362, -2.0
      %v471 = vmul.f32 %v367, -2.0
      %v472 = vmul.f32 %v372, -2.0
      %v473 = vmul.f32 %v377, -2.0
      %v474 = vmul.f32 %v382, -2.0
      %v475 = vmul.f32 %v387, -2.0
      %v476 = vmul.f32 %v392, -2.0
      %v477 = vmul.f32 %v397, -2.0
      %v478 = vmul.f32 %v402, -2.0
      %v479 = vmul.f32 %v407, -2.0
      %v480 = vmul.f32 %v412, -2.0
      %v481 = vmul.f32 %v417, -2.0
      %v482 = vmul.f32 %v422, -2.0
      %v483 = vmul.f32 %v427, -2.0
      %v484 = vmul.f32 %v432, -2.0
      %v485 = vmul.f32 %v437, -2.0
      %v486 = vmul.f32 %v442, -2.0
      %v487 = vmul.f32 %v447, -2.0
      %488 = vst.msk [vmem:[#allocation2] sm:$0xff] %vm76, %v450
      %489 = vst.msk [vmem:[#allocation2 + $0x8] sm:$0xff] %vm76, %v451
      %490 = vst.msk [vmem:[#allocation2 + $0x10] sm:$0xff] %vm76, %v452
      %491 = vst.msk [vmem:[#allocation2 + $0x18] sm:$0xff] %vm76, %v453
      %492 = vst.msk [vmem:[#allocation2 + $0x20] sm:$0xff] %vm76, %v454
      %493 = vst.msk [vmem:[#allocation2 + $0x28] sm:$0xff] %vm76, %v455
      %494 = vst.msk [vmem:[#allocation2 + $0x30] sm:$0xff] %vm76, %v456
      %495 = vst.msk [vmem:[#allocation2 + $0x38] sm:$0xff] %vm76, %v457
      %496 = vst.msk [vmem:[#allocation2 + $0x40] sm:$0xff] %vm76, %v458
      %497 = vst.msk [vmem:[#allocation2 + $0x48] sm:$0xff] %vm76, %v459
      %498 = vst.msk [vmem:[#allocation2 + $0x50] sm:$0xff] %vm76, %v460
      %499 = vst.msk [vmem:[#allocation2 + $0x58] sm:$0xff] %vm76, %v461
      %500 = vst.msk [vmem:[#allocation2 + $0x60] sm:$0xff] %vm76, %v462
      %501 = vst.msk [vmem:[#allocation2 + $0x68] sm:$0xff] %vm76, %v463
      %502 = vst.msk [vmem:[#allocation2 + $0x70] sm:$0xff] %vm76, %v464
      %503 = vst.msk [vmem:[#allocation2 + $0x78] sm:$0xff] %vm76, %v465
      %504 = vst.msk [vmem:[#allocation2 + $0x80] sm:$0xff] %vm76, %v466
      %505 = vst.msk [vmem:[#allocation2 + $0x88] sm:$0xff] %vm76, %v467
      %506 = vst.msk [vmem:[#allocation2 + $0x90] sm:$0xff] %vm76, %v468
      %507 = vst.msk [vmem:[#allocation2 + $0x98] sm:$0xff] %vm76, %v469
      %508 = vst.msk [vmem:[#allocation2 + $0xa0] sm:$0xff] %vm76, %v470
      %509 = vst.msk [vmem:[#allocation2 + $0xa8] sm:$0xff] %vm76, %v471
      %510 = vst.msk [vmem:[#allocation2 + $0xb0] sm:$0xff] %vm76, %v472
      %511 = vst.msk [vmem:[#allocation2 + $0xb8] sm:$0xff] %vm76, %v473
      %512 = vst.msk [vmem:[#allocation2 + $0xc0] sm:$0xff] %vm76, %v474
      %513 = vst.msk [vmem:[#allocation2 + $0xc8] sm:$0xff] %vm76, %v475
      %514 = vst.msk [vmem:[#allocation2 + $0xd0] sm:$0xff] %vm76, %v476
      %515 = vst.msk [vmem:[#allocation2 + $0xd8] sm:$0xff] %vm76, %v477
      %516 = vst.msk [vmem:[#allocation2 + $0xe0] sm:$0xff] %vm76, %v478
      %517 = vst.msk [vmem:[#allocation2 + $0xe8] sm:$0xff] %vm76, %v479
      %518 = vst.msk [vmem:[#allocation2 + $0xf0] sm:$0xff] %vm76, %v480
      %519 = vst.msk [vmem:[#allocation2 + $0xf8] sm:$0xff] %vm76, %v481
      %520 = vst.msk [vmem:[#allocation2 + $0x100] sm:$0xff] %vm76, %v482
      %521 = vst.msk [vmem:[#allocation2 + $0x108] sm:$0xff] %vm76, %v483
      %522 = vst.msk [vmem:[#allocation2 + $0x110] sm:$0xff] %vm76, %v484
      %523 = vst.msk [vmem:[#allocation2 + $0x118] sm:$0xff] %vm76, %v485
      %524 = vst.msk [vmem:[#allocation2 + $0x120] sm:$0xff] %vm76, %v486
      %525 = vst.msk [vmem:[#allocation2 + $0x128] sm:$0xff] %vm76, %v487
      %v526 = vmul.f32 %v262, %v262
      %v527 = vmul.f32 %v267, %v267
      %v528 = vmul.f32 %v272, %v272
      %v529 = vmul.f32 %v277, %v277
      %v530 = vmul.f32 %v282, %v282
      %v531 = vmul.f32 %v287, %v287
      %v532 = vmul.f32 %v292, %v292
      %v533 = vmul.f32 %v297, %v297
      %v534 = vmul.f32 %v302, %v302
      %v535 = vmul.f32 %v307, %v307
      %v536 = vmul.f32 %v312, %v312
      %v537 = vmul.f32 %v317, %v317
      %v538 = vmul.f32 %v322, %v322
      %v539 = vmul.f32 %v327, %v327
      %v540 = vmul.f32 %v332, %v332
      %v541 = vmul.f32 %v337, %v337
      %v542 = vmul.f32 %v342, %v342
      %v543 = vmul.f32 %v347, %v347
      %v544 = vmul.f32 %v352, %v352
      %v545 = vmul.f32 %v357, %v357
      %v546 = vmul.f32 %v362, %v362
      %v547 = vmul.f32 %v367, %v367
      %v548 = vmul.f32 %v372, %v372
      %v549 = vmul.f32 %v377, %v377
      %v550 = vmul.f32 %v382, %v382
      %v551 = vmul.f32 %v387, %v387
      %v552 = vmul.f32 %v392, %v392
      %v553 = vmul.f32 %v397, %v397
      %v554 = vmul.f32 %v402, %v402
      %v555 = vmul.f32 %v407, %v407
      %v556 = vmul.f32 %v412, %v412
      %v557 = vmul.f32 %v417, %v417
      %v558 = vmul.f32 %v422, %v422
      %v559 = vmul.f32 %v427, %v427
      %v560 = vmul.f32 %v432, %v432
      %v561 = vmul.f32 %v437, %v437
      %v562 = vmul.f32 %v442, %v442
      %v563 = vmul.f32 %v447, %v447
      %v564 = vsel %vm76, %v526, 0.0
      %565 = vadd.xlane.f32.xlu0 %v564
      %v566 = vpop.xlane.xlu0 %565
      %v567 = vsel %vm76, %v527, 0.0
      %568 = vadd.xlane.f32.xlu0 %v567
      %v569 = vpop.xlane.xlu0 %568
      %v570 = vsel %vm76, %v528, 0.0
      %571 = vadd.xlane.f32.xlu0 %v570
      %v572 = vpop.xlane.xlu0 %571
      %v573 = vsel %vm76, %v529, 0.0
      %574 = vadd.xlane.f32.xlu0 %v573
      %v575 = vpop.xlane.xlu0 %574
      %v576 = vsel %vm76, %v530, 0.0
      %577 = vadd.xlane.f32.xlu0 %v576
      %v578 = vpop.xlane.xlu0 %577
      %v579 = vsel %vm76, %v531, 0.0
      %580 = vadd.xlane.f32.xlu0 %v579
      %v581 = vpop.xlane.xlu0 %580
      %v582 = vsel %vm76, %v532, 0.0
      %583 = vadd.xlane.f32.xlu0 %v582
      %v584 = vpop.xlane.xlu0 %583
      %v585 = vsel %vm76, %v533, 0.0
      %586 = vadd.xlane.f32.xlu0 %v585
      %v587 = vpop.xlane.xlu0 %586
      %v588 = vsel %vm76, %v534, 0.0
      %589 = vadd.xlane.f32.xlu0 %v588
      %v590 = vpop.xlane.xlu0 %589
      %v591 = vsel %vm76, %v535, 0.0
      %592 = vadd.xlane.f32.xlu0 %v591
      %v593 = vpop.xlane.xlu0 %592
      %v594 = vsel %vm76, %v536, 0.0
      %595 = vadd.xlane.f32.xlu0 %v594
      %v596 = vpop.xlane.xlu0 %595
      %v597 = vsel %vm76, %v537, 0.0
      %598 = vadd.xlane.f32.xlu0 %v597
      %v599 = vpop.xlane.xlu0 %598
      %v600 = vsel %vm76, %v538, 0.0
      %601 = vadd.xlane.f32.xlu0 %v600
      %v602 = vpop.xlane.xlu0 %601
      %v603 = vsel %vm76, %v539, 0.0
      %604 = vadd.xlane.f32.xlu0 %v603
      %v605 = vpop.xlane.xlu0 %604
      %v606 = vsel %vm76, %v540, 0.0
      %607 = vadd.xlane.f32.xlu0 %v606
      %v608 = vpop.xlane.xlu0 %607
      %v609 = vsel %vm76, %v541, 0.0
      %610 = vadd.xlane.f32.xlu0 %v609
      %v611 = vpop.xlane.xlu0 %610
      %v612 = vsel %vm76, %v542, 0.0
      %613 = vadd.xlane.f32.xlu0 %v612
      %v614 = vpop.xlane.xlu0 %613
      %v615 = vsel %vm76, %v543, 0.0
      %616 = vadd.xlane.f32.xlu0 %v615
      %v617 = vpop.xlane.xlu0 %616
      %v618 = vsel %vm76, %v544, 0.0
      %619 = vadd.xlane.f32.xlu0 %v618
      %v620 = vpop.xlane.xlu0 %619
      %v621 = vsel %vm76, %v545, 0.0
      %622 = vadd.xlane.f32.xlu0 %v621
      %v623 = vpop.xlane.xlu0 %622
      %v624 = vsel %vm76, %v546, 0.0
      %625 = vadd.xlane.f32.xlu0 %v624
      %v626 = vpop.xlane.xlu0 %625
      %v627 = vsel %vm76, %v547, 0.0
      %628 = vadd.xlane.f32.xlu0 %v627
      %v629 = vpop.xlane.xlu0 %628
      %v630 = vsel %vm76, %v548, 0.0
      %631 = vadd.xlane.f32.xlu0 %v630
      %v632 = vpop.xlane.xlu0 %631
      %v633 = vsel %vm76, %v549, 0.0
      %634 = vadd.xlane.f32.xlu0 %v633
      %v635 = vpop.xlane.xlu0 %634
      %v636 = vsel %vm76, %v550, 0.0
      %637 = vadd.xlane.f32.xlu0 %v636
      %v638 = vpop.xlane.xlu0 %637
      %v639 = vsel %vm76, %v551, 0.0
      %640 = vadd.xlane.f32.xlu0 %v639
      %v641 = vpop.xlane.xlu0 %640
      %v642 = vsel %vm76, %v552, 0.0
      %643 = vadd.xlane.f32.xlu0 %v642
      %v644 = vpop.xlane.xlu0 %643
      %v645 = vsel %vm76, %v553, 0.0
      %646 = vadd.xlane.f32.xlu0 %v645
      %v647 = vpop.xlane.xlu0 %646
      %v648 = vsel %vm76, %v554, 0.0
      %649 = vadd.xlane.f32.xlu0 %v648
      %v650 = vpop.xlane.xlu0 %649
      %v651 = vsel %vm76, %v555, 0.0
      %652 = vadd.xlane.f32.xlu0 %v651
      %v653 = vpop.xlane.xlu0 %652
      %v654 = vsel %vm76, %v556, 0.0
      %655 = vadd.xlane.f32.xlu0 %v654
      %v656 = vpop.xlane.xlu0 %655
      %v657 = vsel %vm76, %v557, 0.0
      %658 = vadd.xlane.f32.xlu0 %v657
      %v659 = vpop.xlane.xlu0 %658
      %v660 = vsel %vm76, %v558, 0.0
      %661 = vadd.xlane.f32.xlu0 %v660
      %v662 = vpop.xlane.xlu0 %661
      %v663 = vsel %vm76, %v559, 0.0
      %664 = vadd.xlane.f32.xlu0 %v663
      %v665 = vpop.xlane.xlu0 %664
      %v666 = vsel %vm76, %v560, 0.0
      %667 = vadd.xlane.f32.xlu0 %v666
      %v668 = vpop.xlane.xlu0 %667
      %v669 = vsel %vm76, %v561, 0.0
      %670 = vadd.xlane.f32.xlu0 %v669
      %v671 = vpop.xlane.xlu0 %670
      %v672 = vsel %vm76, %v562, 0.0
      %673 = vadd.xlane.f32.xlu0 %v672
      %v674 = vpop.xlane.xlu0 %673
      %v675 = vsel %vm76, %v563, 0.0
      %676 = vadd.xlane.f32.xlu0 %v675
      %v677 = vpop.xlane.xlu0 %676
      %vm678 = vcmask 7168
      %679 = vst.msk [vmem:[#allocation3] sm:$0xff] %vm678, %v566
      %680 = vst.msk [vmem:[#allocation3 + $0x8] sm:$0xff] %vm678, %v569
      %681 = vst.msk [vmem:[#allocation3 + $0x10] sm:$0xff] %vm678, %v572
      %682 = vst.msk [vmem:[#allocation3 + $0x18] sm:$0xff] %vm678, %v575
      %683 = vst.msk [vmem:[#allocation3 + $0x20] sm:$0xff] %vm678, %v578
      %684 = vst.msk [vmem:[#allocation3 + $0x28] sm:$0xff] %vm678, %v581
      %685 = vst.msk [vmem:[#allocation3 + $0x30] sm:$0xff] %vm678, %v584
      %686 = vst.msk [vmem:[#allocation3 + $0x38] sm:$0xff] %vm678, %v587
      %687 = vst.msk [vmem:[#allocation3 + $0x40] sm:$0xff] %vm678, %v590
      %688 = vst.msk [vmem:[#allocation3 + $0x48] sm:$0xff] %vm678, %v593
      %689 = vst.msk [vmem:[#allocation3 + $0x50] sm:$0xff] %vm678, %v596
      %690 = vst.msk [vmem:[#allocation3 + $0x58] sm:$0xff] %vm678, %v599
      %691 = vst.msk [vmem:[#allocation3 + $0x60] sm:$0xff] %vm678, %v602
      %692 = vst.msk [vmem:[#allocation3 + $0x68] sm:$0xff] %vm678, %v605
      %693 = vst.msk [vmem:[#allocation3 + $0x70] sm:$0xff] %vm678, %v608
      %694 = vst.msk [vmem:[#allocation3 + $0x78] sm:$0xff] %vm678, %v611
      %695 = vst.msk [vmem:[#allocation3 + $0x80] sm:$0xff] %vm678, %v614
      %696 = vst.msk [vmem:[#allocation3 + $0x88] sm:$0xff] %vm678, %v617
      %697 = vst.msk [vmem:[#allocation3 + $0x90] sm:$0xff] %vm678, %v620
      %698 = vst.msk [vmem:[#allocation3 + $0x98] sm:$0xff] %vm678, %v623
      %699 = vst.msk [vmem:[#allocation3 + $0xa0] sm:$0xff] %vm678, %v626
      %700 = vst.msk [vmem:[#allocation3 + $0xa8] sm:$0xff] %vm678, %v629
      %701 = vst.msk [vmem:[#allocation3 + $0xb0] sm:$0xff] %vm678, %v632
      %702 = vst.msk [vmem:[#allocation3 + $0xb8] sm:$0xff] %vm678, %v635
      %703 = vst.msk [vmem:[#allocation3 + $0xc0] sm:$0xff] %vm678, %v638
      %704 = vst.msk [vmem:[#allocation3 + $0xc8] sm:$0xff] %vm678, %v641
      %705 = vst.msk [vmem:[#allocation3 + $0xd0] sm:$0xff] %vm678, %v644
      %706 = vst.msk [vmem:[#allocation3 + $0xd8] sm:$0xff] %vm678, %v647
      %707 = vst.msk [vmem:[#allocation3 + $0xe0] sm:$0xff] %vm678, %v650
      %708 = vst.msk [vmem:[#allocation3 + $0xe8] sm:$0xff] %vm678, %v653
      %709 = vst.msk [vmem:[#allocation3 + $0xf0] sm:$0xff] %vm678, %v656
      %710 = vst.msk [vmem:[#allocation3 + $0xf8] sm:$0xff] %vm678, %v659
      %711 = vst.msk [vmem:[#allocation3 + $0x100] sm:$0xff] %vm678, %v662
      %712 = vst.msk [vmem:[#allocation3 + $0x108] sm:$0xff] %vm678, %v665
      %713 = vst.msk [vmem:[#allocation3 + $0x110] sm:$0xff] %vm678, %v668
      %714 = vst.msk [vmem:[#allocation3 + $0x118] sm:$0xff] %vm678, %v671
      %715 = vst.msk [vmem:[#allocation3 + $0x120] sm:$0xff] %vm678, %v674
      %716 = vst.msk [vmem:[#allocation3 + $0x128] sm:$0xff] %vm678, %v677
      %717 = vst.msk [vmem:[%s7] sm:$0xff] %vm678, inf
      %718 = vst.msk [vmem:[%s7 + $0x8] sm:$0xff] %vm678, inf
      %719 = vst.msk [vmem:[%s7 + $0x10] sm:$0xff] %vm678, inf
      %720 = vst.msk [vmem:[%s7 + $0x18] sm:$0xff] %vm678, inf
      %721 = vst.msk [vmem:[%s7 + $0x20] sm:$0xff] %vm678, inf
      %722 = vst.msk [vmem:[%s7 + $0x28] sm:$0xff] %vm678, inf
      %723 = vst.msk [vmem:[%s7 + $0x30] sm:$0xff] %vm678, inf
      %724 = vst.msk [vmem:[%s7 + $0x38] sm:$0xff] %vm678, inf
      %725 = vst.msk [vmem:[%s7 + $0x40] sm:$0xff] %vm678, inf
      %726 = vst.msk [vmem:[%s7 + $0x48] sm:$0xff] %vm678, inf
      %727 = vst.msk [vmem:[%s7 + $0x50] sm:$0xff] %vm678, inf
      %728 = vst.msk [vmem:[%s7 + $0x58] sm:$0xff] %vm678, inf
      %729 = vst.msk [vmem:[%s7 + $0x60] sm:$0xff] %vm678, inf
      %730 = vst.msk [vmem:[%s7 + $0x68] sm:$0xff] %vm678, inf
      %731 = vst.msk [vmem:[%s7 + $0x70] sm:$0xff] %vm678, inf
      %732 = vst.msk [vmem:[%s7 + $0x78] sm:$0xff] %vm678, inf
      %733 = vst.msk [vmem:[%s7 + $0x80] sm:$0xff] %vm678, inf
      %734 = vst.msk [vmem:[%s7 + $0x88] sm:$0xff] %vm678, inf
      %735 = vst.msk [vmem:[%s7 + $0x90] sm:$0xff] %vm678, inf
      %736 = vst.msk [vmem:[%s7 + $0x98] sm:$0xff] %vm678, inf
      %737 = vst.msk [vmem:[%s7 + $0xa0] sm:$0xff] %vm678, inf
      %738 = vst.msk [vmem:[%s7 + $0xa8] sm:$0xff] %vm678, inf
      %739 = vst.msk [vmem:[%s7 + $0xb0] sm:$0xff] %vm678, inf
      %740 = vst.msk [vmem:[%s7 + $0xb8] sm:$0xff] %vm678, inf
      %741 = vst.msk [vmem:[%s7 + $0xc0] sm:$0xff] %vm678, inf
      %742 = vst.msk [vmem:[%s7 + $0xc8] sm:$0xff] %vm678, inf
      %743 = vst.msk [vmem:[%s7 + $0xd0] sm:$0xff] %vm678, inf
      %744 = vst.msk [vmem:[%s7 + $0xd8] sm:$0xff] %vm678, inf
      %745 = vst.msk [vmem:[%s7 + $0xe0] sm:$0xff] %vm678, inf
      %746 = vst.msk [vmem:[%s7 + $0xe8] sm:$0xff] %vm678, inf
      %747 = vst.msk [vmem:[%s7 + $0xf0] sm:$0xff] %vm678, inf
      %748 = vst.msk [vmem:[%s7 + $0xf8] sm:$0xff] %vm678, inf
      %749 = vst.msk [vmem:[%s7 + $0x100] sm:$0xff] %vm678, inf
      %750 = vst.msk [vmem:[%s7 + $0x108] sm:$0xff] %vm678, inf
      %751 = vst.msk [vmem:[%s7 + $0x110] sm:$0xff] %vm678, inf
      %752 = vst.msk [vmem:[%s7 + $0x118] sm:$0xff] %vm678, inf
      %753 = vst.msk [vmem:[%s7 + $0x120] sm:$0xff] %vm678, inf
      %754 = vst.msk [vmem:[%s7 + $0x128] sm:$0xff] %vm678, inf
    $region29: #{tpu_custom_call.1} parent=1 // pred_fallthru
      _
    %v755 = vld [vmem:[%s4] sm:$0x7]
    %v756 = vld [vmem:[%s1] sm:$0x77]
    %v757 = vld [vmem:[%s1 + $0x8] sm:$0x77]
    %v758 = vld [vmem:[%s5] sm:$0x7]
    %760 = vset.pattern.permute.xlu0 0
    %761 = vperm.xlu0 %760, %v758
    %v762 = vpop.permute.xlu0 %761
    %v766 = vcombine.high %v756, %v756
    %v767 = vcombine.high %v757, %v757
    %vm768 = vcmask 23552
    %v770 = vsel %vm768, %v755, 0
    %vm772 = vcmask 1042432
    %v773 = vsel %vm772, %v756, 0
    %v775 = vsel %vm772, %v766, 0
    %v777 = vsel %vm772, %v757, 0
    %v779 = vsel %vm772, %v767, 0
    %781 = vmatprep.subr.mxu0 %v775
    %782 = vmatpush1.msra.mxu0 %v773
    %783 = vmatprep.subr.mxu0 0.0
    %784 = vmatpush1.msra.mxu0 0.0
    %785 = vmatprep.subr.mxu0 0.0
    %786 = vmatpush1.msra.mxu0 0.0
    %787 = vmatprep.subr.mxu0 0.0
    %788 = vmatpush1.msra.mxu0 0.0
    %789 = vmatprep.subr.mxu0 0.0
    %790 = vmatpush1.msra.mxu0 0.0
    %791 = vmatprep.subr.mxu0 0.0
    %792 = vmatpush1.msra.mxu0 0.0
    %793 = vmatprep.subr.mxu0 0.0
    %794 = vmatpush1.msra.mxu0 0.0
    %795 = vmatprep.subr.mxu0 0.0
    %796 = vmatpush1.msra.mxu0 0.0
    %797 = vmatprep.subr.mxu0 0.0
    %798 = vmatpush1.msra.mxu0 0.0
    %799 = vmatprep.subr.mxu0 0.0
    %800 = vmatpush1.msra.mxu0 0.0
    %801 = vmatprep.subr.mxu0 0.0
    %802 = vmatpush1.msra.mxu0 0.0
    %803 = vmatprep.subr.mxu0 0.0
    %804 = vmatpush1.msra.mxu0 0.0
    %805 = vmatprep.subr.mxu0 0.0
    %806 = vmatpush1.msra.mxu0 0.0
    %807 = vmatprep.subr.mxu0 0.0
    %808 = vmatpush1.msra.mxu0 0.0
    %809 = vmatprep.subr.mxu0 0.0
    %810 = vmatpush1.msra.mxu0 0.0
    %811 = vmatprep.subr.mxu0 0.0
    %812 = vmatpush1.msra.mxu0 0.0
    %813 = vmatprep.subr.mxu0 0.0
    %814 = vmatpush1.msra.mxu0 0.0
    %815 = vmatprep.subr.mxu0 0.0
    %816 = vmatpush1.msra.mxu0 0.0
    %817 = vmatprep.subr.mxu0 0.0
    %818 = vmatpush1.msra.mxu0 0.0
    %819 = vmatprep.subr.mxu0 0.0
    %820 = vmatpush1.msra.mxu0 0.0
    %821 = vmatprep.subr.mxu0 0.0
    %822 = vmatpush1.msra.mxu0 0.0
    %823 = vmatprep.subr.mxu0 0.0
    %824 = vmatpush1.msra.mxu0 0.0
    %825 = vmatprep.subr.mxu0 0.0
    %826 = vmatpush1.msra.mxu0 0.0
    %827 = vmatprep.subr.mxu0 0.0
    %828 = vmatpush1.msra.mxu0 0.0
    %829 = vmatprep.subr.mxu0 0.0
    %830 = vmatpush1.msra.mxu0 0.0
    %831 = vmatprep.subr.mxu0 0.0
    %832 = vmatpush1.msra.mxu0 0.0
    %833 = vmatprep.subr.mxu0 0.0
    %834 = vmatpush1.msra.mxu0 0.0
    %835 = vmatprep.subr.mxu0 0.0
    %836 = vmatpush1.msra.mxu0 0.0
    %837 = vmatprep.subr.mxu0 0.0
    %838 = vmatpush1.msra.mxu0 0.0
    %839 = vmatprep.subr.mxu0 0.0
    %840 = vmatpush1.msra.mxu0 0.0
    %841 = vmatprep.subr.mxu0 0.0
    %842 = vmatpush1.msra.mxu0 0.0
    %843 = vmatprep.subr.mxu0 0.0
    %844 = vmatpush1.msra.mxu0 0.0
    %845 = vmatprep.mubr.f32.mxu0 0.0
    %846 = vmatmul.mubr.f32.gmra.mrb[0].mxu0 %v770
    %v847 = vpop.f32.mrb[0].mxu0
    %v848 = vadd.f32 %v762, %v847
    %v849 = vpop.f32.mrb[0].mxu0
    %v850 = vadd.f32 %v762, %v849
    %851 = vdwg.mxu0
    %852 = vmatprep.subr.mxu0 %v779
    %853 = vmatpush1.msra.mxu0 %v777
    %854 = vmatprep.subr.mxu0 0.0
    %855 = vmatpush1.msra.mxu0 0.0
    %856 = vmatprep.subr.mxu0 0.0
    %857 = vmatpush1.msra.mxu0 0.0
    %858 = vmatprep.subr.mxu0 0.0
    %859 = vmatpush1.msra.mxu0 0.0
    %860 = vmatprep.subr.mxu0 0.0
    %861 = vmatpush1.msra.mxu0 0.0
    %862 = vmatprep.subr.mxu0 0.0
    %863 = vmatpush1.msra.mxu0 0.0
    %864 = vmatprep.subr.mxu0 0.0
    %865 = vmatpush1.msra.mxu0 0.0
    %866 = vmatprep.subr.mxu0 0.0
    %867 = vmatpush1.msra.mxu0 0.0
    %868 = vmatprep.subr.mxu0 0.0
    %869 = vmatpush1.msra.mxu0 0.0
    %870 = vmatprep.subr.mxu0 0.0
    %871 = vmatpush1.msra.mxu0 0.0
    %872 = vmatprep.subr.mxu0 0.0
    %873 = vmatpush1.msra.mxu0 0.0
    %874 = vmatprep.subr.mxu0 0.0
    %875 = vmatpush1.msra.mxu0 0.0
    %876 = vmatprep.subr.mxu0 0.0
    %877 = vmatpush1.msra.mxu0 0.0
    %878 = vmatprep.subr.mxu0 0.0
    %879 = vmatpush1.msra.mxu0 0.0
    %880 = vmatprep.subr.mxu0 0.0
    %881 = vmatpush1.msra.mxu0 0.0
    %882 = vmatprep.subr.mxu0 0.0
    %883 = vmatpush1.msra.mxu0 0.0
    %884 = vmatprep.subr.mxu0 0.0
    %885 = vmatpush1.msra.mxu0 0.0
    %886 = vmatprep.subr.mxu0 0.0
    %887 = vmatpush1.msra.mxu0 0.0
    %888 = vmatprep.subr.mxu0 0.0
    %889 = vmatpush1.msra.mxu0 0.0
    %890 = vmatprep.subr.mxu0 0.0
    %891 = vmatpush1.msra.mxu0 0.0
    %892 = vmatprep.subr.mxu0 0.0
    %893 = vmatpush1.msra.mxu0 0.0
    %894 = vmatprep.subr.mxu0 0.0
    %895 = vmatpush1.msra.mxu0 0.0
    %896 = vmatprep.subr.mxu0 0.0
    %897 = vmatpush1.msra.mxu0 0.0
    %898 = vmatprep.subr.mxu0 0.0
    %899 = vmatpush1.msra.mxu0 0.0
    %900 = vmatprep.subr.mxu0 0.0
    %901 = vmatpush1.msra.mxu0 0.0
    %902 = vmatprep.subr.mxu0 0.0
    %903 = vmatpush1.msra.mxu0 0.0
    %904 = vmatprep.subr.mxu0 0.0
    %905 = vmatpush1.msra.mxu0 0.0
    %906 = vmatprep.subr.mxu0 0.0
    %907 = vmatpush1.msra.mxu0 0.0
    %908 = vmatprep.subr.mxu0 0.0
    %909 = vmatpush1.msra.mxu0 0.0
    %910 = vmatprep.subr.mxu0 0.0
    %911 = vmatpush1.msra.mxu0 0.0
    %912 = vmatprep.subr.mxu0 0.0
    %913 = vmatpush1.msra.mxu0 0.0
    %914 = vmatprep.subr.mxu0 0.0
    %915 = vmatpush1.msra.mxu0 0.0
    %916 = vmatprep.mubr.f32.mxu0 0.0
    %917 = vmatmul.mubr.f32.gmra.mrb[0].mxu0 %v770
    %v918 = vpop.f32.mrb[0].mxu0
    %v919 = vadd.f32 %v762, %v918
    %v920 = vpop.f32.mrb[0].mxu0
    %v921 = vadd.f32 %v762, %v920
    %922 = vdwg.mxu0
    %v923 = vmul.f32 %v848, %v848
    %v924 = vmul.f32 %v850, %v850
    %v925 = vmul.f32 %v919, %v919
    %v926 = vmul.f32 %v921, %v921
    %v927 = vsel %vm772, %v923, 0.0
    %v928 = vrot.slane %v927, 4
    %v929 = vadd.f32 %v927, %v928
    %v930 = vrot.slane %v929, 2
    %v931 = vadd.f32 %v929, %v930
    %v932 = vrot.slane %v931, 1
    %v933 = vadd.f32 %v931, %v932
    %v934 = vsel %vm772, %v924, 0.0
    %v935 = vrot.slane %v934, 4
    %v936 = vadd.f32 %v934, %v935
    %v937 = vrot.slane %v936, 2
    %v938 = vadd.f32 %v936, %v937
    %v939 = vrot.slane %v938, 1
    %v940 = vadd.f32 %v938, %v939
    %v941 = vsel %vm772, %v925, 0.0
    %v942 = vrot.slane %v941, 4
    %v943 = vadd.f32 %v941, %v942
    %v944 = vrot.slane %v943, 2
    %v945 = vadd.f32 %v943, %v944
    %v946 = vrot.slane %v945, 1
    %v947 = vadd.f32 %v945, %v946
    %v948 = vsel %vm772, %v926, 0.0
    %v949 = vrot.slane %v948, 4
    %v950 = vadd.f32 %v948, %v949
    %v951 = vrot.slane %v950, 2
    %v952 = vadd.f32 %v950, %v951
    %v953 = vrot.slane %v952, 1
    %v954 = vadd.f32 %v952, %v953
    %v955 = vld [vmem:[#allocation2] sm:$0xff]
    %v956 = vld [vmem:[#allocation2 + $0x8] sm:$0xff]
    %v957 = vld [vmem:[#allocation2 + $0x10] sm:$0xff]
    %v958 = vld [vmem:[#allocation2 + $0x18] sm:$0xff]
    %v959 = vld [vmem:[#allocation2 + $0x20] sm:$0xff]
    %v960 = vld [vmem:[#allocation2 + $0x28] sm:$0xff]
    %v961 = vld [vmem:[#allocation2 + $0x30] sm:$0xff]
    %v962 = vld [vmem:[#allocation2 + $0x38] sm:$0xff]
    %v963 = vld [vmem:[#allocation3] sm:$0xff]
    %v964 = vld [vmem:[#allocation3 + $0x8] sm:$0xff]
    %v965 = vld [vmem:[#allocation3 + $0x10] sm:$0xff]
    %v966 = vld [vmem:[#allocation3 + $0x18] sm:$0xff]
    %v967 = vld [vmem:[#allocation3 + $0x20] sm:$0xff]
    %v968 = vld [vmem:[#allocation3 + $0x28] sm:$0xff]
    %v969 = vld [vmem:[#allocation3 + $0x30] sm:$0xff]
    %v970 = vld [vmem:[#allocation3 + $0x38] sm:$0xff]
    %972 = vset.pattern.permute.xlu0 0
    %973 = vperm.xlu0 %972, %v963
    %v974 = vpop.permute.xlu0 %973
    %977 = vset.pattern.permute.xlu0 0
    %978 = vperm.xlu0 %977, %v964
    %v979 = vpop.permute.xlu0 %978
    %982 = vset.pattern.permute.xlu0 0
    %983 = vperm.xlu0 %982, %v965
    %v984 = vpop.permute.xlu0 %983
    %987 = vset.pattern.permute.xlu0 0
    %988 = vperm.xlu0 %987, %v966
    %v989 = vpop.permute.xlu0 %988
    %992 = vset.pattern.permute.xlu0 0
    %993 = vperm.xlu0 %992, %v967
    %v994 = vpop.permute.xlu0 %993
    %997 = vset.pattern.permute.xlu0 0
    %998 = vperm.xlu0 %997, %v968
    %v999 = vpop.permute.xlu0 %998
    %1002 = vset.pattern.permute.xlu0 0
    %1003 = vperm.xlu0 %1002, %v969
    %v1004 = vpop.permute.xlu0 %1003
    %1007 = vset.pattern.permute.xlu0 0
    %1008 = vperm.xlu0 %1007, %v970
    %v1009 = vpop.permute.xlu0 %1008
    %v1012 = vsel %vm768, %v955, 0
    %v1015 = vsel %vm768, %v956, 0
    %v1018 = vsel %vm768, %v957, 0
    %v1021 = vsel %vm768, %v958, 0
    %v1024 = vsel %vm768, %v959, 0
    %v1027 = vsel %vm768, %v960, 0
    %v1030 = vsel %vm768, %v961, 0
    %v1033 = vsel %vm768, %v962, 0
    %v1036 = vsel %vm772, %v848, 0
    %v1039 = vsel %vm772, %v850, 0
    %v1042 = vsel %vm772, %v919, 0
    %v1045 = vsel %vm772, %v921, 0
    %1047 = vmatprep.subr.mxu0 %v1039
    %1048 = vmatpush1.msra.mxu0 %v1036
    %1049 = vmatprep.subr.mxu0 0.0
    %1050 = vmatpush1.msra.mxu0 0.0
    %1051 = vmatprep.subr.mxu0 0.0
    %1052 = vmatpush1.msra.mxu0 0.0
    %1053 = vmatprep.subr.mxu0 0.0
    %1054 = vmatpush1.msra.mxu0 0.0
    %1055 = vmatprep.subr.mxu0 0.0
    %1056 = vmatpush1.msra.mxu0 0.0
    %1057 = vmatprep.subr.mxu0 0.0
    %1058 = vmatpush1.msra.mxu0 0.0
    %1059 = vmatprep.subr.mxu0 0.0
    %1060 = vmatpush1.msra.mxu0 0.0
    %1061 = vmatprep.subr.mxu0 0.0
    %1062 = vmatpush1.msra.mxu0 0.0
    %1063 = vmatprep.subr.mxu0 0.0
    %1064 = vmatpush1.msra.mxu0 0.0
    %1065 = vmatprep.subr.mxu0 0.0
    %1066 = vmatpush1.msra.mxu0 0.0
    %1067 = vmatprep.subr.mxu0 0.0
    %1068 = vmatpush1.msra.mxu0 0.0
    %1069 = vmatprep.subr.mxu0 0.0
    %1070 = vmatpush1.msra.mxu0 0.0
    %1071 = vmatprep.subr.mxu0 0.0
    %1072 = vmatpush1.msra.mxu0 0.0
    %1073 = vmatprep.subr.mxu0 0.0
    %1074 = vmatpush1.msra.mxu0 0.0
    %1075 = vmatprep.subr.mxu0 0.0
    %1076 = vmatpush1.msra.mxu0 0.0
    %1077 = vmatprep.subr.mxu0 0.0
    %1078 = vmatpush1.msra.mxu0 0.0
    %1079 = vmatprep.subr.mxu0 0.0
    %1080 = vmatpush1.msra.mxu0 0.0
    %1081 = vmatprep.subr.mxu0 0.0
    %1082 = vmatpush1.msra.mxu0 0.0
    %1083 = vmatprep.subr.mxu0 0.0
    %1084 = vmatpush1.msra.mxu0 0.0
    %1085 = vmatprep.subr.mxu0 0.0
    %1086 = vmatpush1.msra.mxu0 0.0
    %1087 = vmatprep.subr.mxu0 0.0
    %1088 = vmatpush1.msra.mxu0 0.0
    %1089 = vmatprep.subr.mxu0 0.0
    %1090 = vmatpush1.msra.mxu0 0.0
    %1091 = vmatprep.subr.mxu0 0.0
    %1092 = vmatpush1.msra.mxu0 0.0
    %1093 = vmatprep.subr.mxu0 0.0
    %1094 = vmatpush1.msra.mxu0 0.0
    %1095 = vmatprep.subr.mxu0 0.0
    %1096 = vmatpush1.msra.mxu0 0.0
    %1097 = vmatprep.subr.mxu0 0.0
    %1098 = vmatpush1.msra.mxu0 0.0
    %1099 = vmatprep.subr.mxu0 0.0
    %1100 = vmatpush1.msra.mxu0 0.0
    %1101 = vmatprep.subr.mxu0 0.0
    %1102 = vmatpush1.msra.mxu0 0.0
    %1103 = vmatprep.subr.mxu0 0.0
    %1104 = vmatpush1.msra.mxu0 0.0
    %1105 = vmatprep.subr.mxu0 0.0
    %1106 = vmatpush1.msra.mxu0 0.0
    %1107 = vmatprep.subr.mxu0 0.0
    %1108 = vmatpush1.msra.mxu0 0.0
    %1109 = vmatprep.subr.mxu0 0.0
    %1110 = vmatpush1.msra.mxu0 0.0
    %1111 = vmatprep.mubr.f32.mxu0 0.0
    %1112 = vmatmul.mubr.f32.gmra.mrb[0].mxu0 %v1012
    %v1113 = vpop.f32.mrb[0].mxu0
    %v1114 = vadd.f32 %v974, %v1113
    %v1115 = vpop.f32.mrb[0].mxu0
    %v1116 = vadd.f32 %v974, %v1115
    %1117 = vmatprep.mubr.f32.mxu0 0.0
    %1118 = vmatmul.mubr.f32.gmra.mrb[0].mxu0 %v1015
    %v1119 = vpop.f32.mrb[0].mxu0
    %v1120 = vadd.f32 %v979, %v1119
    %v1121 = vpop.f32.mrb[0].mxu0
    %v1122 = vadd.f32 %v979, %v1121
    %1123 = vmatprep.mubr.f32.mxu0 0.0
    %1124 = vmatmul.mubr.f32.gmra.mrb[0].mxu0 %v1018
    %v1125 = vpop.f32.mrb[0].mxu0
    %v1126 = vadd.f32 %v984, %v1125
    %v1127 = vpop.f32.mrb[0].mxu0
    %v1128 = vadd.f32 %v984, %v1127
    %1129 = vmatprep.mubr.f32.mxu0 0.0
    %1130 = vmatmul.mubr.f32.gmra.mrb[0].mxu0 %v1021
    %v1131 = vpop.f32.mrb[0].mxu0
    %v1132 = vadd.f32 %v989, %v1131
    %v1133 = vpop.f32.mrb[0].mxu0
    %v1134 = vadd.f32 %v989, %v1133
    %1135 = vmatprep.mubr.f32.mxu0 0.0
    %1136 = vmatmul.mubr.f32.gmra.mrb[0].mxu0 %v1024
    %v1137 = vpop.f32.mrb[0].mxu0
    %v1138 = vadd.f32 %v994, %v1137
    %v1139 = vpop.f32.mrb[0].mxu0
    %v1140 = vadd.f32 %v994, %v1139
    %1141 = vmatprep.mubr.f32.mxu0 0.0
    %1142 = vmatmul.mubr.f32.gmra.mrb[0].mxu0 %v1027
    %v1143 = vpop.f32.mrb[0].mxu0
    %v1144 = vadd.f32 %v999, %v1143
    %v1145 = vpop.f32.mrb[0].mxu0
    %v1146 = vadd.f32 %v999, %v1145
    %1147 = vmatprep.mubr.f32.mxu0 0.0
    %1148 = vmatmul.mubr.f32.gmra.mrb[0].mxu0 %v1030
    %v1149 = vpop.f32.mrb[0].mxu0
    %v1150 = vadd.f32 %v1004, %v1149
    %v1151 = vpop.f32.mrb[0].mxu0
    %v1152 = vadd.f32 %v1004, %v1151
    %1153 = vmatprep.mubr.f32.mxu0 0.0
    %1154 = vmatmul.mubr.f32.gmra.mrb[0].mxu0 %v1033
    %v1155 = vpop.f32.mrb[0].mxu0
    %v1156 = vadd.f32 %v1009, %v1155
    %v1157 = vpop.f32.mrb[0].mxu0
    %v1158 = vadd.f32 %v1009, %v1157
    %1159 = vdwg.mxu0
    %1160 = vmatprep.subr.mxu0 %v1045
    %1161 = vmatpush1.msra.mxu0 %v1042
    %1162 = vmatprep.subr.mxu0 0.0
    %1163 = vmatpush1.msra.mxu0 0.0
    %1164 = vmatprep.subr.mxu0 0.0
    %1165 = vmatpush1.msra.mxu0 0.0
    %1166 = vmatprep.subr.mxu0 0.0
    %1167 = vmatpush1.msra.mxu0 0.0
    %1168 = vmatprep.subr.mxu0 0.0
    %1169 = vmatpush1.msra.mxu0 0.0
    %1170 = vmatprep.subr.mxu0 0.0
    %1171 = vmatpush1.msra.mxu0 0.0
    %1172 = vmatprep.subr.mxu0 0.0
    %1173 = vmatpush1.msra.mxu0 0.0
    %1174 = vmatprep.subr.mxu0 0.0
    %1175 = vmatpush1.msra.mxu0 0.0
    %1176 = vmatprep.subr.mxu0 0.0
    %1177 = vmatpush1.msra.mxu0 0.0
    %1178 = vmatprep.subr.mxu0 0.0
    %1179 = vmatpush1.msra.mxu0 0.0
    %1180 = vmatprep.subr.mxu0 0.0
    %1181 = vmatpush1.msra.mxu0 0.0
    %1182 = vmatprep.subr.mxu0 0.0
    %1183 = vmatpush1.msra.mxu0 0.0
    %1184 = vmatprep.subr.mxu0 0.0
    %1185 = vmatpush1.msra.mxu0 0.0
    %1186 = vmatprep.subr.mxu0 0.0
    %1187 = vmatpush1.msra.mxu0 0.0
    %1188 = vmatprep.subr.mxu0 0.0
    %1189 = vmatpush1.msra.mxu0 0.0
    %1190 = vmatprep.subr.mxu0 0.0
    %1191 = vmatpush1.msra.mxu0 0.0
    %1192 = vmatprep.subr.mxu0 0.0
    %1193 = vmatpush1.msra.mxu0 0.0
    %1194 = vmatprep.subr.mxu0 0.0
    %1195 = vmatpush1.msra.mxu0 0.0
    %1196 = vmatprep.subr.mxu0 0.0
    %1197 = vmatpush1.msra.mxu0 0.0
    %1198 = vmatprep.subr.mxu0 0.0
    %1199 = vmatpush1.msra.mxu0 0.0
    %1200 = vmatprep.subr.mxu0 0.0
    %1201 = vmatpush1.msra.mxu0 0.0
    %1202 = vmatprep.subr.mxu0 0.0
    %1203 = vmatpush1.msra.mxu0 0.0
    %1204 = vmatprep.subr.mxu0 0.0
    %1205 = vmatpush1.msra.mxu0 0.0
    %1206 = vmatprep.subr.mxu0 0.0
    %1207 = vmatpush1.msra.mxu0 0.0
    %1208 = vmatprep.subr.mxu0 0.0
    %1209 = vmatpush1.msra.mxu0 0.0
    %1210 = vmatprep.subr.mxu0 0.0
    %1211 = vmatpush1.msra.mxu0 0.0
    %1212 = vmatprep.subr.mxu0 0.0
    %1213 = vmatpush1.msra.mxu0 0.0
    %1214 = vmatprep.subr.mxu0 0.0
    %1215 = vmatpush1.msra.mxu0 0.0
    %1216 = vmatprep.subr.mxu0 0.0
    %1217 = vmatpush1.msra.mxu0 0.0
    %1218 = vmatprep.subr.mxu0 0.0
    %1219 = vmatpush1.msra.mxu0 0.0
    %1220 = vmatprep.subr.mxu0 0.0
    %1221 = vmatpush1.msra.mxu0 0.0
    %1222 = vmatprep.subr.mxu0 0.0
    %1223 = vmatpush1.msra.mxu0 0.0
    %1224 = vmatprep.mubr.f32.mxu0 0.0
    %1225 = vmatmul.mubr.f32.gmra.mrb[0].mxu0 %v1012
    %v1226 = vpop.f32.mrb[0].mxu0
    %v1227 = vadd.f32 %v974, %v1226
    %v1228 = vpop.f32.mrb[0].mxu0
    %v1229 = vadd.f32 %v974, %v1228
    %1230 = vmatprep.mubr.f32.mxu0 0.0
    %1231 = vmatmul.mubr.f32.gmra.mrb[0].mxu0 %v1015
    %v1232 = vpop.f32.mrb[0].mxu0
    %v1233 = vadd.f32 %v979, %v1232
    %v1234 = vpop.f32.mrb[0].mxu0
    %v1235 = vadd.f32 %v979, %v1234
    %1236 = vmatprep.mubr.f32.mxu0 0.0
    %1237 = vmatmul.mubr.f32.gmra.mrb[0].mxu0 %v1018
    %v1238 = vpop.f32.mrb[0].mxu0
    %v1239 = vadd.f32 %v984, %v1238
    %v1240 = vpop.f32.mrb[0].mxu0
    %v1241 = vadd.f32 %v984, %v1240
    %1242 = vmatprep.mubr.f32.mxu0 0.0
    %1243 = vmatmul.mubr.f32.gmra.mrb[0].mxu0 %v1021
    %v1244 = vpop.f32.mrb[0].mxu0
    %v1245 = vadd.f32 %v989, %v1244
    %v1246 = vpop.f32.mrb[0].mxu0
    %v1247 = vadd.f32 %v989, %v1246
    %1248 = vmatprep.mubr.f32.mxu0 0.0
    %1249 = vmatmul.mubr.f32.gmra.mrb[0].mxu0 %v1024
    %v1250 = vpop.f32.mrb[0].mxu0
    %v1251 = vadd.f32 %v994, %v1250
    %v1252 = vpop.f32.mrb[0].mxu0
    %v1253 = vadd.f32 %v994, %v1252
    %1254 = vmatprep.mubr.f32.mxu0 0.0
    %1255 = vmatmul.mubr.f32.gmra.mrb[0].mxu0 %v1027
    %v1256 = vpop.f32.mrb[0].mxu0
    %v1257 = vadd.f32 %v999, %v1256
    %v1258 = vpop.f32.mrb[0].mxu0
    %v1259 = vadd.f32 %v999, %v1258
    %1260 = vmatprep.mubr.f32.mxu0 0.0
    %1261 = vmatmul.mubr.f32.gmra.mrb[0].mxu0 %v1030
    %v1262 = vpop.f32.mrb[0].mxu0
    %v1263 = vadd.f32 %v1004, %v1262
    %v1264 = vpop.f32.mrb[0].mxu0
    %v1265 = vadd.f32 %v1004, %v1264
    %1266 = vmatprep.mubr.f32.mxu0 0.0
    %1267 = vmatmul.mubr.f32.gmra.mrb[0].mxu0 %v1033
    %v1268 = vpop.f32.mrb[0].mxu0
    %v1269 = vadd.f32 %v1009, %v1268
    %v1270 = vpop.f32.mrb[0].mxu0
    %v1271 = vadd.f32 %v1009, %v1270
    %1272 = vdwg.mxu0
    %v1273 = vadd.f32 %v1114, %v933
    %v1274 = vadd.f32 %v1116, %v940
    %v1275 = vadd.f32 %v1227, %v947
    %v1276 = vadd.f32 %v1229, %v954
    %v1277 = vadd.f32 %v1120, %v933
    %v1278 = vadd.f32 %v1122, %v940
    %v1279 = vadd.f32 %v1233, %v947
    %v1280 = vadd.f32 %v1235, %v954
    %v1281 = vadd.f32 %v1126, %v933
    %v1282 = vadd.f32 %v1128, %v940
    %v1283 = vadd.f32 %v1239, %v947
    %v1284 = vadd.f32 %v1241, %v954
    %v1285 = vadd.f32 %v1132, %v933
    %v1286 = vadd.f32 %v1134, %v940
    %v1287 = vadd.f32 %v1245, %v947
    %v1288 = vadd.f32 %v1247, %v954
    %v1289 = vadd.f32 %v1138, %v933
    %v1290 = vadd.f32 %v1140, %v940
    %v1291 = vadd.f32 %v1251, %v947
    %v1292 = vadd.f32 %v1253, %v954
    %v1293 = vadd.f32 %v1144, %v933
    %v1294 = vadd.f32 %v1146, %v940
    %v1295 = vadd.f32 %v1257, %v947
    %v1296 = vadd.f32 %v1259, %v954
    %v1297 = vadd.f32 %v1150, %v933
    %v1298 = vadd.f32 %v1152, %v940
    %v1299 = vadd.f32 %v1263, %v947
    %v1300 = vadd.f32 %v1265, %v954
    %v1301 = vadd.f32 %v1156, %v933
    %v1302 = vadd.f32 %v1158, %v940
    %v1303 = vadd.f32 %v1269, %v947
    %v1304 = vadd.f32 %v1271, %v954
    %v1305 = vmin.f32 %v1273, %v1277
    %v1306 = vmin.f32 %v1305, %v1281
    %v1307 = vmin.f32 %v1306, %v1285
    %v1308 = vmin.f32 %v1307, %v1289
    %v1309 = vmin.f32 %v1308, %v1293
    %v1310 = vmin.f32 %v1309, %v1297
    %v1311 = vmin.f32 %v1310, %v1301
    %v1312 = vrot.slane %v1311, 4
    %v1313 = vmin.f32 %v1311, %v1312
    %v1314 = vrot.slane %v1313, 2
    %v1315 = vmin.f32 %v1313, %v1314
    %v1316 = vrot.slane %v1315, 1
    %v1317 = vmin.f32 %v1315, %v1316
    %v1318 = vmin.f32 %v1274, %v1278
    %v1319 = vmin.f32 %v1318, %v1282
    %v1320 = vmin.f32 %v1319, %v1286
    %v1321 = vmin.f32 %v1320, %v1290
    %v1322 = vmin.f32 %v1321, %v1294
    %v1323 = vmin.f32 %v1322, %v1298
    %v1324 = vmin.f32 %v1323, %v1302
    %v1325 = vrot.slane %v1324, 4
    %v1326 = vmin.f32 %v1324, %v1325
    %v1327 = vrot.slane %v1326, 2
    %v1328 = vmin.f32 %v1326, %v1327
    %v1329 = vrot.slane %v1328, 1
    %v1330 = vmin.f32 %v1328, %v1329
    %v1331 = vmin.f32 %v1275, %v1279
    %v1332 = vmin.f32 %v1331, %v1283
    %v1333 = vmin.f32 %v1332, %v1287
    %v1334 = vmin.f32 %v1333, %v1291
    %v1335 = vmin.f32 %v1334, %v1295
    %v1336 = vmin.f32 %v1335, %v1299
    %v1337 = vmin.f32 %v1336, %v1303
    %v1338 = vrot.slane %v1337, 4
    %v1339 = vmin.f32 %v1337, %v1338
    %v1340 = vrot.slane %v1339, 2
    %v1341 = vmin.f32 %v1339, %v1340
    %v1342 = vrot.slane %v1341, 1
    %v1343 = vmin.f32 %v1341, %v1342
    %v1344 = vmin.f32 %v1276, %v1280
    %v1345 = vmin.f32 %v1344, %v1284
    %v1346 = vmin.f32 %v1345, %v1288
    %v1347 = vmin.f32 %v1346, %v1292
    %v1348 = vmin.f32 %v1347, %v1296
    %v1349 = vmin.f32 %v1348, %v1300
    %v1350 = vmin.f32 %v1349, %v1304
    %v1351 = vrot.slane %v1350, 4
    %v1352 = vmin.f32 %v1350, %v1351
    %v1353 = vrot.slane %v1352, 2
    %v1354 = vmin.f32 %v1352, %v1353
    %v1355 = vrot.slane %v1354, 1
    %v1356 = vmin.f32 %v1354, %v1355
    %v1357 = vmin.f32 %v1273, %v1274
    %v1358 = vmin.f32 %v1357, %v1275
    %v1359 = vmin.f32 %v1358, %v1276
    %1360 = vmin.xlane.f32.xlu0 %v1359
    %v1361 = vpop.xlane.xlu0 %1360
    %v1362 = vmin.f32 %v1277, %v1278
    %v1363 = vmin.f32 %v1362, %v1279
    %v1364 = vmin.f32 %v1363, %v1280
    %1365 = vmin.xlane.f32.xlu0 %v1364
    %v1366 = vpop.xlane.xlu0 %1365
    %v1367 = vmin.f32 %v1281, %v1282
    %v1368 = vmin.f32 %v1367, %v1283
    %v1369 = vmin.f32 %v1368, %v1284
    %1370 = vmin.xlane.f32.xlu0 %v1369
    %v1371 = vpop.xlane.xlu0 %1370
    %v1372 = vmin.f32 %v1285, %v1286
    %v1373 = vmin.f32 %v1372, %v1287
    %v1374 = vmin.f32 %v1373, %v1288
    %1375 = vmin.xlane.f32.xlu0 %v1374
    %v1376 = vpop.xlane.xlu0 %1375
    %v1377 = vmin.f32 %v1289, %v1290
    %v1378 = vmin.f32 %v1377, %v1291
    %v1379 = vmin.f32 %v1378, %v1292
    %1380 = vmin.xlane.f32.xlu0 %v1379
    %v1381 = vpop.xlane.xlu0 %1380
    %v1382 = vmin.f32 %v1293, %v1294
    %v1383 = vmin.f32 %v1382, %v1295
    %v1384 = vmin.f32 %v1383, %v1296
    %1385 = vmin.xlane.f32.xlu0 %v1384
    %v1386 = vpop.xlane.xlu0 %1385
    %v1387 = vmin.f32 %v1297, %v1298
    %v1388 = vmin.f32 %v1387, %v1299
    %v1389 = vmin.f32 %v1388, %v1300
    %1390 = vmin.xlane.f32.xlu0 %v1389
    %v1391 = vpop.xlane.xlu0 %1390
    %v1392 = vmin.f32 %v1301, %v1302
    %v1393 = vmin.f32 %v1392, %v1303
    %v1394 = vmin.f32 %v1393, %v1304
    %1395 = vmin.xlane.f32.xlu0 %v1394
    %v1396 = vpop.xlane.xlu0 %1395
    %v1397 = vld [vmem:[%s7] sm:$0xff]
    %v1398 = vld [vmem:[%s7 + $0x8] sm:$0xff]
    %v1399 = vld [vmem:[%s7 + $0x10] sm:$0xff]
    %v1400 = vld [vmem:[%s7 + $0x18] sm:$0xff]
    %v1401 = vld [vmem:[%s7 + $0x20] sm:$0xff]
    %v1402 = vld [vmem:[%s7 + $0x28] sm:$0xff]
    %v1403 = vld [vmem:[%s7 + $0x30] sm:$0xff]
    %v1404 = vld [vmem:[%s7 + $0x38] sm:$0xff]
    %v1405 = vmin.f32 %v1397, %v1361
    %v1406 = vmin.f32 %v1398, %v1366
    %v1407 = vmin.f32 %v1399, %v1371
    %v1408 = vmin.f32 %v1400, %v1376
    %v1409 = vmin.f32 %v1401, %v1381
    %v1410 = vmin.f32 %v1402, %v1386
    %v1411 = vmin.f32 %v1403, %v1391
    %v1412 = vmin.f32 %v1404, %v1396
    %vm1413 = vcmask 7168
    %1414 = vst.msk [vmem:[%s7] sm:$0xff] %vm1413, %v1405
    %1415 = vst.msk [vmem:[%s7 + $0x8] sm:$0xff] %vm1413, %v1406
    %1416 = vst.msk [vmem:[%s7 + $0x10] sm:$0xff] %vm1413, %v1407
    %1417 = vst.msk [vmem:[%s7 + $0x18] sm:$0xff] %vm1413, %v1408
    %1418 = vst.msk [vmem:[%s7 + $0x20] sm:$0xff] %vm1413, %v1409
    %1419 = vst.msk [vmem:[%s7 + $0x28] sm:$0xff] %vm1413, %v1410
    %1420 = vst.msk [vmem:[%s7 + $0x30] sm:$0xff] %vm1413, %v1411
    %1421 = vst.msk [vmem:[%s7 + $0x38] sm:$0xff] %vm1413, %v1412
    %v1422 = vld [vmem:[#allocation2 + $0x40] sm:$0xff]
    %v1423 = vld [vmem:[#allocation2 + $0x48] sm:$0xff]
    %v1424 = vld [vmem:[#allocation2 + $0x50] sm:$0xff]
    %v1425 = vld [vmem:[#allocation2 + $0x58] sm:$0xff]
    %v1426 = vld [vmem:[#allocation2 + $0x60] sm:$0xff]
    %v1427 = vld [vmem:[#allocation2 + $0x68] sm:$0xff]
    %v1428 = vld [vmem:[#allocation2 + $0x70] sm:$0xff]
    %v1429 = vld [vmem:[#allocation2 + $0x78] sm:$0xff]
    %v1430 = vld [vmem:[#allocation3 + $0x40] sm:$0xff]
    %v1431 = vld [vmem:[#allocation3 + $0x48] sm:$0xff]
    %v1432 = vld [vmem:[#allocation3 + $0x50] sm:$0xff]
    %v1433 = vld [vmem:[#allocation3 + $0x58] sm:$0xff]
    %v1434 = vld [vmem:[#allocation3 + $0x60] sm:$0xff]
    %v1435 = vld [vmem:[#allocation3 + $0x68] sm:$0xff]
    %v1436 = vld [vmem:[#allocation3 + $0x70] sm:$0xff]
    %v1437 = vld [vmem:[#allocation3 + $0x78] sm:$0xff]
    %1439 = vset.pattern.permute.xlu0 0
    %1440 = vperm.xlu0 %1439, %v1430
    %v1441 = vpop.permute.xlu0 %1440
    %1444 = vset.pattern.permute.xlu0 0
    %1445 = vperm.xlu0 %1444, %v1431
    %v1446 = vpop.permute.xlu0 %1445
    %1449 = vset.pattern.permute.xlu0 0
    %1450 = vperm.xlu0 %1449, %v1432
    %v1451 = vpop.permute.xlu0 %1450
    %1454 = vset.pattern.permute.xlu0 0
    %1455 = vperm.xlu0 %1454, %v1433
    %v1456 = vpop.permute.xlu0 %1455
    %1459 = vset.pattern.permute.xlu0 0
    %1460 = vperm.xlu0 %1459, %v1434
    %v1461 = vpop.permute.xlu0 %1460
    %1464 = vset.pattern.permute.xlu0 0
    %1465 = vperm.xlu0 %1464, %v1435
    %v1466 = vpop.permute.xlu0 %1465
    %1469 = vset.pattern.permute.xlu0 0
    %1470 = vperm.xlu0 %1469, %v1436
    %v1471 = vpop.permute.xlu0 %1470
    %1474 = vset.pattern.permute.xlu0 0
    %1475 = vperm.xlu0 %1474, %v1437
    %v1476 = vpop.permute.xlu0 %1475
    %v1479 = vsel %vm768, %v1422, 0
    %v1482 = vsel %vm768, %v1423, 0
    %v1485 = vsel %vm768, %v1424, 0
    %v1488 = vsel %vm768, %v1425, 0
    %v1491 = vsel %vm768, %v1426, 0
    %v1494 = vsel %vm768, %v1427, 0
    %v1497 = vsel %vm768, %v1428, 0
    %v1500 = vsel %vm768, %v1429, 0
    %1502 = vmatprep.subr.mxu0 %v1039
    %1503 = vmatpush1.msra.mxu0 %v1036
    %1504 = vmatprep.subr.mxu0 0.0
    %1505 = vmatpush1.msra.mxu0 0.0
    %1506 = vmatprep.subr.mxu0 0.0
    %1507 = vmatpush1.msra.mxu0 0.0
    %1508 = vmatprep.subr.mxu0 0.0
    %1509 = vmatpush1.msra.mxu0 0.0
    %1510 = vmatprep.subr.mxu0 0.0
    %1511 = vmatpush1.msra.mxu0 0.0
    %1512 = vmatprep.subr.mxu0 0.0
    %1513 = vmatpush1.msra.mxu0 0.0
    %1514 = vmatprep.subr.mxu0 0.0
    %1515 = vmatpush1.msra.mxu0 0.0
    %1516 = vmatprep.subr.mxu0 0.0
    %1517 = vmatpush1.msra.mxu0 0.0
    %1518 = vmatprep.subr.mxu0 0.0
    %1519 = vmatpush1.msra.mxu0 0.0
    %1520 = vmatprep.subr.mxu0 0.0
    %1521 = vmatpush1.msra.mxu0 0.0
    %1522 = vmatprep.subr.mxu0 0.0
    %1523 = vmatpush1.msra.mxu0 0.0
    %1524 = vmatprep.subr.mxu0 0.0
    %1525 = vmatpush1.msra.mxu0 0.0
    %1526 = vmatprep.subr.mxu0 0.0
    %1527 = vmatpush1.msra.mxu0 0.0
    %1528 = vmatprep.subr.mxu0 0.0
    %1529 = vmatpush1.msra.mxu0 0.0
    %1530 = vmatprep.subr.mxu0 0.0
    %1531 = vmatpush1.msra.mxu0 0.0
    %1532 = vmatprep.subr.mxu0 0.0
    %1533 = vmatpush1.msra.mxu0 0.0
    %1534 = vmatprep.subr.mxu0 0.0
    %1535 = vmatpush1.msra.mxu0 0.0
    %1536 = vmatprep.subr.mxu0 0.0
    %1537 = vmatpush1.msra.mxu0 0.0
    %1538 = vmatprep.subr.mxu0 0.0
    %1539 = vmatpush1.msra.mxu0 0.0
    %1540 = vmatprep.subr.mxu0 0.0
    %1541 = vmatpush1.msra.mxu0 0.0
    %1542 = vmatprep.subr.mxu0 0.0
    %1543 = vmatpush1.msra.mxu0 0.0
    %1544 = vmatprep.subr.mxu0 0.0
    %1545 = vmatpush1.msra.mxu0 0.0
    %1546 = vmatprep.subr.mxu0 0.0
    %1547 = vmatpush1.msra.mxu0 0.0
    %1548 = vmatprep.subr.mxu0 0.0
    %1549 = vmatpush1.msra.mxu0 0.0
    %1550 = vmatprep.subr.mxu0 0.0
    %1551 = vmatpush1.msra.mxu0 0.0
    %1552 = vmatprep.subr.mxu0 0.0
    %1553 = vmatpush1.msra.mxu0 0.0
    %1554 = vmatprep.subr.mxu0 0.0
    %1555 = vmatpush1.msra.mxu0 0.0
    %1556 = vmatprep.subr.mxu0 0.0
    %1557 = vmatpush1.msra.mxu0 0.0
    %1558 = vmatprep.subr.mxu0 0.0
    %1559 = vmatpush1.msra.mxu0 0.0
    %1560 = vmatprep.subr.mxu0 0.0
    %1561 = vmatpush1.msra.mxu0 0.0
    %1562 = vmatprep.subr.mxu0 0.0
    %1563 = vmatpush1.msra.mxu0 0.0
    %1564 = vmatprep.subr.mxu0 0.0
    %1565 = vmatpush1.msra.mxu0 0.0
    %1566 = vmatprep.mubr.f32.mxu0 0.0
    %1567 = vmatmul.mubr.f32.gmra.mrb[0].mxu0 %v1479
    %v1568 = vpop.f32.mrb[0].mxu0
    %v1569 = vadd.f32 %v1441, %v1568
    %v1570 = vpop.f32.mrb[0].mxu0
    %v1571 = vadd.f32 %v1441, %v1570
    %1572 = vmatprep.mubr.f32.mxu0 0.0
    %1573 = vmatmul.mubr.f32.gmra.mrb[0].mxu0 %v1482
    %v1574 = vpop.f32.mrb[0].mxu0
    %v1575 = vadd.f32 %v1446, %v1574
    %v1576 = vpop.f32.mrb[0].mxu0
    %v1577 = vadd.f32 %v1446, %v1576
    %1578 = vmatprep.mubr.f32.mxu0 0.0
    %1579 = vmatmul.mubr.f32.gmra.mrb[0].mxu0 %v1485
    %v1580 = vpop.f32.mrb[0].mxu0
    %v1581 = vadd.f32 %v1451, %v1580
    %v1582 = vpop.f32.mrb[0].mxu0
    %v1583 = vadd.f32 %v1451, %v1582
    %1584 = vmatprep.mubr.f32.mxu0 0.0
    %1585 = vmatmul.mubr.f32.gmra.mrb[0].mxu0 %v1488
    %v1586 = vpop.f32.mrb[0].mxu0
    %v1587 = vadd.f32 %v1456, %v1586
    %v1588 = vpop.f32.mrb[0].mxu0
    %v1589 = vadd.f32 %v1456, %v1588
    %1590 = vmatprep.mubr.f32.mxu0 0.0
    %1591 = vmatmul.mubr.f32.gmra.mrb[0].mxu0 %v1491
    %v1592 = vpop.f32.mrb[0].mxu0
    %v1593 = vadd.f32 %v1461, %v1592
    %v1594 = vpop.f32.mrb[0].mxu0
    %v1595 = vadd.f32 %v1461, %v1594
    %1596 = vmatprep.mubr.f32.mxu0 0.0
    %1597 = vmatmul.mubr.f32.gmra.mrb[0].mxu0 %v1494
    %v1598 = vpop.f32.mrb[0].mxu0
    %v1599 = vadd.f32 %v1466, %v1598
    %v1600 = vpop.f32.mrb[0].mxu0
    %v1601 = vadd.f32 %v1466, %v1600
    %1602 = vmatprep.mubr.f32.mxu0 0.0
    %1603 = vmatmul.mubr.f32.gmra.mrb[0].mxu0 %v1497
    %v1604 = vpop.f32.mrb[0].mxu0
    %v1605 = vadd.f32 %v1471, %v1604
    %v1606 = vpop.f32.mrb[0].mxu0
    %v1607 = vadd.f32 %v1471, %v1606
    %1608 = vmatprep.mubr.f32.mxu0 0.0
    %1609 = vmatmul.mubr.f32.gmra.mrb[0].mxu0 %v1500
    %v1610 = vpop.f32.mrb[0].mxu0
    %v1611 = vadd.f32 %v1476, %v1610
    %v1612 = vpop.f32.mrb[0].mxu0
    %v1613 = vadd.f32 %v1476, %v1612
    %1614 = vdwg.mxu0
    %1615 = vmatprep.subr.mxu0 %v1045
    %1616 = vmatpush1.msra.mxu0 %v1042
    %1617 = vmatprep.subr.mxu0 0.0
    %1618 = vmatpush1.msra.mxu0 0.0
    %1619 = vmatprep.subr.mxu0 0.0
    %1620 = vmatpush1.msra.mxu0 0.0
    %1621 = vmatprep.subr.mxu0 0.0
    %1622 = vmatpush1.msra.mxu0 0.0
    %1623 = vmatprep.subr.mxu0 0.0
    %1624 = vmatpush1.msra.mxu0 0.0
    %1625 = vmatprep.subr.mxu0 0.0
    %1626 = vmatpush1.msra.mxu0 0.0
    %1627 = vmatprep.subr.mxu0 0.0
    %1628 = vmatpush1.msra.mxu0 0.0
    %1629 = vmatprep.subr.mxu0 0.0
    %1630 = vmatpush1.msra.mxu0 0.0
    %1631 = vmatprep.subr.mxu0 0.0
    %1632 = vmatpush1.msra.mxu0 0.0
    %1633 = vmatprep.subr.mxu0 0.0
    %1634 = vmatpush1.msra.mxu0 0.0
    %1635 = vmatprep.subr.mxu0 0.0
    %1636 = vmatpush1.msra.mxu0 0.0
    %1637 = vmatprep.subr.mxu0 0.0
    %1638 = vmatpush1.msra.mxu0 0.0
    %1639 = vmatprep.subr.mxu0 0.0
    %1640 = vmatpush1.msra.mxu0 0.0
    %1641 = vmatprep.subr.mxu0 0.0
    %1642 = vmatpush1.msra.mxu0 0.0
    %1643 = vmatprep.subr.mxu0 0.0
    %1644 = vmatpush1.msra.mxu0 0.0
    %1645 = vmatprep.subr.mxu0 0.0
    %1646 = vmatpush1.msra.mxu0 0.0
    %1647 = vmatprep.subr.mxu0 0.0
    %1648 = vmatpush1.msra.mxu0 0.0
    %1649 = vmatprep.subr.mxu0 0.0
    %1650 = vmatpush1.msra.mxu0 0.0
    %1651 = vmatprep.subr.mxu0 0.0
    %1652 = vmatpush1.msra.mxu0 0.0
    %1653 = vmatprep.subr.mxu0 0.0
    %1654 = vmatpush1.msra.mxu0 0.0
    %1655 = vmatprep.subr.mxu0 0.0
    %1656 = vmatpush1.msra.mxu0 0.0
    %1657 = vmatprep.subr.mxu0 0.0
    %1658 = vmatpush1.msra.mxu0 0.0
    %1659 = vmatprep.subr.mxu0 0.0
    %1660 = vmatpush1.msra.mxu0 0.0
    %1661 = vmatprep.subr.mxu0 0.0
    %1662 = vmatpush1.msra.mxu0 0.0
    %1663 = vmatprep.subr.mxu0 0.0
    %1664 = vmatpush1.msra.mxu0 0.0
    %1665 = vmatprep.subr.mxu0 0.0
    %1666 = vmatpush1.msra.mxu0 0.0
    %1667 = vmatprep.subr.mxu0 0.0
    %1668 = vmatpush1.msra.mxu0 0.0
    %1669 = vmatprep.subr.mxu0 0.0
    %1670 = vmatpush1.msra.mxu0 0.0
    %1671 = vmatprep.subr.mxu0 0.0
    %1672 = vmatpush1.msra.mxu0 0.0
    %1673 = vmatprep.subr.mxu0 0.0
    %1674 = vmatpush1.msra.mxu0 0.0
    %1675 = vmatprep.subr.mxu0 0.0
    %1676 = vmatpush1.msra.mxu0 0.0
    %1677 = vmatprep.subr.mxu0 0.0
    %1678 = vmatpush1.msra.mxu0 0.0
    %1679 = vmatprep.mubr.f32.mxu0 0.0
    %1680 = vmatmul.mubr.f32.gmra.mrb[0].mxu0 %v1479
    %v1681 = vpop.f32.mrb[0].mxu0
    %v1682 = vadd.f32 %v1441, %v1681
    %v1683 = vpop.f32.mrb[0].mxu0
    %v1684 = vadd.f32 %v1441, %v1683
    %1685 = vmatprep.mubr.f32.mxu0 0.0
    %1686 = vmatmul.mubr.f32.gmra.mrb[0].mxu0 %v1482
    %v1687 = vpop.f32.mrb[0].mxu0
    %v1688 = vadd.f32 %v1446, %v1687
    %v1689 = vpop.f32.mrb[0].mxu0
    %v1690 = vadd.f32 %v1446, %v1689
    %1691 = vmatprep.mubr.f32.mxu0 0.0
    %1692 = vmatmul.mubr.f32.gmra.mrb[0].mxu0 %v1485
    %v1693 = vpop.f32.mrb[0].mxu0
    %v1694 = vadd.f32 %v1451, %v1693
    %v1695 = vpop.f32.mrb[0].mxu0
    %v1696 = vadd.f32 %v1451, %v1695
    %1697 = vmatprep.mubr.f32.mxu0 0.0
    %1698 = vmatmul.mubr.f32.gmra.mrb[0].mxu0 %v1488
    %v1699 = vpop.f32.mrb[0].mxu0
    %v1700 = vadd.f32 %v1456, %v1699
    %v1701 = vpop.f32.mrb[0].mxu0
    %v1702 = vadd.f32 %v1456, %v1701
    %1703 = vmatprep.mubr.f32.mxu0 0.0
    %1704 = vmatmul.mubr.f32.gmra.mrb[0].mxu0 %v1491
    %v1705 = vpop.f32.mrb[0].mxu0
    %v1706 = vadd.f32 %v1461, %v1705
    %v1707 = vpop.f32.mrb[0].mxu0
    %v1708 = vadd.f32 %v1461, %v1707
    %1709 = vmatprep.mubr.f32.mxu0 0.0
    %1710 = vmatmul.mubr.f32.gmra.mrb[0].mxu0 %v1494
    %v1711 = vpop.f32.mrb[0].mxu0
    %v1712 = vadd.f32 %v1466, %v1711
    %v1713 = vpop.f32.mrb[0].mxu0
    %v1714 = vadd.f32 %v1466, %v1713
    %1715 = vmatprep.mubr.f32.mxu0 0.0
    %1716 = vmatmul.mubr.f32.gmra.mrb[0].mxu0 %v1497
    %v1717 = vpop.f32.mrb[0].mxu0
    %v1718 = vadd.f32 %v1471, %v1717
    %v1719 = vpop.f32.mrb[0].mxu0
    %v1720 = vadd.f32 %v1471, %v1719
    %1721 = vmatprep.mubr.f32.mxu0 0.0
    %1722 = vmatmul.mubr.f32.gmra.mrb[0].mxu0 %v1500
    %v1723 = vpop.f32.mrb[0].mxu0
    %v1724 = vadd.f32 %v1476, %v1723
    %v1725 = vpop.f32.mrb[0].mxu0
    %v1726 = vadd.f32 %v1476, %v1725
    %1727 = vdwg.mxu0
    %v1728 = vadd.f32 %v1569, %v933
    %v1729 = vadd.f32 %v1571, %v940
    %v1730 = vadd.f32 %v1682, %v947
    %v1731 = vadd.f32 %v1684, %v954
    %v1732 = vadd.f32 %v1575, %v933
    %v1733 = vadd.f32 %v1577, %v940
    %v1734 = vadd.f32 %v1688, %v947
    %v1735 = vadd.f32 %v1690, %v954
    %v1736 = vadd.f32 %v1581, %v933
    %v1737 = vadd.f32 %v1583, %v940
    %v1738 = vadd.f32 %v1694, %v947
    %v1739 = vadd.f32 %v1696, %v954
    %v1740 = vadd.f32 %v1587, %v933
    %v1741 = vadd.f32 %v1589, %v940
    %v1742 = vadd.f32 %v1700, %v947
    %v1743 = vadd.f32 %v1702, %v954
    %v1744 = vadd.f32 %v1593, %v933
    %v1745 = vadd.f32 %v1595, %v940
    %v1746 = vadd.f32 %v1706, %v947
    %v1747 = vadd.f32 %v1708, %v954
    %v1748 = vadd.f32 %v1599, %v933
    %v1749 = vadd.f32 %v1601, %v940
    %v1750 = vadd.f32 %v1712, %v947
    %v1751 = vadd.f32 %v1714, %v954
    %v1752 = vadd.f32 %v1605, %v933
    %v1753 = vadd.f32 %v1607, %v940
    %v1754 = vadd.f32 %v1718, %v947
    %v1755 = vadd.f32 %v1720, %v954
    %v1756 = vadd.f32 %v1611, %v933
    %v1757 = vadd.f32 %v1613, %v940
    %v1758 = vadd.f32 %v1724, %v947
    %v1759 = vadd.f32 %v1726, %v954
    %v1760 = vmin.f32 %v1728, %v1732
    %v1761 = vmin.f32 %v1760, %v1736
    %v1762 = vmin.f32 %v1761, %v1740
    %v1763 = vmin.f32 %v1762, %v1744
    %v1764 = vmin.f32 %v1763, %v1748
    %v1765 = vmin.f32 %v1764, %v1752
    %v1766 = vmin.f32 %v1765, %v1756
    %v1767 = vrot.slane %v1766, 4
    %v1768 = vmin.f32 %v1766, %v1767
    %v1769 = vrot.slane %v1768, 2
    %v1770 = vmin.f32 %v1768, %v1769
    %v1771 = vrot.slane %v1770, 1
    %v1772 = vmin.f32 %v1770, %v1771
    %v1773 = vmin.f32 %v1729, %v1733
    %v1774 = vmin.f32 %v1773, %v1737
    %v1775 = vmin.f32 %v1774, %v1741
    %v1776 = vmin.f32 %v1775, %v1745
    %v1777 = vmin.f32 %v1776, %v1749
    %v1778 = vmin.f32 %v1777, %v1753
    %v1779 = vmin.f32 %v1778, %v1757
    %v1780 = vrot.slane %v1779, 4
    %v1781 = vmin.f32 %v1779, %v1780
    %v1782 = vrot.slane %v1781, 2
    %v1783 = vmin.f32 %v1781, %v1782
    %v1784 = vrot.slane %v1783, 1
    %v1785 = vmin.f32 %v1783, %v1784
    %v1786 = vmin.f32 %v1730, %v1734
    %v1787 = vmin.f32 %v1786, %v1738
    %v1788 = vmin.f32 %v1787, %v1742
    %v1789 = vmin.f32 %v1788, %v1746
    %v1790 = vmin.f32 %v1789, %v1750
    %v1791 = vmin.f32 %v1790, %v1754
    %v1792 = vmin.f32 %v1791, %v1758
    %v1793 = vrot.slane %v1792, 4
    %v1794 = vmin.f32 %v1792, %v1793
    %v1795 = vrot.slane %v1794, 2
    %v1796 = vmin.f32 %v1794, %v1795
    %v1797 = vrot.slane %v1796, 1
    %v1798 = vmin.f32 %v1796, %v1797
    %v1799 = vmin.f32 %v1731, %v1735
    %v1800 = vmin.f32 %v1799, %v1739
    %v1801 = vmin.f32 %v1800, %v1743
    %v1802 = vmin.f32 %v1801, %v1747
    %v1803 = vmin.f32 %v1802, %v1751
    %v1804 = vmin.f32 %v1803, %v1755
    %v1805 = vmin.f32 %v1804, %v1759
    %v1806 = vrot.slane %v1805, 4
    %v1807 = vmin.f32 %v1805, %v1806
    %v1808 = vrot.slane %v1807, 2
    %v1809 = vmin.f32 %v1807, %v1808
    %v1810 = vrot.slane %v1809, 1
    %v1811 = vmin.f32 %v1809, %v1810
    %v1812 = vmin.f32 %v1317, %v1772
    %v1813 = vmin.f32 %v1330, %v1785
    %v1814 = vmin.f32 %v1343, %v1798
    %v1815 = vmin.f32 %v1356, %v1811
    %v1816 = vmin.f32 %v1728, %v1729
    %v1817 = vmin.f32 %v1816, %v1730
    %v1818 = vmin.f32 %v1817, %v1731
    %1819 = vmin.xlane.f32.xlu0 %v1818
    %v1820 = vpop.xlane.xlu0 %1819
    %v1821 = vmin.f32 %v1732, %v1733
    %v1822 = vmin.f32 %v1821, %v1734
    %v1823 = vmin.f32 %v1822, %v1735
    %1824 = vmin.xlane.f32.xlu0 %v1823
    %v1825 = vpop.xlane.xlu0 %1824
    %v1826 = vmin.f32 %v1736, %v1737
    %v1827 = vmin.f32 %v1826, %v1738
    %v1828 = vmin.f32 %v1827, %v1739
    %1829 = vmin.xlane.f32.xlu0 %v1828
    %v1830 = vpop.xlane.xlu0 %1829
    %v1831 = vmin.f32 %v1740, %v1741
    %v1832 = vmin.f32 %v1831, %v1742
    %v1833 = vmin.f32 %v1832, %v1743
    %1834 = vmin.xlane.f32.xlu0 %v1833
    %v1835 = vpop.xlane.xlu0 %1834
    %v1836 = vmin.f32 %v1744, %v1745
    %v1837 = vmin.f32 %v1836, %v1746
    %v1838 = vmin.f32 %v1837, %v1747
    %1839 = vmin.xlane.f32.xlu0 %v1838
    %v1840 = vpop.xlane.xlu0 %1839
    %v1841 = vmin.f32 %v1748, %v1749
    %v1842 = vmin.f32 %v1841, %v1750
    %v1843 = vmin.f32 %v1842, %v1751
    %1844 = vmin.xlane.f32.xlu0 %v1843
    %v1845 = vpop.xlane.xlu0 %1844
    %v1846 = vmin.f32 %v1752, %v1753
    %v1847 = vmin.f32 %v1846, %v1754
    %v1848 = vmin.f32 %v1847, %v1755
    %1849 = vmin.xlane.f32.xlu0 %v1848
    %v1850 = vpop.xlane.xlu0 %1849
    %v1851 = vmin.f32 %v1756, %v1757
    %v1852 = vmin.f32 %v1851, %v1758
    %v1853 = vmin.f32 %v1852, %v1759
    %1854 = vmin.xlane.f32.xlu0 %v1853
    %v1855 = vpop.xlane.xlu0 %1854
    %v1856 = vld [vmem:[%s7 + $0x40] sm:$0xff]
    %v1857 = vld [vmem:[%s7 + $0x48] sm:$0xff]
    %v1858 = vld [vmem:[%s7 + $0x50] sm:$0xff]
    %v1859 = vld [vmem:[%s7 + $0x58] sm:$0xff]
    %v1860 = vld [vmem:[%s7 + $0x60] sm:$0xff]
    %v1861 = vld [vmem:[%s7 + $0x68] sm:$0xff]
    %v1862 = vld [vmem:[%s7 + $0x70] sm:$0xff]
    %v1863 = vld [vmem:[%s7 + $0x78] sm:$0xff]
    %v1864 = vmin.f32 %v1856, %v1820
    %v1865 = vmin.f32 %v1857, %v1825
    %v1866 = vmin.f32 %v1858, %v1830
    %v1867 = vmin.f32 %v1859, %v1835
    %v1868 = vmin.f32 %v1860, %v1840
    %v1869 = vmin.f32 %v1861, %v1845
    %v1870 = vmin.f32 %v1862, %v1850
    %v1871 = vmin.f32 %v1863, %v1855
    %1872 = vst.msk [vmem:[%s7 + $0x40] sm:$0xff] %vm1413, %v1864
    %1873 = vst.msk [vmem:[%s7 + $0x48] sm:$0xff] %vm1413, %v1865
    %1874 = vst.msk [vmem:[%s7 + $0x50] sm:$0xff] %vm1413, %v1866
    %1875 = vst.msk [vmem:[%s7 + $0x58] sm:$0xff] %vm1413, %v1867
    %1876 = vst.msk [vmem:[%s7 + $0x60] sm:$0xff] %vm1413, %v1868
    %1877 = vst.msk [vmem:[%s7 + $0x68] sm:$0xff] %vm1413, %v1869
    %1878 = vst.msk [vmem:[%s7 + $0x70] sm:$0xff] %vm1413, %v1870
    %1879 = vst.msk [vmem:[%s7 + $0x78] sm:$0xff] %vm1413, %v1871
    %v1880 = vld [vmem:[#allocation2 + $0x80] sm:$0xff]
    %v1881 = vld [vmem:[#allocation2 + $0x88] sm:$0xff]
    %v1882 = vld [vmem:[#allocation2 + $0x90] sm:$0xff]
    %v1883 = vld [vmem:[#allocation2 + $0x98] sm:$0xff]
    %v1884 = vld [vmem:[#allocation2 + $0xa0] sm:$0xff]
    %v1885 = vld [vmem:[#allocation2 + $0xa8] sm:$0xff]
    %v1886 = vld [vmem:[#allocation2 + $0xb0] sm:$0xff]
    %v1887 = vld [vmem:[#allocation2 + $0xb8] sm:$0xff]
    %v1888 = vld [vmem:[#allocation3 + $0x80] sm:$0xff]
    %v1889 = vld [vmem:[#allocation3 + $0x88] sm:$0xff]
    %v1890 = vld [vmem:[#allocation3 + $0x90] sm:$0xff]
    %v1891 = vld [vmem:[#allocation3 + $0x98] sm:$0xff]
    %v1892 = vld [vmem:[#allocation3 + $0xa0] sm:$0xff]
    %v1893 = vld [vmem:[#allocation3 + $0xa8] sm:$0xff]
    %v1894 = vld [vmem:[#allocation3 + $0xb0] sm:$0xff]
    %v1895 = vld [vmem:[#allocation3 + $0xb8] sm:$0xff]
    %1897 = vset.pattern.permute.xlu0 0
    %1898 = vperm.xlu0 %1897, %v1888
    %v1899 = vpop.permute.xlu0 %1898
    %1902 = vset.pattern.permute.xlu0 0
    %1903 = vperm.xlu0 %1902, %v1889
    %v1904 = vpop.permute.xlu0 %1903
    %1907 = vset.pattern.permute.xlu0 0
    %1908 = vperm.xlu0 %1907, %v1890
    %v1909 = vpop.permute.xlu0 %1908
    %1912 = vset.pattern.permute.xlu0 0
    %1913 = vperm.xlu0 %1912, %v1891
    %v1914 = vpop.permute.xlu0 %1913
    %1917 = vset.pattern.permute.xlu0 0
    %1918 = vperm.xlu0 %1917, %v1892
    %v1919 = vpop.permute.xlu0 %1918
    %1922 = vset.pattern.permute.xlu0 0
    %1923 = vperm.xlu0 %1922, %v1893
    %v1924 = vpop.permute.xlu0 %1923
    %1927 = vset.pattern.permute.xlu0 0
    %1928 = vperm.xlu0 %1927, %v1894
    %v1929 = vpop.permute.xlu0 %1928
    %1932 = vset.pattern.permute.xlu0 0
    %1933 = vperm.xlu0 %1932, %v1895
    %v1934 = vpop.permute.xlu0 %1933
    %v1937 = vsel %vm768, %v1880, 0
    %v1940 = vsel %vm768, %v1881, 0
    %v1943 = vsel %vm768, %v1882, 0
    %v1946 = vsel %vm768, %v1883, 0
    %v1949 = vsel %vm768, %v1884, 0
    %v1952 = vsel %vm768, %v1885, 0
    %v1955 = vsel %vm768, %v1886, 0
    %v1958 = vsel %vm768, %v1887, 0
    %1960 = vmatprep.subr.mxu0 %v1039
    %1961 = vmatpush1.msra.mxu0 %v1036
    %1962 = vmatprep.subr.mxu0 0.0
    %1963 = vmatpush1.msra.mxu0 0.0
    %1964 = vmatprep.subr.mxu0 0.0
    %1965 = vmatpush1.msra.mxu0 0.0
    %1966 = vmatprep.subr.mxu0 0.0
    %1967 = vmatpush1.msra.mxu0 0.0
    %1968 = vmatprep.subr.mxu0 0.0
    %1969 = vmatpush1.msra.mxu0 0.0
    %1970 = vmatprep.subr.mxu0 0.0
    %1971 = vmatpush1.msra.mxu0 0.0
    %1972 = vmatprep.subr.mxu0 0.0
    %1973 = vmatpush1.msra.mxu0 0.0
    %1974 = vmatprep.subr.mxu0 0.0
    %1975 = vmatpush1.msra.mxu0 0.0
    %1976 = vmatprep.subr.mxu0 0.0
    %1977 = vmatpush1.msra.mxu0 0.0
    %1978 = vmatprep.subr.mxu0 0.0
    %1979 = vmatpush1.msra.mxu0 0.0
    %1980 = vmatprep.subr.mxu0 0.0
    %1981 = vmatpush1.msra.mxu0 0.0
    %1982 = vmatprep.subr.mxu0 0.0
    %1983 = vmatpush1.msra.mxu0 0.0
    %1984 = vmatprep.subr.mxu0 0.0
    %1985 = vmatpush1.msra.mxu0 0.0
    %1986 = vmatprep.subr.mxu0 0.0
    %1987 = vmatpush1.msra.mxu0 0.0
    %1988 = vmatprep.subr.mxu0 0.0
    %1989 = vmatpush1.msra.mxu0 0.0
    %1990 = vmatprep.subr.mxu0 0.0
    %1991 = vmatpush1.msra.mxu0 0.0
    %1992 = vmatprep.subr.mxu0 0.0
    %1993 = vmatpush1.msra.mxu0 0.0
    %1994 = vmatprep.subr.mxu0 0.0
    %1995 = vmatpush1.msra.mxu0 0.0
    %1996 = vmatprep.subr.mxu0 0.0
    %1997 = vmatpush1.msra.mxu0 0.0
    %1998 = vmatprep.subr.mxu0 0.0
    %1999 = vmatpush1.msra.mxu0 0.0
    %2000 = vmatprep.subr.mxu0 0.0
    %2001 = vmatpush1.msra.mxu0 0.0
    %2002 = vmatprep.subr.mxu0 0.0
    %2003 = vmatpush1.msra.mxu0 0.0
    %2004 = vmatprep.subr.mxu0 0.0
    %2005 = vmatpush1.msra.mxu0 0.0
    %2006 = vmatprep.subr.mxu0 0.0
    %2007 = vmatpush1.msra.mxu0 0.0
    %2008 = vmatprep.subr.mxu0 0.0
    %2009 = vmatpush1.msra.mxu0 0.0
    %2010 = vmatprep.subr.mxu0 0.0
    %2011 = vmatpush1.msra.mxu0 0.0
    %2012 = vmatprep.subr.mxu0 0.0
    %2013 = vmatpush1.msra.mxu0 0.0
    %2014 = vmatprep.subr.mxu0 0.0
    %2015 = vmatpush1.msra.mxu0 0.0
    %2016 = vmatprep.subr.mxu0 0.0
    %2017 = vmatpush1.msra.mxu0 0.0
    %2018 = vmatprep.subr.mxu0 0.0
    %2019 = vmatpush1.msra.mxu0 0.0
    %2020 = vmatprep.subr.mxu0 0.0
    %2021 = vmatpush1.msra.mxu0 0.0
    %2022 = vmatprep.subr.mxu0 0.0
    %2023 = vmatpush1.msra.mxu0 0.0
    %2024 = vmatprep.mubr.f32.mxu0 0.0
    %2025 = vmatmul.mubr.f32.gmra.mrb[0].mxu0 %v1937
    %v2026 = vpop.f32.mrb[0].mxu0
    %v2027 = vadd.f32 %v1899, %v2026
    %v2028 = vpop.f32.mrb[0].mxu0
    %v2029 = vadd.f32 %v1899, %v2028
    %2030 = vmatprep.mubr.f32.mxu0 0.0
    %2031 = vmatmul.mubr.f32.gmra.mrb[0].mxu0 %v1940
    %v2032 = vpop.f32.mrb[0].mxu0
    %v2033 = vadd.f32 %v1904, %v2032
    %v2034 = vpop.f32.mrb[0].mxu0
    %v2035 = vadd.f32 %v1904, %v2034
    %2036 = vmatprep.mubr.f32.mxu0 0.0
    %2037 = vmatmul.mubr.f32.gmra.mrb[0].mxu0 %v1943
    %v2038 = vpop.f32.mrb[0].mxu0
    %v2039 = vadd.f32 %v1909, %v2038
    %v2040 = vpop.f32.mrb[0].mxu0
    %v2041 = vadd.f32 %v1909, %v2040
    %2042 = vmatprep.mubr.f32.mxu0 0.0
    %2043 = vmatmul.mubr.f32.gmra.mrb[0].mxu0 %v1946
    %v2044 = vpop.f32.mrb[0].mxu0
    %v2045 = vadd.f32 %v1914, %v2044
    %v2046 = vpop.f32.mrb[0].mxu0
    %v2047 = vadd.f32 %v1914, %v2046
    %2048 = vmatprep.mubr.f32.mxu0 0.0
    %2049 = vmatmul.mubr.f32.gmra.mrb[0].mxu0 %v1949
    %v2050 = vpop.f32.mrb[0].mxu0
    %v2051 = vadd.f32 %v1919, %v2050
    %v2052 = vpop.f32.mrb[0].mxu0
    %v2053 = vadd.f32 %v1919, %v2052
    %2054 = vmatprep.mubr.f32.mxu0 0.0
    %2055 = vmatmul.mubr.f32.gmra.mrb[0].mxu0 %v1952
    %v2056 = vpop.f32.mrb[0].mxu0
    %v2057 = vadd.f32 %v1924, %v2056
    %v2058 = vpop.f32.mrb[0].mxu0
    %v2059 = vadd.f32 %v1924, %v2058
    %2060 = vmatprep.mubr.f32.mxu0 0.0
    %2061 = vmatmul.mubr.f32.gmra.mrb[0].mxu0 %v1955
    %v2062 = vpop.f32.mrb[0].mxu0
    %v2063 = vadd.f32 %v1929, %v2062
    %v2064 = vpop.f32.mrb[0].mxu0
    %v2065 = vadd.f32 %v1929, %v2064
    %2066 = vmatprep.mubr.f32.mxu0 0.0
    %2067 = vmatmul.mubr.f32.gmra.mrb[0].mxu0 %v1958
    %v2068 = vpop.f32.mrb[0].mxu0
    %v2069 = vadd.f32 %v1934, %v2068
    %v2070 = vpop.f32.mrb[0].mxu0
    %v2071 = vadd.f32 %v1934, %v2070
    %2072 = vdwg.mxu0
    %2073 = vmatprep.subr.mxu0 %v1045
    %2074 = vmatpush1.msra.mxu0 %v1042
    %2075 = vmatprep.subr.mxu0 0.0
    %2076 = vmatpush1.msra.mxu0 0.0
    %2077 = vmatprep.subr.mxu0 0.0
    %2078 = vmatpush1.msra.mxu0 0.0
    %2079 = vmatprep.subr.mxu0 0.0
    %2080 = vmatpush1.msra.mxu0 0.0
    %2081 = vmatprep.subr.mxu0 0.0
    %2082 = vmatpush1.msra.mxu0 0.0
    %2083 = vmatprep.subr.mxu0 0.0
    %2084 = vmatpush1.msra.mxu0 0.0
    %2085 = vmatprep.subr.mxu0 0.0
    %2086 = vmatpush1.msra.mxu0 0.0
    %2087 = vmatprep.subr.mxu0 0.0
    %2088 = vmatpush1.msra.mxu0 0.0
    %2089 = vmatprep.subr.mxu0 0.0
    %2090 = vmatpush1.msra.mxu0 0.0
    %2091 = vmatprep.subr.mxu0 0.0
    %2092 = vmatpush1.msra.mxu0 0.0
    %2093 = vmatprep.subr.mxu0 0.0
    %2094 = vmatpush1.msra.mxu0 0.0
    %2095 = vmatprep.subr.mxu0 0.0
    %2096 = vmatpush1.msra.mxu0 0.0
    %2097 = vmatprep.subr.mxu0 0.0
    %2098 = vmatpush1.msra.mxu0 0.0
    %2099 = vmatprep.subr.mxu0 0.0
    %2100 = vmatpush1.msra.mxu0 0.0
    %2101 = vmatprep.subr.mxu0 0.0
    %2102 = vmatpush1.msra.mxu0 0.0
    %2103 = vmatprep.subr.mxu0 0.0
    %2104 = vmatpush1.msra.mxu0 0.0
    %2105 = vmatprep.subr.mxu0 0.0
    %2106 = vmatpush1.msra.mxu0 0.0
    %2107 = vmatprep.subr.mxu0 0.0
    %2108 = vmatpush1.msra.mxu0 0.0
    %2109 = vmatprep.subr.mxu0 0.0
    %2110 = vmatpush1.msra.mxu0 0.0
    %2111 = vmatprep.subr.mxu0 0.0
    %2112 = vmatpush1.msra.mxu0 0.0
    %2113 = vmatprep.subr.mxu0 0.0
    %2114 = vmatpush1.msra.mxu0 0.0
    %2115 = vmatprep.subr.mxu0 0.0
    %2116 = vmatpush1.msra.mxu0 0.0
    %2117 = vmatprep.subr.mxu0 0.0
    %2118 = vmatpush1.msra.mxu0 0.0
    %2119 = vmatprep.subr.mxu0 0.0
    %2120 = vmatpush1.msra.mxu0 0.0
    %2121 = vmatprep.subr.mxu0 0.0
    %2122 = vmatpush1.msra.mxu0 0.0
    %2123 = vmatprep.subr.mxu0 0.0
    %2124 = vmatpush1.msra.mxu0 0.0
    %2125 = vmatprep.subr.mxu0 0.0
    %2126 = vmatpush1.msra.mxu0 0.0
    %2127 = vmatprep.subr.mxu0 0.0
    %2128 = vmatpush1.msra.mxu0 0.0
    %2129 = vmatprep.subr.mxu0 0.0
    %2130 = vmatpush1.msra.mxu0 0.0
    %2131 = vmatprep.subr.mxu0 0.0
    %2132 = vmatpush1.msra.mxu0 0.0
    %2133 = vmatprep.subr.mxu0 0.0
    %2134 = vmatpush1.msra.mxu0 0.0
    %2135 = vmatprep.subr.mxu0 0.0
    %2136 = vmatpush1.msra.mxu0 0.0
    %2137 = vmatprep.mubr.f32.mxu0 0.0
    %2138 = vmatmul.mubr.f32.gmra.mrb[0].mxu0 %v1937
    %v2139 = vpop.f32.mrb[0].mxu0
    %v2140 = vadd.f32 %v1899, %v2139
    %v2141 = vpop.f32.mrb[0].mxu0
    %v2142 = vadd.f32 %v1899, %v2141
    %2143 = vmatprep.mubr.f32.mxu0 0.0
    %2144 = vmatmul.mubr.f32.gmra.mrb[0].mxu0 %v1940
    %v2145 = vpop.f32.mrb[0].mxu0
    %v2146 = vadd.f32 %v1904, %v2145
    %v2147 = vpop.f32.mrb[0].mxu0
    %v2148 = vadd.f32 %v1904, %v2147
    %2149 = vmatprep.mubr.f32.mxu0 0.0
    %2150 = vmatmul.mubr.f32.gmra.mrb[0].mxu0 %v1943
    %v2151 = vpop.f32.mrb[0].mxu0
    %v2152 = vadd.f32 %v1909, %v2151
    %v2153 = vpop.f32.mrb[0].mxu0
    %v2154 = vadd.f32 %v1909, %v2153
    %2155 = vmatprep.mubr.f32.mxu0 0.0
    %2156 = vmatmul.mubr.f32.gmra.mrb[0].mxu0 %v1946
    %v2157 = vpop.f32.mrb[0].mxu0
    %v2158 = vadd.f32 %v1914, %v2157
    %v2159 = vpop.f32.mrb[0].mxu0
    %v2160 = vadd.f32 %v1914, %v2159
    %2161 = vmatprep.mubr.f32.mxu0 0.0
    %2162 = vmatmul.mubr.f32.gmra.mrb[0].mxu0 %v1949
    %v2163 = vpop.f32.mrb[0].mxu0
    %v2164 = vadd.f32 %v1919, %v2163
    %v2165 = vpop.f32.mrb[0].mxu0
    %v2166 = vadd.f32 %v1919, %v2165
    %2167 = vmatprep.mubr.f32.mxu0 0.0
    %2168 = vmatmul.mubr.f32.gmra.mrb[0].mxu0 %v1952
    %v2169 = vpop.f32.mrb[0].mxu0
    %v2170 = vadd.f32 %v1924, %v2169
    %v2171 = vpop.f32.mrb[0].mxu0
    %v2172 = vadd.f32 %v1924, %v2171
    %2173 = vmatprep.mubr.f32.mxu0 0.0
    %2174 = vmatmul.mubr.f32.gmra.mrb[0].mxu0 %v1955
    %v2175 = vpop.f32.mrb[0].mxu0
    %v2176 = vadd.f32 %v1929, %v2175
    %v2177 = vpop.f32.mrb[0].mxu0
    %v2178 = vadd.f32 %v1929, %v2177
    %2179 = vmatprep.mubr.f32.mxu0 0.0
    %2180 = vmatmul.mubr.f32.gmra.mrb[0].mxu0 %v1958
    %v2181 = vpop.f32.mrb[0].mxu0
    %v2182 = vadd.f32 %v1934, %v2181
    %v2183 = vpop.f32.mrb[0].mxu0
    %v2184 = vadd.f32 %v1934, %v2183
    %2185 = vdwg.mxu0
    %v2186 = vadd.f32 %v2027, %v933
    %v2187 = vadd.f32 %v2029, %v940
    %v2188 = vadd.f32 %v2140, %v947
    %v2189 = vadd.f32 %v2142, %v954
    %v2190 = vadd.f32 %v2033, %v933
    %v2191 = vadd.f32 %v2035, %v940
    %v2192 = vadd.f32 %v2146, %v947
    %v2193 = vadd.f32 %v2148, %v954
    %v2194 = vadd.f32 %v2039, %v933
    %v2195 = vadd.f32 %v2041, %v940
    %v2196 = vadd.f32 %v2152, %v947
    %v2197 = vadd.f32 %v2154, %v954
    %v2198 = vadd.f32 %v2045, %v933
    %v2199 = vadd.f32 %v2047, %v940
    %v2200 = vadd.f32 %v2158, %v947
    %v2201 = vadd.f32 %v2160, %v954
    %v2202 = vadd.f32 %v2051, %v933
    %v2203 = vadd.f32 %v2053, %v940
    %v2204 = vadd.f32 %v2164, %v947
    %v2205 = vadd.f32 %v2166, %v954
    %v2206 = vadd.f32 %v2057, %v933
    %v2207 = vadd.f32 %v2059, %v940
    %v2208 = vadd.f32 %v2170, %v947
    %v2209 = vadd.f32 %v2172, %v954
    %v2210 = vadd.f32 %v2063, %v933
    %v2211 = vadd.f32 %v2065, %v940
    %v2212 = vadd.f32 %v2176, %v947
    %v2213 = vadd.f32 %v2178, %v954
    %v2214 = vadd.f32 %v2069, %v933
    %v2215 = vadd.f32 %v2071, %v940
    %v2216 = vadd.f32 %v2182, %v947
    %v2217 = vadd.f32 %v2184, %v954
    %v2218 = vmin.f32 %v2186, %v2190
    %v2219 = vmin.f32 %v2218, %v2194
    %v2220 = vmin.f32 %v2219, %v2198
    %v2221 = vmin.f32 %v2220, %v2202
    %v2222 = vmin.f32 %v2221, %v2206
    %v2223 = vmin.f32 %v2222, %v2210
    %v2224 = vmin.f32 %v2223, %v2214
    %v2225 = vrot.slane %v2224, 4
    %v2226 = vmin.f32 %v2224, %v2225
    %v2227 = vrot.slane %v2226, 2
    %v2228 = vmin.f32 %v2226, %v2227
    %v2229 = vrot.slane %v2228, 1
    %v2230 = vmin.f32 %v2228, %v2229
    %v2231 = vmin.f32 %v2187, %v2191
    %v2232 = vmin.f32 %v2231, %v2195
    %v2233 = vmin.f32 %v2232, %v2199
    %v2234 = vmin.f32 %v2233, %v2203
    %v2235 = vmin.f32 %v2234, %v2207
    %v2236 = vmin.f32 %v2235, %v2211
    %v2237 = vmin.f32 %v2236, %v2215
    %v2238 = vrot.slane %v2237, 4
    %v2239 = vmin.f32 %v2237, %v2238
    %v2240 = vrot.slane %v2239, 2
    %v2241 = vmin.f32 %v2239, %v2240
    %v2242 = vrot.slane %v2241, 1
    %v2243 = vmin.f32 %v2241, %v2242
    %v2244 = vmin.f32 %v2188, %v2192
    %v2245 = vmin.f32 %v2244, %v2196
    %v2246 = vmin.f32 %v2245, %v2200
    %v2247 = vmin.f32 %v2246, %v2204
    %v2248 = vmin.f32 %v2247, %v2208
    %v2249 = vmin.f32 %v2248, %v2212
    %v2250 = vmin.f32 %v2249, %v2216
    %v2251 = vrot.slane %v2250, 4
    %v2252 = vmin.f32 %v2250, %v2251
    %v2253 = vrot.slane %v2252, 2
    %v2254 = vmin.f32 %v2252, %v2253
    %v2255 = vrot.slane %v2254, 1
    %v2256 = vmin.f32 %v2254, %v2255
    %v2257 = vmin.f32 %v2189, %v2193
    %v2258 = vmin.f32 %v2257, %v2197
    %v2259 = vmin.f32 %v2258, %v2201
    %v2260 = vmin.f32 %v2259, %v2205
    %v2261 = vmin.f32 %v2260, %v2209
    %v2262 = vmin.f32 %v2261, %v2213
    %v2263 = vmin.f32 %v2262, %v2217
    %v2264 = vrot.slane %v2263, 4
    %v2265 = vmin.f32 %v2263, %v2264
    %v2266 = vrot.slane %v2265, 2
    %v2267 = vmin.f32 %v2265, %v2266
    %v2268 = vrot.slane %v2267, 1
    %v2269 = vmin.f32 %v2267, %v2268
    %v2270 = vmin.f32 %v1812, %v2230
    %v2271 = vmin.f32 %v1813, %v2243
    %v2272 = vmin.f32 %v1814, %v2256
    %v2273 = vmin.f32 %v1815, %v2269
    %v2274 = vmin.f32 %v2186, %v2187
    %v2275 = vmin.f32 %v2274, %v2188
    %v2276 = vmin.f32 %v2275, %v2189
    %2277 = vmin.xlane.f32.xlu0 %v2276
    %v2278 = vpop.xlane.xlu0 %2277
    %v2279 = vmin.f32 %v2190, %v2191
    %v2280 = vmin.f32 %v2279, %v2192
    %v2281 = vmin.f32 %v2280, %v2193
    %2282 = vmin.xlane.f32.xlu0 %v2281
    %v2283 = vpop.xlane.xlu0 %2282
    %v2284 = vmin.f32 %v2194, %v2195
    %v2285 = vmin.f32 %v2284, %v2196
    %v2286 = vmin.f32 %v2285, %v2197
    %2287 = vmin.xlane.f32.xlu0 %v2286
    %v2288 = vpop.xlane.xlu0 %2287
    %v2289 = vmin.f32 %v2198, %v2199
    %v2290 = vmin.f32 %v2289, %v2200
    %v2291 = vmin.f32 %v2290, %v2201
    %2292 = vmin.xlane.f32.xlu0 %v2291
    %v2293 = vpop.xlane.xlu0 %2292
    %v2294 = vmin.f32 %v2202, %v2203
    %v2295 = vmin.f32 %v2294, %v2204
    %v2296 = vmin.f32 %v2295, %v2205
    %2297 = vmin.xlane.f32.xlu0 %v2296
    %v2298 = vpop.xlane.xlu0 %2297
    %v2299 = vmin.f32 %v2206, %v2207
    %v2300 = vmin.f32 %v2299, %v2208
    %v2301 = vmin.f32 %v2300, %v2209
    %2302 = vmin.xlane.f32.xlu0 %v2301
    %v2303 = vpop.xlane.xlu0 %2302
    %v2304 = vmin.f32 %v2210, %v2211
    %v2305 = vmin.f32 %v2304, %v2212
    %v2306 = vmin.f32 %v2305, %v2213
    %2307 = vmin.xlane.f32.xlu0 %v2306
    %v2308 = vpop.xlane.xlu0 %2307
    %v2309 = vmin.f32 %v2214, %v2215
    %v2310 = vmin.f32 %v2309, %v2216
    %v2311 = vmin.f32 %v2310, %v2217
    %2312 = vmin.xlane.f32.xlu0 %v2311
    %v2313 = vpop.xlane.xlu0 %2312
    %v2314 = vld [vmem:[%s7 + $0x80] sm:$0xff]
    %v2315 = vld [vmem:[%s7 + $0x88] sm:$0xff]
    %v2316 = vld [vmem:[%s7 + $0x90] sm:$0xff]
    %v2317 = vld [vmem:[%s7 + $0x98] sm:$0xff]
    %v2318 = vld [vmem:[%s7 + $0xa0] sm:$0xff]
    %v2319 = vld [vmem:[%s7 + $0xa8] sm:$0xff]
    %v2320 = vld [vmem:[%s7 + $0xb0] sm:$0xff]
    %v2321 = vld [vmem:[%s7 + $0xb8] sm:$0xff]
    %v2322 = vmin.f32 %v2314, %v2278
    %v2323 = vmin.f32 %v2315, %v2283
    %v2324 = vmin.f32 %v2316, %v2288
    %v2325 = vmin.f32 %v2317, %v2293
    %v2326 = vmin.f32 %v2318, %v2298
    %v2327 = vmin.f32 %v2319, %v2303
    %v2328 = vmin.f32 %v2320, %v2308
    %v2329 = vmin.f32 %v2321, %v2313
    %2330 = vst.msk [vmem:[%s7 + $0x80] sm:$0xff] %vm1413, %v2322
    %2331 = vst.msk [vmem:[%s7 + $0x88] sm:$0xff] %vm1413, %v2323
    %2332 = vst.msk [vmem:[%s7 + $0x90] sm:$0xff] %vm1413, %v2324
    %2333 = vst.msk [vmem:[%s7 + $0x98] sm:$0xff] %vm1413, %v2325
    %2334 = vst.msk [vmem:[%s7 + $0xa0] sm:$0xff] %vm1413, %v2326
    %2335 = vst.msk [vmem:[%s7 + $0xa8] sm:$0xff] %vm1413, %v2327
    %2336 = vst.msk [vmem:[%s7 + $0xb0] sm:$0xff] %vm1413, %v2328
    %2337 = vst.msk [vmem:[%s7 + $0xb8] sm:$0xff] %vm1413, %v2329
    %v2338 = vld [vmem:[#allocation2 + $0xc0] sm:$0xff]
    %v2339 = vld [vmem:[#allocation2 + $0xc8] sm:$0xff]
    %v2340 = vld [vmem:[#allocation2 + $0xd0] sm:$0xff]
    %v2341 = vld [vmem:[#allocation2 + $0xd8] sm:$0xff]
    %v2342 = vld [vmem:[#allocation2 + $0xe0] sm:$0xff]
    %v2343 = vld [vmem:[#allocation2 + $0xe8] sm:$0xff]
    %v2344 = vld [vmem:[#allocation2 + $0xf0] sm:$0xff]
    %v2345 = vld [vmem:[#allocation2 + $0xf8] sm:$0xff]
    %v2346 = vld [vmem:[#allocation3 + $0xc0] sm:$0xff]
    %v2347 = vld [vmem:[#allocation3 + $0xc8] sm:$0xff]
    %v2348 = vld [vmem:[#allocation3 + $0xd0] sm:$0xff]
    %v2349 = vld [vmem:[#allocation3 + $0xd8] sm:$0xff]
    %v2350 = vld [vmem:[#allocation3 + $0xe0] sm:$0xff]
    %v2351 = vld [vmem:[#allocation3 + $0xe8] sm:$0xff]
    %v2352 = vld [vmem:[#allocation3 + $0xf0] sm:$0xff]
    %v2353 = vld [vmem:[#allocation3 + $0xf8] sm:$0xff]
    %2355 = vset.pattern.permute.xlu0 0
    %2356 = vperm.xlu0 %2355, %v2346
    %v2357 = vpop.permute.xlu0 %2356
    %2360 = vset.pattern.permute.xlu0 0
    %2361 = vperm.xlu0 %2360, %v2347
    %v2362 = vpop.permute.xlu0 %2361
    %2365 = vset.pattern.permute.xlu0 0
    %2366 = vperm.xlu0 %2365, %v2348
    %v2367 = vpop.permute.xlu0 %2366
    %2370 = vset.pattern.permute.xlu0 0
    %2371 = vperm.xlu0 %2370, %v2349
    %v2372 = vpop.permute.xlu0 %2371
    %2375 = vset.pattern.permute.xlu0 0
    %2376 = vperm.xlu0 %2375, %v2350
    %v2377 = vpop.permute.xlu0 %2376
    %2380 = vset.pattern.permute.xlu0 0
    %2381 = vperm.xlu0 %2380, %v2351
    %v2382 = vpop.permute.xlu0 %2381
    %2385 = vset.pattern.permute.xlu0 0
    %2386 = vperm.xlu0 %2385, %v2352
    %v2387 = vpop.permute.xlu0 %2386
    %2390 = vset.pattern.permute.xlu0 0
    %2391 = vperm.xlu0 %2390, %v2353
    %v2392 = vpop.permute.xlu0 %2391
    %v2395 = vsel %vm768, %v2338, 0
    %v2398 = vsel %vm768, %v2339, 0
    %v2401 = vsel %vm768, %v2340, 0
    %v2404 = vsel %vm768, %v2341, 0
    %v2407 = vsel %vm768, %v2342, 0
    %v2410 = vsel %vm768, %v2343, 0
    %v2413 = vsel %vm768, %v2344, 0
    %v2416 = vsel %vm768, %v2345, 0
    %2418 = vmatprep.subr.mxu0 %v1039
    %2419 = vmatpush1.msra.mxu0 %v1036
    %2420 = vmatprep.subr.mxu0 0.0
    %2421 = vmatpush1.msra.mxu0 0.0
    %2422 = vmatprep.subr.mxu0 0.0
    %2423 = vmatpush1.msra.mxu0 0.0
    %2424 = vmatprep.subr.mxu0 0.0
    %2425 = vmatpush1.msra.mxu0 0.0
    %2426 = vmatprep.subr.mxu0 0.0
    %2427 = vmatpush1.msra.mxu0 0.0
    %2428 = vmatprep.subr.mxu0 0.0
    %2429 = vmatpush1.msra.mxu0 0.0
    %2430 = vmatprep.subr.mxu0 0.0
    %2431 = vmatpush1.msra.mxu0 0.0
    %2432 = vmatprep.subr.mxu0 0.0
    %2433 = vmatpush1.msra.mxu0 0.0
    %2434 = vmatprep.subr.mxu0 0.0
    %2435 = vmatpush1.msra.mxu0 0.0
    %2436 = vmatprep.subr.mxu0 0.0
    %2437 = vmatpush1.msra.mxu0 0.0
    %2438 = vmatprep.subr.mxu0 0.0
    %2439 = vmatpush1.msra.mxu0 0.0
    %2440 = vmatprep.subr.mxu0 0.0
    %2441 = vmatpush1.msra.mxu0 0.0
    %2442 = vmatprep.subr.mxu0 0.0
    %2443 = vmatpush1.msra.mxu0 0.0
    %2444 = vmatprep.subr.mxu0 0.0
    %2445 = vmatpush1.msra.mxu0 0.0
    %2446 = vmatprep.subr.mxu0 0.0
    %2447 = vmatpush1.msra.mxu0 0.0
    %2448 = vmatprep.subr.mxu0 0.0
    %2449 = vmatpush1.msra.mxu0 0.0
    %2450 = vmatprep.subr.mxu0 0.0
    %2451 = vmatpush1.msra.mxu0 0.0
    %2452 = vmatprep.subr.mxu0 0.0
    %2453 = vmatpush1.msra.mxu0 0.0
    %2454 = vmatprep.subr.mxu0 0.0
    %2455 = vmatpush1.msra.mxu0 0.0
    %2456 = vmatprep.subr.mxu0 0.0
    %2457 = vmatpush1.msra.mxu0 0.0
    %2458 = vmatprep.subr.mxu0 0.0
    %2459 = vmatpush1.msra.mxu0 0.0
    %2460 = vmatprep.subr.mxu0 0.0
    %2461 = vmatpush1.msra.mxu0 0.0
    %2462 = vmatprep.subr.mxu0 0.0
    %2463 = vmatpush1.msra.mxu0 0.0
    %2464 = vmatprep.subr.mxu0 0.0
    %2465 = vmatpush1.msra.mxu0 0.0
    %2466 = vmatprep.subr.mxu0 0.0
    %2467 = vmatpush1.msra.mxu0 0.0
    %2468 = vmatprep.subr.mxu0 0.0
    %2469 = vmatpush1.msra.mxu0 0.0
    %2470 = vmatprep.subr.mxu0 0.0
    %2471 = vmatpush1.msra.mxu0 0.0
    %2472 = vmatprep.subr.mxu0 0.0
    %2473 = vmatpush1.msra.mxu0 0.0
    %2474 = vmatprep.subr.mxu0 0.0
    %2475 = vmatpush1.msra.mxu0 0.0
    %2476 = vmatprep.subr.mxu0 0.0
    %2477 = vmatpush1.msra.mxu0 0.0
    %2478 = vmatprep.subr.mxu0 0.0
    %2479 = vmatpush1.msra.mxu0 0.0
    %2480 = vmatprep.subr.mxu0 0.0
    %2481 = vmatpush1.msra.mxu0 0.0
    %2482 = vmatprep.mubr.f32.mxu0 0.0
    %2483 = vmatmul.mubr.f32.gmra.mrb[0].mxu0 %v2395
    %v2484 = vpop.f32.mrb[0].mxu0
    %v2485 = vadd.f32 %v2357, %v2484
    %v2486 = vpop.f32.mrb[0].mxu0
    %v2487 = vadd.f32 %v2357, %v2486
    %2488 = vmatprep.mubr.f32.mxu0 0.0
    %2489 = vmatmul.mubr.f32.gmra.mrb[0].mxu0 %v2398
    %v2490 = vpop.f32.mrb[0].mxu0
    %v2491 = vadd.f32 %v2362, %v2490
    %v2492 = vpop.f32.mrb[0].mxu0
    %v2493 = vadd.f32 %v2362, %v2492
    %2494 = vmatprep.mubr.f32.mxu0 0.0
    %2495 = vmatmul.mubr.f32.gmra.mrb[0].mxu0 %v2401
    %v2496 = vpop.f32.mrb[0].mxu0
    %v2497 = vadd.f32 %v2367, %v2496
    %v2498 = vpop.f32.mrb[0].mxu0
    %v2499 = vadd.f32 %v2367, %v2498
    %2500 = vmatprep.mubr.f32.mxu0 0.0
    %2501 = vmatmul.mubr.f32.gmra.mrb[0].mxu0 %v2404
    %v2502 = vpop.f32.mrb[0].mxu0
    %v2503 = vadd.f32 %v2372, %v2502
    %v2504 = vpop.f32.mrb[0].mxu0
    %v2505 = vadd.f32 %v2372, %v2504
    %2506 = vmatprep.mubr.f32.mxu0 0.0
    %2507 = vmatmul.mubr.f32.gmra.mrb[0].mxu0 %v2407
    %v2508 = vpop.f32.mrb[0].mxu0
    %v2509 = vadd.f32 %v2377, %v2508
    %v2510 = vpop.f32.mrb[0].mxu0
    %v2511 = vadd.f32 %v2377, %v2510
    %2512 = vmatprep.mubr.f32.mxu0 0.0
    %2513 = vmatmul.mubr.f32.gmra.mrb[0].mxu0 %v2410
    %v2514 = vpop.f32.mrb[0].mxu0
    %v2515 = vadd.f32 %v2382, %v2514
    %v2516 = vpop.f32.mrb[0].mxu0
    %v2517 = vadd.f32 %v2382, %v2516
    %2518 = vmatprep.mubr.f32.mxu0 0.0
    %2519 = vmatmul.mubr.f32.gmra.mrb[0].mxu0 %v2413
    %v2520 = vpop.f32.mrb[0].mxu0
    %v2521 = vadd.f32 %v2387, %v2520
    %v2522 = vpop.f32.mrb[0].mxu0
    %v2523 = vadd.f32 %v2387, %v2522
    %2524 = vmatprep.mubr.f32.mxu0 0.0
    %2525 = vmatmul.mubr.f32.gmra.mrb[0].mxu0 %v2416
    %v2526 = vpop.f32.mrb[0].mxu0
    %v2527 = vadd.f32 %v2392, %v2526
    %v2528 = vpop.f32.mrb[0].mxu0
    %v2529 = vadd.f32 %v2392, %v2528
    %2530 = vdwg.mxu0
    %2531 = vmatprep.subr.mxu0 %v1045
    %2532 = vmatpush1.msra.mxu0 %v1042
    %2533 = vmatprep.subr.mxu0 0.0
    %2534 = vmatpush1.msra.mxu0 0.0
    %2535 = vmatprep.subr.mxu0 0.0
    %2536 = vmatpush1.msra.mxu0 0.0
    %2537 = vmatprep.subr.mxu0 0.0
    %2538 = vmatpush1.msra.mxu0 0.0
    %2539 = vmatprep.subr.mxu0 0.0
    %2540 = vmatpush1.msra.mxu0 0.0
    %2541 = vmatprep.subr.mxu0 0.0
    %2542 = vmatpush1.msra.mxu0 0.0
    %2543 = vmatprep.subr.mxu0 0.0
    %2544 = vmatpush1.msra.mxu0 0.0
    %2545 = vmatprep.subr.mxu0 0.0
    %2546 = vmatpush1.msra.mxu0 0.0
    %2547 = vmatprep.subr.mxu0 0.0
    %2548 = vmatpush1.msra.mxu0 0.0
    %2549 = vmatprep.subr.mxu0 0.0
    %2550 = vmatpush1.msra.mxu0 0.0
    %2551 = vmatprep.subr.mxu0 0.0
    %2552 = vmatpush1.msra.mxu0 0.0
    %2553 = vmatprep.subr.mxu0 0.0
    %2554 = vmatpush1.msra.mxu0 0.0
    %2555 = vmatprep.subr.mxu0 0.0
    %2556 = vmatpush1.msra.mxu0 0.0
    %2557 = vmatprep.subr.mxu0 0.0
    %2558 = vmatpush1.msra.mxu0 0.0
    %2559 = vmatprep.subr.mxu0 0.0
    %2560 = vmatpush1.msra.mxu0 0.0
    %2561 = vmatprep.subr.mxu0 0.0
    %2562 = vmatpush1.msra.mxu0 0.0
    %2563 = vmatprep.subr.mxu0 0.0
    %2564 = vmatpush1.msra.mxu0 0.0
    %2565 = vmatprep.subr.mxu0 0.0
    %2566 = vmatpush1.msra.mxu0 0.0
    %2567 = vmatprep.subr.mxu0 0.0
    %2568 = vmatpush1.msra.mxu0 0.0
    %2569 = vmatprep.subr.mxu0 0.0
    %2570 = vmatpush1.msra.mxu0 0.0
    %2571 = vmatprep.subr.mxu0 0.0
    %2572 = vmatpush1.msra.mxu0 0.0
    %2573 = vmatprep.subr.mxu0 0.0
    %2574 = vmatpush1.msra.mxu0 0.0
    %2575 = vmatprep.subr.mxu0 0.0
    %2576 = vmatpush1.msra.mxu0 0.0
    %2577 = vmatprep.subr.mxu0 0.0
    %2578 = vmatpush1.msra.mxu0 0.0
    %2579 = vmatprep.subr.mxu0 0.0
    %2580 = vmatpush1.msra.mxu0 0.0
    %2581 = vmatprep.subr.mxu0 0.0
    %2582 = vmatpush1.msra.mxu0 0.0
    %2583 = vmatprep.subr.mxu0 0.0
    %2584 = vmatpush1.msra.mxu0 0.0
    %2585 = vmatprep.subr.mxu0 0.0
    %2586 = vmatpush1.msra.mxu0 0.0
    %2587 = vmatprep.subr.mxu0 0.0
    %2588 = vmatpush1.msra.mxu0 0.0
    %2589 = vmatprep.subr.mxu0 0.0
    %2590 = vmatpush1.msra.mxu0 0.0
    %2591 = vmatprep.subr.mxu0 0.0
    %2592 = vmatpush1.msra.mxu0 0.0
    %2593 = vmatprep.subr.mxu0 0.0
    %2594 = vmatpush1.msra.mxu0 0.0
    %2595 = vmatprep.mubr.f32.mxu0 0.0
    %2596 = vmatmul.mubr.f32.gmra.mrb[0].mxu0 %v2395
    %v2597 = vpop.f32.mrb[0].mxu0
    %v2598 = vadd.f32 %v2357, %v2597
    %v2599 = vpop.f32.mrb[0].mxu0
    %v2600 = vadd.f32 %v2357, %v2599
    %2601 = vmatprep.mubr.f32.mxu0 0.0
    %2602 = vmatmul.mubr.f32.gmra.mrb[0].mxu0 %v2398
    %v2603 = vpop.f32.mrb[0].mxu0
    %v2604 = vadd.f32 %v2362, %v2603
    %v2605 = vpop.f32.mrb[0].mxu0
    %v2606 = vadd.f32 %v2362, %v2605
    %2607 = vmatprep.mubr.f32.mxu0 0.0
    %2608 = vmatmul.mubr.f32.gmra.mrb[0].mxu0 %v2401
    %v2609 = vpop.f32.mrb[0].mxu0
    %v2610 = vadd.f32 %v2367, %v2609
    %v2611 = vpop.f32.mrb[0].mxu0
    %v2612 = vadd.f32 %v2367, %v2611
    %2613 = vmatprep.mubr.f32.mxu0 0.0
    %2614 = vmatmul.mubr.f32.gmra.mrb[0].mxu0 %v2404
    %v2615 = vpop.f32.mrb[0].mxu0
    %v2616 = vadd.f32 %v2372, %v2615
    %v2617 = vpop.f32.mrb[0].mxu0
    %v2618 = vadd.f32 %v2372, %v2617
    %2619 = vmatprep.mubr.f32.mxu0 0.0
    %2620 = vmatmul.mubr.f32.gmra.mrb[0].mxu0 %v2407
    %v2621 = vpop.f32.mrb[0].mxu0
    %v2622 = vadd.f32 %v2377, %v2621
    %v2623 = vpop.f32.mrb[0].mxu0
    %v2624 = vadd.f32 %v2377, %v2623
    %2625 = vmatprep.mubr.f32.mxu0 0.0
    %2626 = vmatmul.mubr.f32.gmra.mrb[0].mxu0 %v2410
    %v2627 = vpop.f32.mrb[0].mxu0
    %v2628 = vadd.f32 %v2382, %v2627
    %v2629 = vpop.f32.mrb[0].mxu0
    %v2630 = vadd.f32 %v2382, %v2629
    %2631 = vmatprep.mubr.f32.mxu0 0.0
    %2632 = vmatmul.mubr.f32.gmra.mrb[0].mxu0 %v2413
    %v2633 = vpop.f32.mrb[0].mxu0
    %v2634 = vadd.f32 %v2387, %v2633
    %v2635 = vpop.f32.mrb[0].mxu0
    %v2636 = vadd.f32 %v2387, %v2635
    %2637 = vmatprep.mubr.f32.mxu0 0.0
    %2638 = vmatmul.mubr.f32.gmra.mrb[0].mxu0 %v2416
    %v2639 = vpop.f32.mrb[0].mxu0
    %v2640 = vadd.f32 %v2392, %v2639
    %v2641 = vpop.f32.mrb[0].mxu0
    %v2642 = vadd.f32 %v2392, %v2641
    %2643 = vdwg.mxu0
    %v2644 = vadd.f32 %v2485, %v933
    %v2645 = vadd.f32 %v2487, %v940
    %v2646 = vadd.f32 %v2598, %v947
    %v2647 = vadd.f32 %v2600, %v954
    %v2648 = vadd.f32 %v2491, %v933
    %v2649 = vadd.f32 %v2493, %v940
    %v2650 = vadd.f32 %v2604, %v947
    %v2651 = vadd.f32 %v2606, %v954
    %v2652 = vadd.f32 %v2497, %v933
    %v2653 = vadd.f32 %v2499, %v940
    %v2654 = vadd.f32 %v2610, %v947
    %v2655 = vadd.f32 %v2612, %v954
    %v2656 = vadd.f32 %v2503, %v933
    %v2657 = vadd.f32 %v2505, %v940
    %v2658 = vadd.f32 %v2616, %v947
    %v2659 = vadd.f32 %v2618, %v954
    %v2660 = vadd.f32 %v2509, %v933
    %v2661 = vadd.f32 %v2511, %v940
    %v2662 = vadd.f32 %v2622, %v947
    %v2663 = vadd.f32 %v2624, %v954
    %v2664 = vadd.f32 %v2515, %v933
    %v2665 = vadd.f32 %v2517, %v940
    %v2666 = vadd.f32 %v2628, %v947
    %v2667 = vadd.f32 %v2630, %v954
    %v2668 = vadd.f32 %v2521, %v933
    %v2669 = vadd.f32 %v2523, %v940
    %v2670 = vadd.f32 %v2634, %v947
    %v2671 = vadd.f32 %v2636, %v954
    %v2672 = vadd.f32 %v2527, %v933
    %v2673 = vadd.f32 %v2529, %v940
    %v2674 = vadd.f32 %v2640, %v947
    %v2675 = vadd.f32 %v2642, %v954
    %v2676 = vmin.f32 %v2644, %v2648
    %v2677 = vmin.f32 %v2676, %v2652
    %v2678 = vmin.f32 %v2677, %v2656
    %v2679 = vmin.f32 %v2678, %v2660
    %v2680 = vmin.f32 %v2679, %v2664
    %v2681 = vmin.f32 %v2680, %v2668
    %v2682 = vmin.f32 %v2681, %v2672
    %v2683 = vrot.slane %v2682, 4
    %v2684 = vmin.f32 %v2682, %v2683
    %v2685 = vrot.slane %v2684, 2
    %v2686 = vmin.f32 %v2684, %v2685
    %v2687 = vrot.slane %v2686, 1
    %v2688 = vmin.f32 %v2686, %v2687
    %v2689 = vmin.f32 %v2645, %v2649
    %v2690 = vmin.f32 %v2689, %v2653
    %v2691 = vmin.f32 %v2690, %v2657
    %v2692 = vmin.f32 %v2691, %v2661
    %v2693 = vmin.f32 %v2692, %v2665
    %v2694 = vmin.f32 %v2693, %v2669
    %v2695 = vmin.f32 %v2694, %v2673
    %v2696 = vrot.slane %v2695, 4
    %v2697 = vmin.f32 %v2695, %v2696
    %v2698 = vrot.slane %v2697, 2
    %v2699 = vmin.f32 %v2697, %v2698
    %v2700 = vrot.slane %v2699, 1
    %v2701 = vmin.f32 %v2699, %v2700
    %v2702 = vmin.f32 %v2646, %v2650
    %v2703 = vmin.f32 %v2702, %v2654
    %v2704 = vmin.f32 %v2703, %v2658
    %v2705 = vmin.f32 %v2704, %v2662
    %v2706 = vmin.f32 %v2705, %v2666
    %v2707 = vmin.f32 %v2706, %v2670
    %v2708 = vmin.f32 %v2707, %v2674
    %v2709 = vrot.slane %v2708, 4
    %v2710 = vmin.f32 %v2708, %v2709
    %v2711 = vrot.slane %v2710, 2
    %v2712 = vmin.f32 %v2710, %v2711
    %v2713 = vrot.slane %v2712, 1
    %v2714 = vmin.f32 %v2712, %v2713
    %v2715 = vmin.f32 %v2647, %v2651
    %v2716 = vmin.f32 %v2715, %v2655
    %v2717 = vmin.f32 %v2716, %v2659
    %v2718 = vmin.f32 %v2717, %v2663
    %v2719 = vmin.f32 %v2718, %v2667
    %v2720 = vmin.f32 %v2719, %v2671
    %v2721 = vmin.f32 %v2720, %v2675
    %v2722 = vrot.slane %v2721, 4
    %v2723 = vmin.f32 %v2721, %v2722
    %v2724 = vrot.slane %v2723, 2
    %v2725 = vmin.f32 %v2723, %v2724
    %v2726 = vrot.slane %v2725, 1
    %v2727 = vmin.f32 %v2725, %v2726
    %v2728 = vmin.f32 %v2270, %v2688
    %v2729 = vmin.f32 %v2271, %v2701
    %v2730 = vmin.f32 %v2272, %v2714
    %v2731 = vmin.f32 %v2273, %v2727
    %v2732 = vmin.f32 %v2644, %v2645
    %v2733 = vmin.f32 %v2732, %v2646
    %v2734 = vmin.f32 %v2733, %v2647
    %2735 = vmin.xlane.f32.xlu0 %v2734
    %v2736 = vpop.xlane.xlu0 %2735
    %v2737 = vmin.f32 %v2648, %v2649
    %v2738 = vmin.f32 %v2737, %v2650
    %v2739 = vmin.f32 %v2738, %v2651
    %2740 = vmin.xlane.f32.xlu0 %v2739
    %v2741 = vpop.xlane.xlu0 %2740
    %v2742 = vmin.f32 %v2652, %v2653
    %v2743 = vmin.f32 %v2742, %v2654
    %v2744 = vmin.f32 %v2743, %v2655
    %2745 = vmin.xlane.f32.xlu0 %v2744
    %v2746 = vpop.xlane.xlu0 %2745
    %v2747 = vmin.f32 %v2656, %v2657
    %v2748 = vmin.f32 %v2747, %v2658
    %v2749 = vmin.f32 %v2748, %v2659
    %2750 = vmin.xlane.f32.xlu0 %v2749
    %v2751 = vpop.xlane.xlu0 %2750
    %v2752 = vmin.f32 %v2660, %v2661
    %v2753 = vmin.f32 %v2752, %v2662
    %v2754 = vmin.f32 %v2753, %v2663
    %2755 = vmin.xlane.f32.xlu0 %v2754
    %v2756 = vpop.xlane.xlu0 %2755
    %v2757 = vmin.f32 %v2664, %v2665
    %v2758 = vmin.f32 %v2757, %v2666
    %v2759 = vmin.f32 %v2758, %v2667
    %2760 = vmin.xlane.f32.xlu0 %v2759
    %v2761 = vpop.xlane.xlu0 %2760
    %v2762 = vmin.f32 %v2668, %v2669
    %v2763 = vmin.f32 %v2762, %v2670
    %v2764 = vmin.f32 %v2763, %v2671
    %2765 = vmin.xlane.f32.xlu0 %v2764
    %v2766 = vpop.xlane.xlu0 %2765
    %v2767 = vmin.f32 %v2672, %v2673
    %v2768 = vmin.f32 %v2767, %v2674
    %v2769 = vmin.f32 %v2768, %v2675
    %2770 = vmin.xlane.f32.xlu0 %v2769
    %v2771 = vpop.xlane.xlu0 %2770
    %v2772 = vld [vmem:[%s7 + $0xc0] sm:$0xff]
    %v2773 = vld [vmem:[%s7 + $0xc8] sm:$0xff]
    %v2774 = vld [vmem:[%s7 + $0xd0] sm:$0xff]
    %v2775 = vld [vmem:[%s7 + $0xd8] sm:$0xff]
    %v2776 = vld [vmem:[%s7 + $0xe0] sm:$0xff]
    %v2777 = vld [vmem:[%s7 + $0xe8] sm:$0xff]
    %v2778 = vld [vmem:[%s7 + $0xf0] sm:$0xff]
    %v2779 = vld [vmem:[%s7 + $0xf8] sm:$0xff]
    %v2780 = vmin.f32 %v2772, %v2736
    %v2781 = vmin.f32 %v2773, %v2741
    %v2782 = vmin.f32 %v2774, %v2746
    %v2783 = vmin.f32 %v2775, %v2751
    %v2784 = vmin.f32 %v2776, %v2756
    %v2785 = vmin.f32 %v2777, %v2761
    %v2786 = vmin.f32 %v2778, %v2766
    %v2787 = vmin.f32 %v2779, %v2771
    %2788 = vst.msk [vmem:[%s7 + $0xc0] sm:$0xff] %vm1413, %v2780
    %2789 = vst.msk [vmem:[%s7 + $0xc8] sm:$0xff] %vm1413, %v2781
    %2790 = vst.msk [vmem:[%s7 + $0xd0] sm:$0xff] %vm1413, %v2782
    %2791 = vst.msk [vmem:[%s7 + $0xd8] sm:$0xff] %vm1413, %v2783
    %2792 = vst.msk [vmem:[%s7 + $0xe0] sm:$0xff] %vm1413, %v2784
    %2793 = vst.msk [vmem:[%s7 + $0xe8] sm:$0xff] %vm1413, %v2785
    %2794 = vst.msk [vmem:[%s7 + $0xf0] sm:$0xff] %vm1413, %v2786
    %2795 = vst.msk [vmem:[%s7 + $0xf8] sm:$0xff] %vm1413, %v2787
    %v2796 = vld [vmem:[#allocation2 + $0x100] sm:$0xff]
    %v2797 = vld [vmem:[#allocation2 + $0x108] sm:$0xff]
    %v2798 = vld [vmem:[#allocation2 + $0x110] sm:$0xff]
    %v2799 = vld [vmem:[#allocation2 + $0x118] sm:$0xff]
    %v2800 = vld [vmem:[#allocation2 + $0x120] sm:$0xff]
    %v2801 = vld [vmem:[#allocation2 + $0x128] sm:$0xff]
    %v2802 = vld [vmem:[#allocation3 + $0x100] sm:$0xff]
    %v2803 = vld [vmem:[#allocation3 + $0x108] sm:$0xff]
    %v2804 = vld [vmem:[#allocation3 + $0x110] sm:$0xff]
    %v2805 = vld [vmem:[#allocation3 + $0x118] sm:$0xff]
    %v2806 = vld [vmem:[#allocation3 + $0x120] sm:$0xff]
    %v2807 = vld [vmem:[#allocation3 + $0x128] sm:$0xff]
    %2809 = vset.pattern.permute.xlu0 0
    %2810 = vperm.xlu0 %2809, %v2802
    %v2811 = vpop.permute.xlu0 %2810
    %2814 = vset.pattern.permute.xlu0 0
    %2815 = vperm.xlu0 %2814, %v2803
    %v2816 = vpop.permute.xlu0 %2815
    %2819 = vset.pattern.permute.xlu0 0
    %2820 = vperm.xlu0 %2819, %v2804
    %v2821 = vpop.permute.xlu0 %2820
    %2824 = vset.pattern.permute.xlu0 0
    %2825 = vperm.xlu0 %2824, %v2805
    %v2826 = vpop.permute.xlu0 %2825
    %2829 = vset.pattern.permute.xlu0 0
    %2830 = vperm.xlu0 %2829, %v2806
    %v2831 = vpop.permute.xlu0 %2830
    %2834 = vset.pattern.permute.xlu0 0
    %2835 = vperm.xlu0 %2834, %v2807
    %v2836 = vpop.permute.xlu0 %2835
    %v2839 = vsel %vm768, %v2796, 0
    %v2842 = vsel %vm768, %v2797, 0
    %v2845 = vsel %vm768, %v2798, 0
    %v2848 = vsel %vm768, %v2799, 0
    %v2851 = vsel %vm768, %v2800, 0
    %v2854 = vsel %vm768, %v2801, 0
    %2856 = vmatprep.subr.mxu0 %v1039
    %2857 = vmatpush1.msra.mxu0 %v1036
    %2858 = vmatprep.subr.mxu0 0.0
    %2859 = vmatpush1.msra.mxu0 0.0
    %2860 = vmatprep.subr.mxu0 0.0
    %2861 = vmatpush1.msra.mxu0 0.0
    %2862 = vmatprep.subr.mxu0 0.0
    %2863 = vmatpush1.msra.mxu0 0.0
    %2864 = vmatprep.subr.mxu0 0.0
    %2865 = vmatpush1.msra.mxu0 0.0
    %2866 = vmatprep.subr.mxu0 0.0
    %2867 = vmatpush1.msra.mxu0 0.0
    %2868 = vmatprep.subr.mxu0 0.0
    %2869 = vmatpush1.msra.mxu0 0.0
    %2870 = vmatprep.subr.mxu0 0.0
    %2871 = vmatpush1.msra.mxu0 0.0
    %2872 = vmatprep.subr.mxu0 0.0
    %2873 = vmatpush1.msra.mxu0 0.0
    %2874 = vmatprep.subr.mxu0 0.0
    %2875 = vmatpush1.msra.mxu0 0.0
    %2876 = vmatprep.subr.mxu0 0.0
    %2877 = vmatpush1.msra.mxu0 0.0
    %2878 = vmatprep.subr.mxu0 0.0
    %2879 = vmatpush1.msra.mxu0 0.0
    %2880 = vmatprep.subr.mxu0 0.0
    %2881 = vmatpush1.msra.mxu0 0.0
    %2882 = vmatprep.subr.mxu0 0.0
    %2883 = vmatpush1.msra.mxu0 0.0
    %2884 = vmatprep.subr.mxu0 0.0
    %2885 = vmatpush1.msra.mxu0 0.0
    %2886 = vmatprep.subr.mxu0 0.0
    %2887 = vmatpush1.msra.mxu0 0.0
    %2888 = vmatprep.subr.mxu0 0.0
    %2889 = vmatpush1.msra.mxu0 0.0
    %2890 = vmatprep.subr.mxu0 0.0
    %2891 = vmatpush1.msra.mxu0 0.0
    %2892 = vmatprep.subr.mxu0 0.0
    %2893 = vmatpush1.msra.mxu0 0.0
    %2894 = vmatprep.subr.mxu0 0.0
    %2895 = vmatpush1.msra.mxu0 0.0
    %2896 = vmatprep.subr.mxu0 0.0
    %2897 = vmatpush1.msra.mxu0 0.0
    %2898 = vmatprep.subr.mxu0 0.0
    %2899 = vmatpush1.msra.mxu0 0.0
    %2900 = vmatprep.subr.mxu0 0.0
    %2901 = vmatpush1.msra.mxu0 0.0
    %2902 = vmatprep.subr.mxu0 0.0
    %2903 = vmatpush1.msra.mxu0 0.0
    %2904 = vmatprep.subr.mxu0 0.0
    %2905 = vmatpush1.msra.mxu0 0.0
    %2906 = vmatprep.subr.mxu0 0.0
    %2907 = vmatpush1.msra.mxu0 0.0
    %2908 = vmatprep.subr.mxu0 0.0
    %2909 = vmatpush1.msra.mxu0 0.0
    %2910 = vmatprep.subr.mxu0 0.0
    %2911 = vmatpush1.msra.mxu0 0.0
    %2912 = vmatprep.subr.mxu0 0.0
    %2913 = vmatpush1.msra.mxu0 0.0
    %2914 = vmatprep.subr.mxu0 0.0
    %2915 = vmatpush1.msra.mxu0 0.0
    %2916 = vmatprep.subr.mxu0 0.0
    %2917 = vmatpush1.msra.mxu0 0.0
    %2918 = vmatprep.subr.mxu0 0.0
    %2919 = vmatpush1.msra.mxu0 0.0
    %2920 = vmatprep.mubr.f32.mxu0 0.0
    %2921 = vmatmul.mubr.f32.gmra.mrb[0].mxu0 %v2839
    %v2922 = vpop.f32.mrb[0].mxu0
    %v2923 = vadd.f32 %v2811, %v2922
    %v2924 = vpop.f32.mrb[0].mxu0
    %v2925 = vadd.f32 %v2811, %v2924
    %2926 = vmatprep.mubr.f32.mxu0 0.0
    %2927 = vmatmul.mubr.f32.gmra.mrb[0].mxu0 %v2842
    %v2928 = vpop.f32.mrb[0].mxu0
    %v2929 = vadd.f32 %v2816, %v2928
    %v2930 = vpop.f32.mrb[0].mxu0
    %v2931 = vadd.f32 %v2816, %v2930
    %2932 = vmatprep.mubr.f32.mxu0 0.0
    %2933 = vmatmul.mubr.f32.gmra.mrb[0].mxu0 %v2845
    %v2934 = vpop.f32.mrb[0].mxu0
    %v2935 = vadd.f32 %v2821, %v2934
    %v2936 = vpop.f32.mrb[0].mxu0
    %v2937 = vadd.f32 %v2821, %v2936
    %2938 = vmatprep.mubr.f32.mxu0 0.0
    %2939 = vmatmul.mubr.f32.gmra.mrb[0].mxu0 %v2848
    %v2940 = vpop.f32.mrb[0].mxu0
    %v2941 = vadd.f32 %v2826, %v2940
    %v2942 = vpop.f32.mrb[0].mxu0
    %v2943 = vadd.f32 %v2826, %v2942
    %2944 = vmatprep.mubr.f32.mxu0 0.0
    %2945 = vmatmul.mubr.f32.gmra.mrb[0].mxu0 %v2851
    %v2946 = vpop.f32.mrb[0].mxu0
    %v2947 = vadd.f32 %v2831, %v2946
    %v2948 = vpop.f32.mrb[0].mxu0
    %v2949 = vadd.f32 %v2831, %v2948
    %2950 = vmatprep.mubr.f32.mxu0 0.0
    %2951 = vmatmul.mubr.f32.gmra.mrb[0].mxu0 %v2854
    %v2952 = vpop.f32.mrb[0].mxu0
    %v2953 = vadd.f32 %v2836, %v2952
    %v2954 = vpop.f32.mrb[0].mxu0
    %v2955 = vadd.f32 %v2836, %v2954
    %2956 = vdwg.mxu0
    %2957 = vmatprep.subr.mxu0 %v1045
    %2958 = vmatpush1.msra.mxu0 %v1042
    %2959 = vmatprep.subr.mxu0 0.0
    %2960 = vmatpush1.msra.mxu0 0.0
    %2961 = vmatprep.subr.mxu0 0.0
    %2962 = vmatpush1.msra.mxu0 0.0
    %2963 = vmatprep.subr.mxu0 0.0
    %2964 = vmatpush1.msra.mxu0 0.0
    %2965 = vmatprep.subr.mxu0 0.0
    %2966 = vmatpush1.msra.mxu0 0.0
    %2967 = vmatprep.subr.mxu0 0.0
    %2968 = vmatpush1.msra.mxu0 0.0
    %2969 = vmatprep.subr.mxu0 0.0
    %2970 = vmatpush1.msra.mxu0 0.0
    %2971 = vmatprep.subr.mxu0 0.0
    %2972 = vmatpush1.msra.mxu0 0.0
    %2973 = vmatprep.subr.mxu0 0.0
    %2974 = vmatpush1.msra.mxu0 0.0
    %2975 = vmatprep.subr.mxu0 0.0
    %2976 = vmatpush1.msra.mxu0 0.0
    %2977 = vmatprep.subr.mxu0 0.0
    %2978 = vmatpush1.msra.mxu0 0.0
    %2979 = vmatprep.subr.mxu0 0.0
    %2980 = vmatpush1.msra.mxu0 0.0
    %2981 = vmatprep.subr.mxu0 0.0
    %2982 = vmatpush1.msra.mxu0 0.0
    %2983 = vmatprep.subr.mxu0 0.0
    %2984 = vmatpush1.msra.mxu0 0.0
    %2985 = vmatprep.subr.mxu0 0.0
    %2986 = vmatpush1.msra.mxu0 0.0
    %2987 = vmatprep.subr.mxu0 0.0
    %2988 = vmatpush1.msra.mxu0 0.0
    %2989 = vmatprep.subr.mxu0 0.0
    %2990 = vmatpush1.msra.mxu0 0.0
    %2991 = vmatprep.subr.mxu0 0.0
    %2992 = vmatpush1.msra.mxu0 0.0
    %2993 = vmatprep.subr.mxu0 0.0
    %2994 = vmatpush1.msra.mxu0 0.0
    %2995 = vmatprep.subr.mxu0 0.0
    %2996 = vmatpush1.msra.mxu0 0.0
    %2997 = vmatprep.subr.mxu0 0.0
    %2998 = vmatpush1.msra.mxu0 0.0
    %2999 = vmatprep.subr.mxu0 0.0
    %3000 = vmatpush1.msra.mxu0 0.0
    %3001 = vmatprep.subr.mxu0 0.0
    %3002 = vmatpush1.msra.mxu0 0.0
    %3003 = vmatprep.subr.mxu0 0.0
    %3004 = vmatpush1.msra.mxu0 0.0
    %3005 = vmatprep.subr.mxu0 0.0
    %3006 = vmatpush1.msra.mxu0 0.0
    %3007 = vmatprep.subr.mxu0 0.0
    %3008 = vmatpush1.msra.mxu0 0.0
    %3009 = vmatprep.subr.mxu0 0.0
    %3010 = vmatpush1.msra.mxu0 0.0
    %3011 = vmatprep.subr.mxu0 0.0
    %3012 = vmatpush1.msra.mxu0 0.0
    %3013 = vmatprep.subr.mxu0 0.0
    %3014 = vmatpush1.msra.mxu0 0.0
    %3015 = vmatprep.subr.mxu0 0.0
    %3016 = vmatpush1.msra.mxu0 0.0
    %3017 = vmatprep.subr.mxu0 0.0
    %3018 = vmatpush1.msra.mxu0 0.0
    %3019 = vmatprep.subr.mxu0 0.0
    %3020 = vmatpush1.msra.mxu0 0.0
    %3021 = vmatprep.mubr.f32.mxu0 0.0
    %3022 = vmatmul.mubr.f32.gmra.mrb[0].mxu0 %v2839
    %v3023 = vpop.f32.mrb[0].mxu0
    %v3024 = vadd.f32 %v2811, %v3023
    %v3025 = vpop.f32.mrb[0].mxu0
    %v3026 = vadd.f32 %v2811, %v3025
    %3027 = vmatprep.mubr.f32.mxu0 0.0
    %3028 = vmatmul.mubr.f32.gmra.mrb[0].mxu0 %v2842
    %v3029 = vpop.f32.mrb[0].mxu0
    %v3030 = vadd.f32 %v2816, %v3029
    %v3031 = vpop.f32.mrb[0].mxu0
    %v3032 = vadd.f32 %v2816, %v3031
    %3033 = vmatprep.mubr.f32.mxu0 0.0
    %3034 = vmatmul.mubr.f32.gmra.mrb[0].mxu0 %v2845
    %v3035 = vpop.f32.mrb[0].mxu0
    %v3036 = vadd.f32 %v2821, %v3035
    %v3037 = vpop.f32.mrb[0].mxu0
    %v3038 = vadd.f32 %v2821, %v3037
    %3039 = vmatprep.mubr.f32.mxu0 0.0
    %3040 = vmatmul.mubr.f32.gmra.mrb[0].mxu0 %v2848
    %v3041 = vpop.f32.mrb[0].mxu0
    %v3042 = vadd.f32 %v2826, %v3041
    %v3043 = vpop.f32.mrb[0].mxu0
    %v3044 = vadd.f32 %v2826, %v3043
    %3045 = vmatprep.mubr.f32.mxu0 0.0
    %3046 = vmatmul.mubr.f32.gmra.mrb[0].mxu0 %v2851
    %v3047 = vpop.f32.mrb[0].mxu0
    %v3048 = vadd.f32 %v2831, %v3047
    %v3049 = vpop.f32.mrb[0].mxu0
    %v3050 = vadd.f32 %v2831, %v3049
    %3051 = vmatprep.mubr.f32.mxu0 0.0
    %3052 = vmatmul.mubr.f32.gmra.mrb[0].mxu0 %v2854
    %v3053 = vpop.f32.mrb[0].mxu0
    %v3054 = vadd.f32 %v2836, %v3053
    %v3055 = vpop.f32.mrb[0].mxu0
    %v3056 = vadd.f32 %v2836, %v3055
    %3057 = vdwg.mxu0
    %v3058 = vadd.f32 %v2923, %v933
    %v3059 = vadd.f32 %v2925, %v940
    %v3060 = vadd.f32 %v3024, %v947
    %v3061 = vadd.f32 %v3026, %v954
    %v3062 = vadd.f32 %v2929, %v933
    %v3063 = vadd.f32 %v2931, %v940
    %v3064 = vadd.f32 %v3030, %v947
    %v3065 = vadd.f32 %v3032, %v954
    %v3066 = vadd.f32 %v2935, %v933
    %v3067 = vadd.f32 %v2937, %v940
    %v3068 = vadd.f32 %v3036, %v947
    %v3069 = vadd.f32 %v3038, %v954
    %v3070 = vadd.f32 %v2941, %v933
    %v3071 = vadd.f32 %v2943, %v940
    %v3072 = vadd.f32 %v3042, %v947
    %v3073 = vadd.f32 %v3044, %v954
    %v3074 = vadd.f32 %v2947, %v933
    %v3075 = vadd.f32 %v2949, %v940
    %v3076 = vadd.f32 %v3048, %v947
    %v3077 = vadd.f32 %v3050, %v954
    %v3078 = vadd.f32 %v2953, %v933
    %v3079 = vadd.f32 %v2955, %v940
    %v3080 = vadd.f32 %v3054, %v947
    %v3081 = vadd.f32 %v3056, %v954
    %v3082 = vmin.f32 %v3058, %v3062
    %v3083 = vmin.f32 %v3082, %v3066
    %v3084 = vmin.f32 %v3083, %v3070
    %v3085 = vmin.f32 %v3084, %v3074
    %v3086 = vmin.f32 %v3085, %v3078
    %v3087 = vrot.slane %v3086, 4
    %v3088 = vmin.f32 %v3086, %v3087
    %v3089 = vrot.slane %v3088, 2
    %v3090 = vmin.f32 %v3088, %v3089
    %v3091 = vrot.slane %v3090, 1
    %v3092 = vmin.f32 %v3090, %v3091
    %v3093 = vmin.f32 %v3059, %v3063
    %v3094 = vmin.f32 %v3093, %v3067
    %v3095 = vmin.f32 %v3094, %v3071
    %v3096 = vmin.f32 %v3095, %v3075
    %v3097 = vmin.f32 %v3096, %v3079
    %v3098 = vrot.slane %v3097, 4
    %v3099 = vmin.f32 %v3097, %v3098
    %v3100 = vrot.slane %v3099, 2
    %v3101 = vmin.f32 %v3099, %v3100
    %v3102 = vrot.slane %v3101, 1
    %v3103 = vmin.f32 %v3101, %v3102
    %v3104 = vmin.f32 %v3060, %v3064
    %v3105 = vmin.f32 %v3104, %v3068
    %v3106 = vmin.f32 %v3105, %v3072
    %v3107 = vmin.f32 %v3106, %v3076
    %v3108 = vmin.f32 %v3107, %v3080
    %v3109 = vrot.slane %v3108, 4
    %v3110 = vmin.f32 %v3108, %v3109
    %v3111 = vrot.slane %v3110, 2
    %v3112 = vmin.f32 %v3110, %v3111
    %v3113 = vrot.slane %v3112, 1
    %v3114 = vmin.f32 %v3112, %v3113
    %v3115 = vmin.f32 %v3061, %v3065
    %v3116 = vmin.f32 %v3115, %v3069
    %v3117 = vmin.f32 %v3116, %v3073
    %v3118 = vmin.f32 %v3117, %v3077
    %v3119 = vmin.f32 %v3118, %v3081
    %v3120 = vrot.slane %v3119, 4
    %v3121 = vmin.f32 %v3119, %v3120
    %v3122 = vrot.slane %v3121, 2
    %v3123 = vmin.f32 %v3121, %v3122
    %v3124 = vrot.slane %v3123, 1
    %v3125 = vmin.f32 %v3123, %v3124
    %v3126 = vmin.f32 %v2728, %v3092
    %v3127 = vmin.f32 %v2729, %v3103
    %v3128 = vmin.f32 %v2730, %v3114
    %v3129 = vmin.f32 %v2731, %v3125
    %v3130 = vmin.f32 %v3058, %v3059
    %v3131 = vmin.f32 %v3130, %v3060
    %v3132 = vmin.f32 %v3131, %v3061
    %3133 = vmin.xlane.f32.xlu0 %v3132
    %v3134 = vpop.xlane.xlu0 %3133
    %v3135 = vmin.f32 %v3062, %v3063
    %v3136 = vmin.f32 %v3135, %v3064
    %v3137 = vmin.f32 %v3136, %v3065
    %3138 = vmin.xlane.f32.xlu0 %v3137
    %v3139 = vpop.xlane.xlu0 %3138
    %v3140 = vmin.f32 %v3066, %v3067
    %v3141 = vmin.f32 %v3140, %v3068
    %v3142 = vmin.f32 %v3141, %v3069
    %3143 = vmin.xlane.f32.xlu0 %v3142
    %v3144 = vpop.xlane.xlu0 %3143
    %v3145 = vmin.f32 %v3070, %v3071
    %v3146 = vmin.f32 %v3145, %v3072
    %v3147 = vmin.f32 %v3146, %v3073
    %3148 = vmin.xlane.f32.xlu0 %v3147
    %v3149 = vpop.xlane.xlu0 %3148
    %v3150 = vmin.f32 %v3074, %v3075
    %v3151 = vmin.f32 %v3150, %v3076
    %v3152 = vmin.f32 %v3151, %v3077
    %3153 = vmin.xlane.f32.xlu0 %v3152
    %v3154 = vpop.xlane.xlu0 %3153
    %v3155 = vmin.f32 %v3078, %v3079
    %v3156 = vmin.f32 %v3155, %v3080
    %v3157 = vmin.f32 %v3156, %v3081
    %3158 = vmin.xlane.f32.xlu0 %v3157
    %v3159 = vpop.xlane.xlu0 %3158
    %v3160 = vld [vmem:[%s7 + $0x100] sm:$0xff]
    %v3161 = vld [vmem:[%s7 + $0x108] sm:$0xff]
    %v3162 = vld [vmem:[%s7 + $0x110] sm:$0xff]
    %v3163 = vld [vmem:[%s7 + $0x118] sm:$0xff]
    %v3164 = vld [vmem:[%s7 + $0x120] sm:$0xff]
    %v3165 = vld [vmem:[%s7 + $0x128] sm:$0xff]
    %v3166 = vmin.f32 %v3160, %v3134
    %v3167 = vmin.f32 %v3161, %v3139
    %v3168 = vmin.f32 %v3162, %v3144
    %v3169 = vmin.f32 %v3163, %v3149
    %v3170 = vmin.f32 %v3164, %v3154
    %v3171 = vmin.f32 %v3165, %v3159
    %3172 = vst.msk [vmem:[%s7 + $0x100] sm:$0xff] %vm1413, %v3166
    %3173 = vst.msk [vmem:[%s7 + $0x108] sm:$0xff] %vm1413, %v3167
    %3174 = vst.msk [vmem:[%s7 + $0x110] sm:$0xff] %vm1413, %v3168
    %3175 = vst.msk [vmem:[%s7 + $0x118] sm:$0xff] %vm1413, %v3169
    %3176 = vst.msk [vmem:[%s7 + $0x120] sm:$0xff] %vm1413, %v3170
    %3177 = vst.msk [vmem:[%s7 + $0x128] sm:$0xff] %vm1413, %v3171
    %v3182 = vcombine.low %v3126, %v3127
    %v3183 = vcombine.low %v3128, %v3129
    %v3185 = vunpack.c.l.s4 1966171168
    %v3186 = vunpack.c.0.s8 %v3185
    %v3187 = vlaneseq
    %v3188 = vshrl.u32 %v3187, 7
    %v3189 = vsub.s32 %v3186, %v3188
    %v3190 = vrot.slane %v3182, %v3189
    %v3192 = vunpack.c.l.s4 1966171168
    %v3193 = vunpack.c.0.s8 %v3192
    %v3194 = vlaneseq
    %v3195 = vshrl.u32 %v3194, 7
    %v3196 = vsub.s32 %v3193, %v3195
    %v3197 = vrot.slane %v3183, %v3196
    %v3198 = vcombine.low %v3190, %v3197
    %v3200 = vunpack.c.l.s4 1966171168
    %v3201 = vunpack.c.0.s8 %v3200
    %v3202 = vlaneseq
    %v3203 = vshrl.u32 %v3202, 7
    %v3204 = vsub.s32 %v3201, %v3203
    %v3205 = vrot.slane %v3198, %v3204
    %v3207 = vlaneseq
    %vm3208 = vcmp.ge.s32.totalorder %v3207, 0
    %vm3209 = vcmp.lt.s32.totalorder %v3207, 512
    %vm3210 = vmand %vm3208, %vm3209
    %3211 = vst.msk [vmem:[#allocation4] sm:$0xf] %vm3210, %v3205
    // Predicated region
    $region30: #{tpu_custom_call.1} parent=1 // pred_check
      _
    $region31: #{tpu_custom_call.1} parent=1 // pred_check_branch
      %3213 = sbr.rel (0) target = $region33
    $region32: #{tpu_custom_call.1} parent=1 // pred_region
      %s3215 = ssub.s32 64, 64
      %3216 = vsyncadd [#allocation5], %s3215
      %s3218 = sshll.u32 [#allocation4], 4
      %s3219 = int_to_ptr.vmem [resolvable:$true] %s3218
      %3221 = dma.vmem_to_hbm [thread:$0]  %s3219, 64, %s6, [#allocation5]
    $region33: #{tpu_custom_call.1} parent=1 // pred_fallthru
      _
    // Predicated region
    $region34: #{tpu_custom_call.1} parent=1 // pred_check
      _
    $region35: #{tpu_custom_call.1} parent=1 // pred_check_branch
      %3223 = sbr.rel (0) target = $region37
    $region36: #{tpu_custom_call.1} parent=1 // pred_region
      _
    $region37: #{tpu_custom_call.1} parent=1 // pred_fallthru
      _
    // Predicated region
    $region38: #{tpu_custom_call.1} parent=1 // pred_check
      _
    $region39: #{tpu_custom_call.1} parent=1 // pred_check_branch
      %3225 = sbr.rel (0) target = $region41
    $region40: #{tpu_custom_call.1} parent=1 // pred_region
      %3226 = dma.done [#allocation5], 64
    $region41: #{tpu_custom_call.1} parent=1 // pred_fallthru
      _
    // Predicated region
    $region42: #{tpu_custom_call.1} parent=1 // pred_check
      _
    $region43: #{tpu_custom_call.1} parent=1 // pred_check_branch
      %3228 = sbr.rel (0) target = $region45
    $region44: #{tpu_custom_call.1} parent=1 // pred_region
      _
    $region45: #{tpu_custom_call.1} parent=1 // pred_fallthru
      _
    %3229 = vsyncpa [#allocation5], 1

</llo_original>
